<compile_context>
chip_gen: v5e
topology: v5e:2x2
jax: 0.10.0
libtpu: 0.0.40
codegen_flags: <defaults>
</compile_context>

<pallas_src>
import jax
import jax.numpy as jnp
from jax.experimental import pallas as pl
from jax.experimental.pallas import tpu as pltpu

EPS = 1e-5


def _round_up(x, m):
    return (x + m - 1) // m * m


def _choose_block_rows(h, max_rows=16):
    """Largest divisor of h that is <= max_rows (keeps halo overhead small)."""
    for th in range(min(h, max_rows), 0, -1):
        if h % th == 0:
            return th
    return h


def _fold_bn_into_conv(w_oihw, gamma, beta, mean, var, cp, compute_dtype):
    """Fold eval-mode BN into the conv. Returns ((9*cp, cp) bf16 W, (1, cp) f32 bias)."""
    scale = gamma * jax.lax.rsqrt(var + EPS)                           # (Cout,)
    w_hwio = jnp.transpose(w_oihw, (2, 3, 1, 0)) * scale[None, None, None, :]
    bias = beta - mean * scale
    cin, cout = w_hwio.shape[2], w_hwio.shape[3]
    w_hwio = jnp.pad(w_hwio, ((0, 0), (0, 0), (0, cp - cin), (0, cp - cout)))
    w2d = w_hwio.reshape(9 * cp, cp).astype(compute_dtype)             # rows: (ky, kx, ci)
    b2d = jnp.pad(bias, (0, cp - cout)).reshape(1, cp).astype(jnp.float32)
    return w2d, b2d


def basic_block_pallas(x_nchw, params, *, compute_dtype=jnp.bfloat16,
                       block_rows=None):
    """BasicBlock forward (stride=1, downsample=None). (N, C, H, W) -> (N, C, H, W)."""
    w1_oihw, g1, b1, m1, v1, w2_oihw, g2, b2, m2, v2 = params
    N, C, H, W = x_nchw.shape
    assert w1_oihw.shape[0] == C, "downsample=None requires in_channel == out_channel"

    Cp = _round_up(max(C, 128), 128)                 # lane-dense channel axis
    TH = block_rows if block_rows is not None else _choose_block_rows(H)
    assert H % TH == 0, "block_rows must divide H"
    HB = H // TH

    # ---- wrapper-side prep: NHWC, channel pad to Cp, 2-row zero pad (conv pad
    # + halo), BN folding, bf16 cast. Row padding done here removes the
    # full-image padded-copy that used to happen inside the kernel. ----
    x_nhwc = jnp.transpose(x_nchw, (0, 2, 3, 1))
    x_p = jnp.pad(x_nhwc, ((0, 0), (2, 2), (0, 0), (0, Cp - C))).astype(compute_dtype)
    w1f, b1f = _fold_bn_into_conv(w1_oihw, g1, b1, m1, v1, Cp, compute_dtype)
    w2f, b2f = _fold_bn_into_conv(w2_oihw, g2, b2, m2, v2, Cp, compute_dtype)

    def kernel(x_ref, w1_ref, b1_ref, w2_ref, b2_ref, out_ref, y_ref):
        rb = pl.program_id(1)
        row0 = pl.multiple_of(rb * TH, TH)

        # Bias broadcasts hoisted: read once per grid step.
        bias1 = b1_ref[...]                                   # (1, Cp) f32
        bias2 = b2_ref[...]

        # ---- conv1 over TH+2 output rows (1-row halo each side) ----
        # x block holds H+4 rows (2 zero rows top/bottom); rows needed here:
        # row0 .. row0+TH+3, always in range.
        xblk = x_ref[pl.ds(row0, TH + 4), :, :]               # (TH+4, W, Cp) bf16
        zc = jnp.zeros((TH + 4, 1, Cp), compute_dtype)
        # Column-shifted slabs: xs[dx][:, x] = input at column x + dx - 1
        # (zero outside). Only dx=0/2 need sublane repack; dy shifts below are
        # cheap leading-dim slices.
        xs = (jnp.concatenate([zc, xblk[:, :W - 1, :]], axis=1),   # dx = 0
              xblk,                                                # dx = 1
              jnp.concatenate([xblk[:, 1:, :], zc], axis=1))       # dx = 2
        lhs1 = jnp.concatenate(
            [xs[dx][dy:dy + TH + 2] for dy in range(3) for dx in range(3)],
            axis=-1).reshape((TH + 2) * W, 9 * Cp)
        acc1 = jnp.dot(lhs1, w1_ref[...], preferred_element_type=jnp.float32)
        y = jnp.maximum(acc1 + bias1, 0.0)                    # folded BN1 + ReLU
        y_ref[...] = y.astype(compute_dtype).reshape(TH + 2, W, Cp)

        # conv2's row zero-padding: the top/bottom halo rows are outside the
        # image only for the first/last row block.
        @pl.when(rb == 0)
        def _():
            y_ref[0:1, :, :] = jnp.zeros((1, W, Cp), compute_dtype)

        @pl.when(rb == pl.num_programs(1) - 1)
        def _():
            y_ref[TH + 1:TH + 2, :, :] = jnp.zeros((1, W, Cp), compute_dtype)

        # ---- conv2 over TH output rows + residual + ReLU ----
        yv = y_ref[...]                                       # (TH+2, W, Cp)
        zc2 = jnp.zeros((TH + 2, 1, Cp), compute_dtype)
        ys = (jnp.concatenate([zc2, yv[:, :W - 1, :]], axis=1),
              yv,
              jnp.concatenate([yv[:, 1:, :], zc2], axis=1))
        lhs2 = jnp.concatenate(
            [ys[dx][dy:dy + TH] for dy in range(3) for dx in range(3)],
            axis=-1).reshape(TH * W, 9 * Cp)
        acc2 = jnp.dot(lhs2, w2_ref[...], preferred_element_type=jnp.float32)
        identity = xblk[2:TH + 2].reshape(TH * W, Cp).astype(jnp.float32)
        out = jnp.maximum(acc2 + bias2 + identity, 0.0)       # folded BN2 + residual + ReLU
        out_ref[...] = out.reshape(TH, W, Cp).astype(out_ref.dtype)

    # VMEM budget: 64 MiB-class headroom on v5e/v6e, half of physical on
    # smaller-VMEM chips (v7x).
    try:
        phys_vmem = pltpu.get_tpu_info().vmem_capacity_bytes
        vmem_limit = min(64 * 1024 * 1024, phys_vmem // 2)
    except Exception:
        vmem_limit = 32 * 1024 * 1024

    def build_call(weight_pipeline_mode):
        def const_spec(shape):
            if weight_pipeline_mode is None:
                return pl.BlockSpec(shape, lambda n, rb: (0, 0))
            return pl.BlockSpec(shape, lambda n, rb: (0, 0),
                                pipeline_mode=weight_pipeline_mode)

        return pl.pallas_call(
            kernel,
            out_shape=jax.ShapeDtypeStruct((N, H, W, Cp), compute_dtype),  # bf16 out
            grid_spec=pltpu.PrefetchScalarGridSpec(
                num_scalar_prefetch=0,
                grid=(N, HB),
                in_specs=[
                    # Full (row-padded) image per n; index independent of rb,
                    # so it is not re-fetched across row blocks.
                    pl.BlockSpec((None, H + 4, W, Cp), lambda n, rb: (n, 0, 0, 0)),
                    const_spec((9 * Cp, Cp)),       # folded conv1 weight
                    const_spec((1, Cp)),            # folded bn1 bias
                    const_spec((9 * Cp, Cp)),       # folded conv2 weight
                    const_spec((1, Cp)),            # folded bn2 bias
                ],
                out_specs=pl.BlockSpec((None, TH, W, Cp), lambda n, rb: (n, rb, 0, 0)),
                scratch_shapes=[
                    pltpu.VMEM((TH + 2, W, Cp), compute_dtype),  # conv1 output (with halo)
                ],
            ),
            compiler_params=pltpu.CompilerParams(
                dimension_semantics=("parallel", "parallel"),
                vmem_limit_bytes=vmem_limit,
            ),
        )

    # Weights/biases have a constant index_map -> single-buffer them to save
    # VMEM (important at Cp=512 on v7x). Fall back if Buffered(1) is rejected.
    try:
        out_p = build_call(pl.Buffered(1))(x_p, w1f, b1f, w2f, b2f)
        out_p = jax.block_until_ready(out_p)
    except Exception:
        out_p = build_call(None)(x_p, w1f, b1f, w2f, b2f)

    # Interface parity with the PyTorch module (NCHW, f32). In a real network
    # keep the bf16 NHWC/Cp-padded layout and skip this round-trip.
    return jnp.transpose(out_p[..., :C], (0, 3, 1, 2)).astype(jnp.float32)


def basic_block_reference(x_nchw, w1_oihw, bn1, w2_oihw, bn2,
                          compute_dtype=jnp.bfloat16):
    """Pure-JAX reference using identical BN folding / bf16 compute as the kernel."""
    g1, b1, m1, v1 = bn1
    g2, b2, m2, v2 = bn2

    def conv(x, w):
        return jax.lax.conv_general_dilated(
            x, w, window_strides=(1, 1), padding=((1, 1), (1, 1)),
            dimension_numbers=("NCHW", "OIHW", "NCHW"),
            preferred_element_type=jnp.float32)

    s1 = g1 * jax.lax.rsqrt(v1 + EPS)
    s2 = g2 * jax.lax.rsqrt(v2 + EPS)
    w1f = (w1_oihw * s1[:, None, None, None]).astype(compute_dtype)
    w2f = (w2_oihw * s2[:, None, None, None]).astype(compute_dtype)
    bias1 = (b1 - m1 * s1)[None, :, None, None]
    bias2 = (b2 - m2 * s2)[None, :, None, None]

    xc = x_nchw.astype(compute_dtype)
    h = jnp.maximum(conv(xc, w1f) + bias1, 0.0).astype(compute_dtype)
    out = conv(h, w2f) + bias2
    return jnp.maximum(out + xc.astype(jnp.float32), 0.0)


if __name__ == "__main__":
    N, C, H, W = 2, 4, 16, 16
    key = jax.random.PRNGKey(0)
    keys = jax.random.split(key, 11)

    x = jax.random.normal(keys[0], (N, C, H, W), jnp.float32)

    # Shapes as in BasicBlock.__init__ (PyTorch OIHW conv weights, eval-mode BN).
    w1 = 0.1 * jax.random.normal(keys[1], (C, C, 3, 3), jnp.float32)   # conv1.weight
    w2 = 0.1 * jax.random.normal(keys[2], (C, C, 3, 3), jnp.float32)   # conv2.weight
    g1 = 1.0 + 0.1 * jax.random.normal(keys[3], (C,), jnp.float32)     # bn1.weight
    b1 = 0.1 * jax.random.normal(keys[4], (C,), jnp.float32)           # bn1.bias
    m1 = 0.1 * jax.random.normal(keys[5], (C,), jnp.float32)           # bn1.running_mean
    v1 = jax.random.uniform(keys[6], (C,), jnp.float32, 0.5, 1.5)      # bn1.running_var
    g2 = 1.0 + 0.1 * jax.random.normal(keys[7], (C,), jnp.float32)
    b2 = 0.1 * jax.random.normal(keys[8], (C,), jnp.float32)
    m2 = 0.1 * jax.random.normal(keys[9], (C,), jnp.float32)
    v2 = jax.random.uniform(keys[10], (C,), jnp.float32, 0.5, 1.5)

    params = (w1, g1, b1, m1, v1, w2, g2, b2, m2, v2)

    # block_rows=8 -> two row blocks, exercising the fused halo-recompute path.
    out = basic_block_pallas(x, params, block_rows=8)
    out = jax.block_until_ready(out)

    ref = basic_block_reference(x, w1, (g1, b1, m1, v1), w2, (g2, b2, m2, v2))
    assert out.shape == (N, C, H, W)
    max_err = jnp.max(jnp.abs(out - ref))
    assert jnp.allclose(out, ref, atol=2e-2, rtol=2e-2), f"max abs diff {max_err}"

    print("KERNEL_OK")
</pallas_src>

<mosaic_0001>
module attributes {stable_mosaic.version = 11 : i64} {
  func.func @kernel(%arg0: i32, %arg1: i32, %arg2: memref<1x20x16x128xbf16, #tpu.memory_space<vmem>>, %arg3: memref<1152x128xbf16, #tpu.memory_space<vmem>>, %arg4: memref<1x128xf32, #tpu.memory_space<vmem>>, %arg5: memref<1152x128xbf16, #tpu.memory_space<vmem>>, %arg6: memref<1x128xf32, #tpu.memory_space<vmem>>, %arg7: memref<1x8x16x128xbf16, #tpu.memory_space<vmem>>, %arg8: memref<10x16x128xbf16, #tpu.memory_space<vmem>>) attributes {dimension_semantics = [#tpu.dimension_semantics<parallel>, #tpu.dimension_semantics<parallel>], iteration_bounds = array<i64: 2, 2>, scalar_prefetch = 0 : i64, scratch_operands = 1 : i64, tpu.core_type = #tpu.core_type<tc>, window_params = [{transform_indices = @transform_0, window_bounds = array<i64: 1, 20, 16, 128>}, {pipeline_mode = #tpu.pipeline_mode<synchronous>, transform_indices = @transform_1, window_bounds = array<i64: 1152, 128>}, {pipeline_mode = #tpu.pipeline_mode<synchronous>, transform_indices = @transform_2, window_bounds = array<i64: 1, 128>}, {pipeline_mode = #tpu.pipeline_mode<synchronous>, transform_indices = @transform_3, window_bounds = array<i64: 1152, 128>}, {pipeline_mode = #tpu.pipeline_mode<synchronous>, transform_indices = @transform_4, window_bounds = array<i64: 1, 128>}, {transform_indices = @transform_5, window_bounds = array<i64: 1, 8, 16, 128>}]} {
    %c8_i32 = arith.constant 8 : i32
    %0 = arith.muli %arg1, %c8_i32 : i32
    %1 = tpu.assume_multiple %0, 8 : i32
    %c0 = arith.constant 0 : index
    %c0_0 = arith.constant 0 : index
    %2 = vector.load %arg4[%c0, %c0_0] : memref<1x128xf32, #tpu.memory_space<vmem>>, vector<1x128xf32>
    %c0_1 = arith.constant 0 : index
    %c0_2 = arith.constant 0 : index
    %3 = vector.load %arg6[%c0_1, %c0_2] : memref<1x128xf32, #tpu.memory_space<vmem>>, vector<1x128xf32>
    %c0_3 = arith.constant 0 : index
    %4 = arith.index_cast %1 : i32 to index
    %c0_4 = arith.constant 0 : index
    %c0_5 = arith.constant 0 : index
    %5 = vector.load %arg2[%c0_3, %4, %c0_4, %c0_5] : memref<1x20x16x128xbf16, #tpu.memory_space<vmem>>, vector<1x12x16x128xbf16>
    %6 = vector.shape_cast %5 : vector<1x12x16x128xbf16> to vector<12x16x128xbf16>
    %cst = arith.constant 0.000000e+00 : bf16
    %7 = vector.broadcast %cst : bf16 to vector<12x1x128xbf16>
    %8 = vector.extract_strided_slice %6 {offsets = [0, 0, 0], sizes = [12, 15, 128], strides = [1, 1, 1]} : vector<12x16x128xbf16> to vector<12x15x128xbf16>
    %9 = tpu.concatenate %7, %8 in 1 : vector<12x1x128xbf16>, vector<12x15x128xbf16> -> vector<12x16x128xbf16>
    %10 = vector.extract_strided_slice %6 {offsets = [0, 1, 0], sizes = [12, 15, 128], strides = [1, 1, 1]} : vector<12x16x128xbf16> to vector<12x15x128xbf16>
    %11 = tpu.concatenate %10, %7 in 1 : vector<12x15x128xbf16>, vector<12x1x128xbf16> -> vector<12x16x128xbf16>
    %12 = vector.extract_strided_slice %9 {offsets = [0, 0, 0], sizes = [10, 16, 128], strides = [1, 1, 1]} : vector<12x16x128xbf16> to vector<10x16x128xbf16>
    %13 = vector.extract_strided_slice %6 {offsets = [0, 0, 0], sizes = [10, 16, 128], strides = [1, 1, 1]} : vector<12x16x128xbf16> to vector<10x16x128xbf16>
    %14 = vector.extract_strided_slice %11 {offsets = [0, 0, 0], sizes = [10, 16, 128], strides = [1, 1, 1]} : vector<12x16x128xbf16> to vector<10x16x128xbf16>
    %15 = vector.extract_strided_slice %9 {offsets = [1, 0, 0], sizes = [10, 16, 128], strides = [1, 1, 1]} : vector<12x16x128xbf16> to vector<10x16x128xbf16>
    %16 = vector.extract_strided_slice %6 {offsets = [1, 0, 0], sizes = [10, 16, 128], strides = [1, 1, 1]} : vector<12x16x128xbf16> to vector<10x16x128xbf16>
    %17 = vector.extract_strided_slice %11 {offsets = [1, 0, 0], sizes = [10, 16, 128], strides = [1, 1, 1]} : vector<12x16x128xbf16> to vector<10x16x128xbf16>
    %18 = vector.extract_strided_slice %9 {offsets = [2, 0, 0], sizes = [10, 16, 128], strides = [1, 1, 1]} : vector<12x16x128xbf16> to vector<10x16x128xbf16>
    %19 = vector.extract_strided_slice %6 {offsets = [2, 0, 0], sizes = [10, 16, 128], strides = [1, 1, 1]} : vector<12x16x128xbf16> to vector<10x16x128xbf16>
    %20 = vector.extract_strided_slice %11 {offsets = [2, 0, 0], sizes = [10, 16, 128], strides = [1, 1, 1]} : vector<12x16x128xbf16> to vector<10x16x128xbf16>
    %21 = tpu.concatenate %12, %13, %14, %15, %16, %17, %18, %19, %20 in 2 : vector<10x16x128xbf16>, vector<10x16x128xbf16>, vector<10x16x128xbf16>, vector<10x16x128xbf16>, vector<10x16x128xbf16>, vector<10x16x128xbf16>, vector<10x16x128xbf16>, vector<10x16x128xbf16>, vector<10x16x128xbf16> -> vector<10x16x1152xbf16>
    %22 = vector.shape_cast %21 : vector<10x16x1152xbf16> to vector<160x1152xbf16>
    %c0_6 = arith.constant 0 : index
    %c0_7 = arith.constant 0 : index
    %23 = vector.load %arg3[%c0_6, %c0_7] : memref<1152x128xbf16, #tpu.memory_space<vmem>>, vector<1152x128xbf16>
    %cst_8 = arith.constant dense<0.000000e+00> : vector<160x128xf32>
    %24 = tpu.matmul %22, %23, %cst_8 {dimension_numbers = #tpu.dot_dimension_numbers<[1], [0], [0], [1], [0, 0, 1, 1], [], []>} : vector<160x1152xbf16>, vector<1152x128xbf16>, vector<160x128xf32> -> vector<160x128xf32>
    %25 = vector.broadcast %2 : vector<1x128xf32> to vector<160x128xf32>
    %26 = arith.addf %24, %25 : vector<160x128xf32>
    %cst_9 = arith.constant 0.000000e+00 : f32
    %27 = vector.broadcast %cst_9 : f32 to vector<160x128xf32>
    %28 = arith.maximumf %26, %27 : vector<160x128xf32>
    %29 = arith.truncf %28 : vector<160x128xf32> to vector<160x128xbf16>
    %30 = vector.shape_cast %29 : vector<160x128xbf16> to vector<10x16x128xbf16>
    %c0_10 = arith.constant 0 : index
    %c0_11 = arith.constant 0 : index
    %c0_12 = arith.constant 0 : index
    %31 = vector.load %arg8[%c0_10, %c0_11, %c0_12] : memref<10x16x128xbf16, #tpu.memory_space<vmem>>, vector<10x16x128xbf16>
    tpu.vector_store %arg8[%c0_10, %c0_11, %c0_12], %30 {strides = array<i32>} : memref<10x16x128xbf16, #tpu.memory_space<vmem>>, vector<10x16x128xbf16>,
    %c0_i32 = arith.constant 0 : i32
    %32 = arith.cmpi eq, %arg1, %c0_i32 : i32
    %33 = arith.extui %32 : i1 to i32
    %c0_i32_13 = arith.constant 0 : i32
    %34 = arith.cmpi ne, %33, %c0_i32_13 : i32
    scf.if %34 {
      %cst_27 = arith.constant 0.000000e+00 : bf16
      %70 = vector.broadcast %cst_27 : bf16 to vector<1x16x128xbf16>
      %c0_28 = arith.constant 0 : index
      %c0_29 = arith.constant 0 : index
      %c0_30 = arith.constant 0 : index
      %71 = vector.load %arg8[%c0_28, %c0_29, %c0_30] : memref<10x16x128xbf16, #tpu.memory_space<vmem>>, vector<1x16x128xbf16>
      tpu.vector_store %arg8[%c0_28, %c0_29, %c0_30], %70 {strides = array<i32>} : memref<10x16x128xbf16, #tpu.memory_space<vmem>>, vector<1x16x128xbf16>,
    } else {
    }
    %c1_i32 = arith.constant 1 : i32
    %35 = arith.cmpi eq, %arg1, %c1_i32 : i32
    %36 = arith.extui %35 : i1 to i32
    %c0_i32_14 = arith.constant 0 : i32
    %37 = arith.cmpi ne, %36, %c0_i32_14 : i32
    scf.if %37 {
      %cst_27 = arith.constant 0.000000e+00 : bf16
      %70 = vector.broadcast %cst_27 : bf16 to vector<1x16x128xbf16>
      %c9 = arith.constant 9 : index
      %c0_28 = arith.constant 0 : index
      %c0_29 = arith.constant 0 : index
      %71 = vector.load %arg8[%c9, %c0_28, %c0_29] : memref<10x16x128xbf16, #tpu.memory_space<vmem>>, vector<1x16x128xbf16>
      tpu.vector_store %arg8[%c9, %c0_28, %c0_29], %70 {strides = array<i32>} : memref<10x16x128xbf16, #tpu.memory_space<vmem>>, vector<1x16x128xbf16>,
    } else {
    }
    %c0_15 = arith.constant 0 : index
    %c0_16 = arith.constant 0 : index
    %c0_17 = arith.constant 0 : index
    %38 = vector.load %arg8[%c0_15, %c0_16, %c0_17] : memref<10x16x128xbf16, #tpu.memory_space<vmem>>, vector<10x16x128xbf16>
    %cst_18 = arith.constant 0.000000e+00 : bf16
    %39 = vector.broadcast %cst_18 : bf16 to vector<10x1x128xbf16>
    %40 = vector.extract_strided_slice %38 {offsets = [0, 0, 0], sizes = [10, 15, 128], strides = [1, 1, 1]} : vector<10x16x128xbf16> to vector<10x15x128xbf16>
    %41 = tpu.concatenate %39, %40 in 1 : vector<10x1x128xbf16>, vector<10x15x128xbf16> -> vector<10x16x128xbf16>
    %42 = vector.extract_strided_slice %38 {offsets = [0, 1, 0], sizes = [10, 15, 128], strides = [1, 1, 1]} : vector<10x16x128xbf16> to vector<10x15x128xbf16>
    %43 = tpu.concatenate %42, %39 in 1 : vector<10x15x128xbf16>, vector<10x1x128xbf16> -> vector<10x16x128xbf16>
    %44 = vector.extract_strided_slice %41 {offsets = [0, 0, 0], sizes = [8, 16, 128], strides = [1, 1, 1]} : vector<10x16x128xbf16> to vector<8x16x128xbf16>
    %45 = vector.extract_strided_slice %38 {offsets = [0, 0, 0], sizes = [8, 16, 128], strides = [1, 1, 1]} : vector<10x16x128xbf16> to vector<8x16x128xbf16>
    %46 = vector.extract_strided_slice %43 {offsets = [0, 0, 0], sizes = [8, 16, 128], strides = [1, 1, 1]} : vector<10x16x128xbf16> to vector<8x16x128xbf16>
    %47 = vector.extract_strided_slice %41 {offsets = [1, 0, 0], sizes = [8, 16, 128], strides = [1, 1, 1]} : vector<10x16x128xbf16> to vector<8x16x128xbf16>
    %48 = vector.extract_strided_slice %38 {offsets = [1, 0, 0], sizes = [8, 16, 128], strides = [1, 1, 1]} : vector<10x16x128xbf16> to vector<8x16x128xbf16>
    %49 = vector.extract_strided_slice %43 {offsets = [1, 0, 0], sizes = [8, 16, 128], strides = [1, 1, 1]} : vector<10x16x128xbf16> to vector<8x16x128xbf16>
    %50 = vector.extract_strided_slice %41 {offsets = [2, 0, 0], sizes = [8, 16, 128], strides = [1, 1, 1]} : vector<10x16x128xbf16> to vector<8x16x128xbf16>
    %51 = vector.extract_strided_slice %38 {offsets = [2, 0, 0], sizes = [8, 16, 128], strides = [1, 1, 1]} : vector<10x16x128xbf16> to vector<8x16x128xbf16>
    %52 = vector.extract_strided_slice %43 {offsets = [2, 0, 0], sizes = [8, 16, 128], strides = [1, 1, 1]} : vector<10x16x128xbf16> to vector<8x16x128xbf16>
    %53 = tpu.concatenate %44, %45, %46, %47, %48, %49, %50, %51, %52 in 2 : vector<8x16x128xbf16>, vector<8x16x128xbf16>, vector<8x16x128xbf16>, vector<8x16x128xbf16>, vector<8x16x128xbf16>, vector<8x16x128xbf16>, vector<8x16x128xbf16>, vector<8x16x128xbf16>, vector<8x16x128xbf16> -> vector<8x16x1152xbf16>
    %54 = vector.shape_cast %53 : vector<8x16x1152xbf16> to vector<128x1152xbf16>
    %c0_19 = arith.constant 0 : index
    %c0_20 = arith.constant 0 : index
    %55 = vector.load %arg5[%c0_19, %c0_20] : memref<1152x128xbf16, #tpu.memory_space<vmem>>, vector<1152x128xbf16>
    %cst_21 = arith.constant dense<0.000000e+00> : vector<128x128xf32>
    %56 = tpu.matmul %54, %55, %cst_21 {dimension_numbers = #tpu.dot_dimension_numbers<[1], [0], [0], [1], [0, 0, 1, 1], [], []>} : vector<128x1152xbf16>, vector<1152x128xbf16>, vector<128x128xf32> -> vector<128x128xf32>
    %57 = vector.extract_strided_slice %6 {offsets = [2, 0, 0], sizes = [8, 16, 128], strides = [1, 1, 1]} : vector<12x16x128xbf16> to vector<8x16x128xbf16>
    %58 = vector.shape_cast %57 : vector<8x16x128xbf16> to vector<128x128xbf16>
    %59 = arith.extf %58 : vector<128x128xbf16> to vector<128x128xf32>
    %60 = vector.broadcast %3 : vector<1x128xf32> to vector<128x128xf32>
    %61 = arith.addf %56, %60 : vector<128x128xf32>
    %62 = arith.addf %61, %59 : vector<128x128xf32>
    %cst_22 = arith.constant 0.000000e+00 : f32
    %63 = vector.broadcast %cst_22 : f32 to vector<128x128xf32>
    %64 = arith.maximumf %62, %63 : vector<128x128xf32>
    %65 = vector.shape_cast %64 : vector<128x128xf32> to vector<8x16x128xf32>
    %66 = arith.truncf %65 : vector<8x16x128xf32> to vector<8x16x128xbf16>
    %c0_23 = arith.constant 0 : index
    %c0_24 = arith.constant 0 : index
    %c0_25 = arith.constant 0 : index
    %c0_26 = arith.constant 0 : index
    %67 = vector.load %arg7[%c0_23, %c0_24, %c0_25, %c0_26] : memref<1x8x16x128xbf16, #tpu.memory_space<vmem>>, vector<1x8x16x128xbf16>
    %68 = vector.shape_cast %67 : vector<1x8x16x128xbf16> to vector<8x16x128xbf16>
    %69 = vector.shape_cast %66 : vector<8x16x128xbf16> to vector<1x8x16x128xbf16>
    tpu.vector_store %arg7[%c0_23, %c0_24, %c0_25, %c0_26], %69 {strides = array<i32>} : memref<1x8x16x128xbf16, #tpu.memory_space<vmem>>, vector<1x8x16x128xbf16>,
    return
  }
  func.func @transform_0(%arg0: i32, %arg1: i32) -> (i32, i32, i32, i32) {
    %c0_i32 = arith.constant 0 : i32
    %c0_i32_0 = arith.constant 0 : i32
    %c0_i32_1 = arith.constant 0 : i32
    %c0_i32_2 = arith.constant 0 : i32
    return %arg0, %c0_i32, %c0_i32_0, %c0_i32_1 : i32, i32, i32, i32
  }
  func.func @transform_1(%arg0: i32, %arg1: i32) -> (i32, i32) {
    %c0_i32 = arith.constant 0 : i32
    %c0_i32_0 = arith.constant 0 : i32
    %c0_i32_1 = arith.constant 0 : i32
    return %c0_i32, %c0_i32_0 : i32, i32
  }
  func.func @transform_2(%arg0: i32, %arg1: i32) -> (i32, i32) {
    %c0_i32 = arith.constant 0 : i32
    %c0_i32_0 = arith.constant 0 : i32
    %c0_i32_1 = arith.constant 0 : i32
    return %c0_i32, %c0_i32_0 : i32, i32
  }
  func.func @transform_3(%arg0: i32, %arg1: i32) -> (i32, i32) {
    %c0_i32 = arith.constant 0 : i32
    %c0_i32_0 = arith.constant 0 : i32
    %c0_i32_1 = arith.constant 0 : i32
    return %c0_i32, %c0_i32_0 : i32, i32
  }
  func.func @transform_4(%arg0: i32, %arg1: i32) -> (i32, i32) {
    %c0_i32 = arith.constant 0 : i32
    %c0_i32_0 = arith.constant 0 : i32
    %c0_i32_1 = arith.constant 0 : i32
    return %c0_i32, %c0_i32_0 : i32, i32
  }
  func.func @transform_5(%arg0: i32, %arg1: i32) -> (i32, i32, i32, i32) {
    %c0_i32 = arith.constant 0 : i32
    %c0_i32_0 = arith.constant 0 : i32
    %c0_i32_1 = arith.constant 0 : i32
    return %arg0, %arg1, %c0_i32, %c0_i32_0 : i32, i32, i32, i32
  }
}

module attributes {stable_mosaic.version = 11 : i64} {
  func.func @kernel(%arg0: i32, %arg1: i32, %arg2: memref<1x20x16x128xbf16, #tpu.memory_space<vmem>>, %arg3: memref<1152x128xbf16, #tpu.memory_space<vmem>>, %arg4: memref<1x128xf32, #tpu.memory_space<vmem>>, %arg5: memref<1152x128xbf16, #tpu.memory_space<vmem>>, %arg6: memref<1x128xf32, #tpu.memory_space<vmem>>, %arg7: memref<1x8x16x128xbf16, #tpu.memory_space<vmem>>, %arg8: memref<10x16x128xbf16, #tpu.memory_space<vmem>>) attributes {dimension_semantics = [#tpu.dimension_semantics<parallel>, #tpu.dimension_semantics<parallel>], iteration_bounds = array<i64: 2, 2>, scalar_prefetch = 0 : i64, scratch_operands = 1 : i64, tpu.core_type = #tpu.core_type<tc>, window_params = [{transform_indices = @transform_0, window_bounds = array<i64: 1, 20, 16, 128>}, {pipeline_mode = #tpu.pipeline_mode<synchronous>, transform_indices = @transform_1, window_bounds = array<i64: 1152, 128>}, {pipeline_mode = #tpu.pipeline_mode<synchronous>, transform_indices = @transform_2, window_bounds = array<i64: 1, 128>}, {pipeline_mode = #tpu.pipeline_mode<synchronous>, transform_indices = @transform_3, window_bounds = array<i64: 1152, 128>}, {pipeline_mode = #tpu.pipeline_mode<synchronous>, transform_indices = @transform_4, window_bounds = array<i64: 1, 128>}, {transform_indices = @transform_5, window_bounds = array<i64: 1, 8, 16, 128>}]} {
    %c8_i32 = arith.constant 8 : i32
    %0 = arith.muli %arg1, %c8_i32 : i32
    %1 = tpu.assume_multiple %0, 8 : i32
    %c0 = arith.constant 0 : index
    %c0_0 = arith.constant 0 : index
    %2 = vector.load %arg4[%c0, %c0_0] : memref<1x128xf32, #tpu.memory_space<vmem>>, vector<1x128xf32>
    %c0_1 = arith.constant 0 : index
    %c0_2 = arith.constant 0 : index
    %3 = vector.load %arg6[%c0_1, %c0_2] : memref<1x128xf32, #tpu.memory_space<vmem>>, vector<1x128xf32>
    %c0_3 = arith.constant 0 : index
    %4 = arith.index_cast %1 : i32 to index
    %c0_4 = arith.constant 0 : index
    %c0_5 = arith.constant 0 : index
    %5 = vector.load %arg2[%c0_3, %4, %c0_4, %c0_5] : memref<1x20x16x128xbf16, #tpu.memory_space<vmem>>, vector<1x12x16x128xbf16>
    %6 = vector.shape_cast %5 : vector<1x12x16x128xbf16> to vector<12x16x128xbf16>
    %cst = arith.constant 0.000000e+00 : bf16
    %7 = vector.broadcast %cst : bf16 to vector<12x1x128xbf16>
    %8 = vector.extract_strided_slice %6 {offsets = [0, 0, 0], sizes = [12, 15, 128], strides = [1, 1, 1]} : vector<12x16x128xbf16> to vector<12x15x128xbf16>
    %9 = tpu.concatenate %7, %8 in 1 : vector<12x1x128xbf16>, vector<12x15x128xbf16> -> vector<12x16x128xbf16>
    %10 = vector.extract_strided_slice %6 {offsets = [0, 1, 0], sizes = [12, 15, 128], strides = [1, 1, 1]} : vector<12x16x128xbf16> to vector<12x15x128xbf16>
    %11 = tpu.concatenate %10, %7 in 1 : vector<12x15x128xbf16>, vector<12x1x128xbf16> -> vector<12x16x128xbf16>
    %12 = vector.extract_strided_slice %9 {offsets = [0, 0, 0], sizes = [10, 16, 128], strides = [1, 1, 1]} : vector<12x16x128xbf16> to vector<10x16x128xbf16>
    %13 = vector.extract_strided_slice %6 {offsets = [0, 0, 0], sizes = [10, 16, 128], strides = [1, 1, 1]} : vector<12x16x128xbf16> to vector<10x16x128xbf16>
    %14 = vector.extract_strided_slice %11 {offsets = [0, 0, 0], sizes = [10, 16, 128], strides = [1, 1, 1]} : vector<12x16x128xbf16> to vector<10x16x128xbf16>
    %15 = vector.extract_strided_slice %9 {offsets = [1, 0, 0], sizes = [10, 16, 128], strides = [1, 1, 1]} : vector<12x16x128xbf16> to vector<10x16x128xbf16>
    %16 = vector.extract_strided_slice %6 {offsets = [1, 0, 0], sizes = [10, 16, 128], strides = [1, 1, 1]} : vector<12x16x128xbf16> to vector<10x16x128xbf16>
    %17 = vector.extract_strided_slice %11 {offsets = [1, 0, 0], sizes = [10, 16, 128], strides = [1, 1, 1]} : vector<12x16x128xbf16> to vector<10x16x128xbf16>
    %18 = vector.extract_strided_slice %9 {offsets = [2, 0, 0], sizes = [10, 16, 128], strides = [1, 1, 1]} : vector<12x16x128xbf16> to vector<10x16x128xbf16>
    %19 = vector.extract_strided_slice %6 {offsets = [2, 0, 0], sizes = [10, 16, 128], strides = [1, 1, 1]} : vector<12x16x128xbf16> to vector<10x16x128xbf16>
    %20 = vector.extract_strided_slice %11 {offsets = [2, 0, 0], sizes = [10, 16, 128], strides = [1, 1, 1]} : vector<12x16x128xbf16> to vector<10x16x128xbf16>
    %21 = tpu.concatenate %12, %13, %14, %15, %16, %17, %18, %19, %20 in 2 : vector<10x16x128xbf16>, vector<10x16x128xbf16>, vector<10x16x128xbf16>, vector<10x16x128xbf16>, vector<10x16x128xbf16>, vector<10x16x128xbf16>, vector<10x16x128xbf16>, vector<10x16x128xbf16>, vector<10x16x128xbf16> -> vector<10x16x1152xbf16>
    %22 = vector.shape_cast %21 : vector<10x16x1152xbf16> to vector<160x1152xbf16>
    %c0_6 = arith.constant 0 : index
    %c0_7 = arith.constant 0 : index
    %23 = vector.load %arg3[%c0_6, %c0_7] : memref<1152x128xbf16, #tpu.memory_space<vmem>>, vector<1152x128xbf16>
    %cst_8 = arith.constant dense<0.000000e+00> : vector<160x128xf32>
    %24 = tpu.matmul %22, %23, %cst_8 {dimension_numbers = #tpu.dot_dimension_numbers<[1], [0], [0], [1], [0, 0, 1, 1], [], []>} : vector<160x1152xbf16>, vector<1152x128xbf16>, vector<160x128xf32> -> vector<160x128xf32>
    %25 = vector.broadcast %2 : vector<1x128xf32> to vector<160x128xf32>
    %26 = arith.addf %24, %25 : vector<160x128xf32>
    %cst_9 = arith.constant 0.000000e+00 : f32
    %27 = vector.broadcast %cst_9 : f32 to vector<160x128xf32>
    %28 = arith.maximumf %26, %27 : vector<160x128xf32>
    %29 = arith.truncf %28 : vector<160x128xf32> to vector<160x128xbf16>
    %30 = vector.shape_cast %29 : vector<160x128xbf16> to vector<10x16x128xbf16>
    %c0_10 = arith.constant 0 : index
    %c0_11 = arith.constant 0 : index
    %c0_12 = arith.constant 0 : index
    %31 = vector.load %arg8[%c0_10, %c0_11, %c0_12] : memref<10x16x128xbf16, #tpu.memory_space<vmem>>, vector<10x16x128xbf16>
    tpu.vector_store %arg8[%c0_10, %c0_11, %c0_12], %30 {strides = array<i32>} : memref<10x16x128xbf16, #tpu.memory_space<vmem>>, vector<10x16x128xbf16>,
    %c0_i32 = arith.constant 0 : i32
    %32 = arith.cmpi eq, %arg1, %c0_i32 : i32
    %33 = arith.extui %32 : i1 to i32
    %c0_i32_13 = arith.constant 0 : i32
    %34 = arith.cmpi ne, %33, %c0_i32_13 : i32
    scf.if %34 {
      %cst_27 = arith.constant 0.000000e+00 : bf16
      %70 = vector.broadcast %cst_27 : bf16 to vector<1x16x128xbf16>
      %c0_28 = arith.constant 0 : index
      %c0_29 = arith.constant 0 : index
      %c0_30 = arith.constant 0 : index
      %71 = vector.load %arg8[%c0_28, %c0_29, %c0_30] : memref<10x16x128xbf16, #tpu.memory_space<vmem>>, vector<1x16x128xbf16>
      tpu.vector_store %arg8[%c0_28, %c0_29, %c0_30], %70 {strides = array<i32>} : memref<10x16x128xbf16, #tpu.memory_space<vmem>>, vector<1x16x128xbf16>,
    } else {
    }
    %c1_i32 = arith.constant 1 : i32
    %35 = arith.cmpi eq, %arg1, %c1_i32 : i32
    %36 = arith.extui %35 : i1 to i32
    %c0_i32_14 = arith.constant 0 : i32
    %37 = arith.cmpi ne, %36, %c0_i32_14 : i32
    scf.if %37 {
      %cst_27 = arith.constant 0.000000e+00 : bf16
      %70 = vector.broadcast %cst_27 : bf16 to vector<1x16x128xbf16>
      %c9 = arith.constant 9 : index
      %c0_28 = arith.constant 0 : index
      %c0_29 = arith.constant 0 : index
      %71 = vector.load %arg8[%c9, %c0_28, %c0_29] : memref<10x16x128xbf16, #tpu.memory_space<vmem>>, vector<1x16x128xbf16>
      tpu.vector_store %arg8[%c9, %c0_28, %c0_29], %70 {strides = array<i32>} : memref<10x16x128xbf16, #tpu.memory_space<vmem>>, vector<1x16x128xbf16>,
    } else {
    }
    %c0_15 = arith.constant 0 : index
    %c0_16 = arith.constant 0 : index
    %c0_17 = arith.constant 0 : index
    %38 = vector.load %arg8[%c0_15, %c0_16, %c0_17] : memref<10x16x128xbf16, #tpu.memory_space<vmem>>, vector<10x16x128xbf16>
    %cst_18 = arith.constant 0.000000e+00 : bf16
    %39 = vector.broadcast %cst_18 : bf16 to vector<10x1x128xbf16>
    %40 = vector.extract_strided_slice %38 {offsets = [0, 0, 0], sizes = [10, 15, 128], strides = [1, 1, 1]} : vector<10x16x128xbf16> to vector<10x15x128xbf16>
    %41 = tpu.concatenate %39, %40 in 1 : vector<10x1x128xbf16>, vector<10x15x128xbf16> -> vector<10x16x128xbf16>
    %42 = vector.extract_strided_slice %38 {offsets = [0, 1, 0], sizes = [10, 15, 128], strides = [1, 1, 1]} : vector<10x16x128xbf16> to vector<10x15x128xbf16>
    %43 = tpu.concatenate %42, %39 in 1 : vector<10x15x128xbf16>, vector<10x1x128xbf16> -> vector<10x16x128xbf16>
    %44 = vector.extract_strided_slice %41 {offsets = [0, 0, 0], sizes = [8, 16, 128], strides = [1, 1, 1]} : vector<10x16x128xbf16> to vector<8x16x128xbf16>
    %45 = vector.extract_strided_slice %38 {offsets = [0, 0, 0], sizes = [8, 16, 128], strides = [1, 1, 1]} : vector<10x16x128xbf16> to vector<8x16x128xbf16>
    %46 = vector.extract_strided_slice %43 {offsets = [0, 0, 0], sizes = [8, 16, 128], strides = [1, 1, 1]} : vector<10x16x128xbf16> to vector<8x16x128xbf16>
    %47 = vector.extract_strided_slice %41 {offsets = [1, 0, 0], sizes = [8, 16, 128], strides = [1, 1, 1]} : vector<10x16x128xbf16> to vector<8x16x128xbf16>
    %48 = vector.extract_strided_slice %38 {offsets = [1, 0, 0], sizes = [8, 16, 128], strides = [1, 1, 1]} : vector<10x16x128xbf16> to vector<8x16x128xbf16>
    %49 = vector.extract_strided_slice %43 {offsets = [1, 0, 0], sizes = [8, 16, 128], strides = [1, 1, 1]} : vector<10x16x128xbf16> to vector<8x16x128xbf16>
    %50 = vector.extract_strided_slice %41 {offsets = [2, 0, 0], sizes = [8, 16, 128], strides = [1, 1, 1]} : vector<10x16x128xbf16> to vector<8x16x128xbf16>
    %51 = vector.extract_strided_slice %38 {offsets = [2, 0, 0], sizes = [8, 16, 128], strides = [1, 1, 1]} : vector<10x16x128xbf16> to vector<8x16x128xbf16>
    %52 = vector.extract_strided_slice %43 {offsets = [2, 0, 0], sizes = [8, 16, 128], strides = [1, 1, 1]} : vector<10x16x128xbf16> to vector<8x16x128xbf16>
    %53 = tpu.concatenate %44, %45, %46, %47, %48, %49, %50, %51, %52 in 2 : vector<8x16x128xbf16>, vector<8x16x128xbf16>, vector<8x16x128xbf16>, vector<8x16x128xbf16>, vector<8x16x128xbf16>, vector<8x16x128xbf16>, vector<8x16x128xbf16>, vector<8x16x128xbf16>, vector<8x16x128xbf16> -> vector<8x16x1152xbf16>
    %54 = vector.shape_cast %53 : vector<8x16x1152xbf16> to vector<128x1152xbf16>
    %c0_19 = arith.constant 0 : index
    %c0_20 = arith.constant 0 : index
    %55 = vector.load %arg5[%c0_19, %c0_20] : memref<1152x128xbf16, #tpu.memory_space<vmem>>, vector<1152x128xbf16>
    %cst_21 = arith.constant dense<0.000000e+00> : vector<128x128xf32>
    %56 = tpu.matmul %54, %55, %cst_21 {dimension_numbers = #tpu.dot_dimension_numbers<[1], [0], [0], [1], [0, 0, 1, 1], [], []>} : vector<128x1152xbf16>, vector<1152x128xbf16>, vector<128x128xf32> -> vector<128x128xf32>
    %57 = vector.extract_strided_slice %6 {offsets = [2, 0, 0], sizes = [8, 16, 128], strides = [1, 1, 1]} : vector<12x16x128xbf16> to vector<8x16x128xbf16>
    %58 = vector.shape_cast %57 : vector<8x16x128xbf16> to vector<128x128xbf16>
    %59 = arith.extf %58 : vector<128x128xbf16> to vector<128x128xf32>
    %60 = vector.broadcast %3 : vector<1x128xf32> to vector<128x128xf32>
    %61 = arith.addf %56, %60 : vector<128x128xf32>
    %62 = arith.addf %61, %59 : vector<128x128xf32>
    %cst_22 = arith.constant 0.000000e+00 : f32
    %63 = vector.broadcast %cst_22 : f32 to vector<128x128xf32>
    %64 = arith.maximumf %62, %63 : vector<128x128xf32>
    %65 = vector.shape_cast %64 : vector<128x128xf32> to vector<8x16x128xf32>
    %66 = arith.truncf %65 : vector<8x16x128xf32> to vector<8x16x128xbf16>
    %c0_23 = arith.constant 0 : index
    %c0_24 = arith.constant 0 : index
    %c0_25 = arith.constant 0 : index
    %c0_26 = arith.constant 0 : index
    %67 = vector.load %arg7[%c0_23, %c0_24, %c0_25, %c0_26] : memref<1x8x16x128xbf16, #tpu.memory_space<vmem>>, vector<1x8x16x128xbf16>
    %68 = vector.shape_cast %67 : vector<1x8x16x128xbf16> to vector<8x16x128xbf16>
    %69 = vector.shape_cast %66 : vector<8x16x128xbf16> to vector<1x8x16x128xbf16>
    tpu.vector_store %arg7[%c0_23, %c0_24, %c0_25, %c0_26], %69 {strides = array<i32>} : memref<1x8x16x128xbf16, #tpu.memory_space<vmem>>, vector<1x8x16x128xbf16>,
    return
  }
  func.func @transform_0(%arg0: i32, %arg1: i32) -> (i32, i32, i32, i32) {
    %c0_i32 = arith.constant 0 : i32
    %c0_i32_0 = arith.constant 0 : i32
    %c0_i32_1 = arith.constant 0 : i32
    %c0_i32_2 = arith.constant 0 : i32
    return %arg0, %c0_i32, %c0_i32_0, %c0_i32_1 : i32, i32, i32, i32
  }
  func.func @transform_1(%arg0: i32, %arg1: i32) -> (i32, i32) {
    %c0_i32 = arith.constant 0 : i32
    %c0_i32_0 = arith.constant 0 : i32
    %c0_i32_1 = arith.constant 0 : i32
    return %c0_i32, %c0_i32_0 : i32, i32
  }
  func.func @transform_2(%arg0: i32, %arg1: i32) -> (i32, i32) {
    %c0_i32 = arith.constant 0 : i32
    %c0_i32_0 = arith.constant 0 : i32
    %c0_i32_1 = arith.constant 0 : i32
    return %c0_i32, %c0_i32_0 : i32, i32
  }
  func.func @transform_3(%arg0: i32, %arg1: i32) -> (i32, i32) {
    %c0_i32 = arith.constant 0 : i32
    %c0_i32_0 = arith.constant 0 : i32
    %c0_i32_1 = arith.constant 0 : i32
    return %c0_i32, %c0_i32_0 : i32, i32
  }
  func.func @transform_4(%arg0: i32, %arg1: i32) -> (i32, i32) {
    %c0_i32 = arith.constant 0 : i32
    %c0_i32_0 = arith.constant 0 : i32
    %c0_i32_1 = arith.constant 0 : i32
    return %c0_i32, %c0_i32_0 : i32, i32
  }
  func.func @transform_5(%arg0: i32, %arg1: i32) -> (i32, i32, i32, i32) {
    %c0_i32 = arith.constant 0 : i32
    %c0_i32_0 = arith.constant 0 : i32
    %c0_i32_1 = arith.constant 0 : i32
    return %arg0, %arg1, %c0_i32, %c0_i32_0 : i32, i32, i32, i32
  }
}

</mosaic_0001>

<llo_original>
// kernel: tpu_custom_call.1
$region0: #{tpu_custom_call.1}
  #allocation0 [shape = 'u32[]', space=smem, size = 0x4, offset = 0x4, fixed_abs, tag = 'smem constant byte address 0x4 - core index']
  #allocation1 [shape = 'u32[72,128]{1,0:T(1,128)}', space=vmem, size = 0x9000, scoped, tag = 'internal scratch']
  #allocation2 [shape = 'bf16[10,16,128]{2,1,0:T(8,128)(2,1)}', space=vmem, size = 0xa000, scoped, tag = 'scratch operand']
  %s0 = inlined_call_operand.hbm [shape: bf16[2,20,16,128], index: 0, kind: input, shape index: {}]
  %s1 = inlined_call_operand.hbm [shape: bf16[1152,128], index: 1, kind: input, shape index: {}]
  %s2 = inlined_call_operand.vmem [shape: f32[1,128], index: 2, kind: input, shape index: {}]
  %s3 = inlined_call_operand.hbm [shape: bf16[1152,128], index: 3, kind: input, shape index: {}]
  %s4 = inlined_call_operand.vmem [shape: f32[1,128], index: 4, kind: input, shape index: {}]
  %s5 = inlined_call_operand.hbm [shape: bf16[2,16,16,128], index: 5, kind: output, shape index: {}]
  %s6 = sld [smem:[#allocation0]]
  $region73: #{tpu_custom_call.1} parent=0
    _
  %s8 = ssub.s32 1, %s6
  %s9 = scalar_select 0, %s8, %s6
  $region1: #{tpu_custom_call.1} parent=0
    #allocation3 [shape = 'u8[163840]{0}', space=vmem, size = 0x28000, scoped, tag = 'input window, operand 0']
    #allocation4 [shape = 's32[2]{0}', space=sflag, size = 0x8, scoped, tag = 'scoped memory for tpu_custom_call.1']
    #allocation5 [shape = 's32[2]{0}', space=sflag, size = 0x8, scoped, tag = 'scoped memory for tpu_custom_call.1']
    #allocation6 [shape = 'u8[294912]{0}', space=vmem, size = 0x48000, scoped, tag = 'input window, operand 1, single buffered']
    #allocation7 [shape = 's32[1]{0}', space=sflag, size = 0x4, scoped, tag = 'scoped memory for tpu_custom_call.1']
    #allocation8 [shape = 'u8[294912]{0}', space=vmem, size = 0x48000, scoped, tag = 'input window, operand 3, single buffered']
    #allocation9 [shape = 'u8[65536]{0}', space=vmem, size = 0x10000, scoped, tag = 'output window, operand 0']
    %10 = vsyncpa [#allocation4], 0
    %s11 = scalar_lea.sflag [#allocation4], 1
    %12 = vsyncpa %s11, 0
    %13 = vsyncpa [#allocation7], 0
    %14 = vsyncpa [#allocation5], 0
    %s15 = scalar_lea.sflag [#allocation5], 1
    %16 = vsyncpa %s15, 0
    loop: start=0, step=1, limit=6
    $region2: #{tpu_custom_call.1} parent=1 // loop_pre_header
      _
    $region3: #{tpu_custom_call.1} parent=1 // loop_header
      %s18 = sphi 0, %s22
      %p19 = scmp.ge.s32.totalorder %s18, 6
      %s25 = sphi 0, %s37
      %s26 = sphi 0, %s33
      %s27 = sphi 0, %s25
      %s28 = sphi 0, %s26
      %s29 = sphi 0, %s27
      %s30 = sphi 0, %s28
      %s40 = sphi 0, %s42
      %s43 = sphi 0, %s40
      %s44 = sphi 0, %s43
      %s60 = sphi 0, %s44
      %s64 = sphi 0, %s64
      %s66 = sphi 0, %s64
      %s67 = sphi 0, %s66
      %s81 = sphi 0, %s67
      %s85 = sphi 0, %s85
      %s87 = sphi 0, %s85
      %s88 = sphi 0, %s87
      %s102 = sphi 0, %s88
      %s106 = sphi 0, %s106
      %s108 = sphi 0, %s106
      %s109 = sphi 0, %s108
      %s123 = sphi 0, %s109
      %s127 = sphi 0, %s127
      %s129 = sphi 0, %s127
      %s130 = sphi 0, %s129
      %s144 = sphi 0, %s130
      %s152 = sphi 0, %s154
      %s155 = sphi 0, %s152
      %s156 = sphi 0, %s155
      %s172 = sphi 0, %s156
    $region4: #{tpu_custom_call.1} parent=1 // loop_header_branch
      %21 = sbr.rel (%p19) target = $region8
    $region5: #{tpu_custom_call.1} parent=1 // loop_body
      %s23 = ssub.s32 %s18, 1
      %s24 = ssub.s32 %s18, 2
      %s31 = sadd.s32 1, %s26
      %p32 = scmp.ge.s32.totalorder %s31, 2
      %s33 = scalar_select %p32, 0, %s31
      %s34 = sadd.s32 1, %s25
      %s35 = scalar_select %p32, %s34, %s25
      %p36 = scmp.ge.s32.totalorder %s35, 2
      %s37 = scalar_select %p36, 0, %s35
      %s38 = ssub.s32 %s25, %s37
      %p39 = scmp.eq.s32.totalorder %s38, 0
      %s41 = sadd.s32 %s40, 1
      %s42 = scalar_select %p39, %s40, %s41
      %p45 = pneg %p39
      %p46 = scmp.eq.s32.totalorder %s18, 3
      %p47 = por %p45, %p46
      %p48 = scmp.ne.s32.totalorder %s40, %s43
      %p49 = scmp.eq.s32.totalorder %s18, 0
      %p50 = por %p48, %p49
      %p51 = scmp.ne.s32.totalorder %s40, %s43
      %p52 = scmp.eq.s32.totalorder %s23, 3
      %p53 = por %p51, %p52
      %p54 = scmp.ne.s32.totalorder %s43, %s44
      %p55 = scmp.eq.s32.totalorder %s23, 0
      %p56 = por %p54, %p55
      %p57 = scmp.ne.s32.totalorder %s43, %s44
      %p58 = scmp.eq.s32.totalorder %s24, 3
      %p59 = por %p57, %p58
      %p61 = scmp.ne.s32.totalorder %s44, %s60
      %p62 = scmp.eq.s32.totalorder %s24, 0
      %p63 = por %p61, %p62
      %s65 = sadd.s32 %s64, 1
      %p68 = scmp.eq.s32.totalorder %s18, 3
      %p69 = scmp.ne.s32.totalorder %s64, %s66
      %p70 = scmp.eq.s32.totalorder %s18, 0
      %p71 = por %p69, %p70
      %p72 = scmp.ne.s32.totalorder %s64, %s66
      %p73 = scmp.eq.s32.totalorder %s23, 3
      %p74 = por %p72, %p73
      %p75 = scmp.ne.s32.totalorder %s66, %s67
      %p76 = scmp.eq.s32.totalorder %s23, 0
      %p77 = por %p75, %p76
      %p78 = scmp.ne.s32.totalorder %s66, %s67
      %p79 = scmp.eq.s32.totalorder %s24, 3
      %p80 = por %p78, %p79
      %p82 = scmp.ne.s32.totalorder %s67, %s81
      %p83 = scmp.eq.s32.totalorder %s24, 0
      %p84 = por %p82, %p83
      %s86 = sadd.s32 %s85, 1
      %p89 = scmp.eq.s32.totalorder %s18, 3
      %p90 = scmp.ne.s32.totalorder %s85, %s87
      %p91 = scmp.eq.s32.totalorder %s18, 0
      %p92 = por %p90, %p91
      %p93 = scmp.ne.s32.totalorder %s85, %s87
      %p94 = scmp.eq.s32.totalorder %s23, 3
      %p95 = por %p93, %p94
      %p96 = scmp.ne.s32.totalorder %s87, %s88
      %p97 = scmp.eq.s32.totalorder %s23, 0
      %p98 = por %p96, %p97
      %p99 = scmp.ne.s32.totalorder %s87, %s88
      %p100 = scmp.eq.s32.totalorder %s24, 3
      %p101 = por %p99, %p100
      %p103 = scmp.ne.s32.totalorder %s88, %s102
      %p104 = scmp.eq.s32.totalorder %s24, 0
      %p105 = por %p103, %p104
      %s107 = sadd.s32 %s106, 1
      %p110 = scmp.eq.s32.totalorder %s18, 3
      %p111 = scmp.ne.s32.totalorder %s106, %s108
      %p112 = scmp.eq.s32.totalorder %s18, 0
      %p113 = por %p111, %p112
      %p114 = scmp.ne.s32.totalorder %s106, %s108
      %p115 = scmp.eq.s32.totalorder %s23, 3
      %p116 = por %p114, %p115
      %p117 = scmp.ne.s32.totalorder %s108, %s109
      %p118 = scmp.eq.s32.totalorder %s23, 0
      %p119 = por %p117, %p118
      %p120 = scmp.ne.s32.totalorder %s108, %s109
      %p121 = scmp.eq.s32.totalorder %s24, 3
      %p122 = por %p120, %p121
      %p124 = scmp.ne.s32.totalorder %s109, %s123
      %p125 = scmp.eq.s32.totalorder %s24, 0
      %p126 = por %p124, %p125
      %s128 = sadd.s32 %s127, 1
      %p131 = scmp.eq.s32.totalorder %s18, 3
      %p132 = scmp.ne.s32.totalorder %s127, %s129
      %p133 = scmp.eq.s32.totalorder %s18, 0
      %p134 = por %p132, %p133
      %p135 = scmp.ne.s32.totalorder %s127, %s129
      %p136 = scmp.eq.s32.totalorder %s23, 3
      %p137 = por %p135, %p136
      %p138 = scmp.ne.s32.totalorder %s129, %s130
      %p139 = scmp.eq.s32.totalorder %s23, 0
      %p140 = por %p138, %p139
      %p141 = scmp.ne.s32.totalorder %s129, %s130
      %p142 = scmp.eq.s32.totalorder %s24, 3
      %p143 = por %p141, %p142
      %p145 = scmp.ne.s32.totalorder %s130, %s144
      %p146 = scmp.eq.s32.totalorder %s24, 0
      %p147 = por %p145, %p146
      %s148 = ssub.s32 %s25, %s37
      %s149 = ssub.s32 %s26, %s33
      %s150 = sor.u32 %s148, %s149
      %p151 = scmp.eq.s32.totalorder %s150, 0
      %s153 = sadd.s32 %s152, 1
      %s154 = scalar_select %p151, %s152, %s153
      %p157 = pneg %p151
      %p158 = scmp.eq.s32.totalorder %s18, 3
      %p159 = por %p157, %p158
      %p160 = scmp.ne.s32.totalorder %s152, %s155
      %p161 = scmp.eq.s32.totalorder %s18, 0
      %p162 = por %p160, %p161
      %p163 = scmp.ne.s32.totalorder %s152, %s155
      %p164 = scmp.eq.s32.totalorder %s23, 3
      %p165 = por %p163, %p164
      %p166 = scmp.ne.s32.totalorder %s155, %s156
      %p167 = scmp.eq.s32.totalorder %s23, 0
      %p168 = por %p166, %p167
      %p169 = scmp.ne.s32.totalorder %s155, %s156
      %p170 = scmp.eq.s32.totalorder %s24, 3
      %p171 = por %p169, %p170
      %p173 = scmp.ne.s32.totalorder %s156, %s172
      %p174 = scmp.eq.s32.totalorder %s24, 0
      %p175 = por %p173, %p174
      %p176 = scmp.le.s32.totalorder 1, %s18
      %p177 = scmp.lt.s32.totalorder %s18, 5
      %p178 = pnand %p176, %p177
      %p179 = pneg %p178
      // Predicated region
      $region9: #{tpu_custom_call.1} parent=5 // pred_check
        _
      $region10: #{tpu_custom_call.1} parent=5 // pred_check_branch
        %181 = sbr.rel (%p178) target = $region12
      $region11: #{tpu_custom_call.1} parent=5 // pred_region
        %s182 = ssub.s32 %s18, 1
        // Predicated region
        $region13: #{tpu_custom_call.1} parent=11 // pred_check
          %p183 = pneg %p77
        $region14: #{tpu_custom_call.1} parent=11 // pred_check_branch
          %185 = sbr.rel (%p183) target = $region16
        $region15: #{tpu_custom_call.1} parent=11 // pred_region
          %187 = vsyncadd [#allocation7], 0
          %s188 = sshll.u32 %s1, 4
          %s189 = int_to_ptr.hbm [resolvable:$true] %s188
          %s190 = sshll.u32 [#allocation6], 4
          %s191 = int_to_ptr.vmem [resolvable:$true] %s190
          %196 = dma.hbm_to_vmem [thread:$0]  %s189, 9216, %s191, [#allocation7], 64, 64, 4
        $region16: #{tpu_custom_call.1} parent=11 // pred_fallthru
          _
        // Predicated region
        $region17: #{tpu_custom_call.1} parent=11 // pred_check
          %p197 = pneg %p98
        $region18: #{tpu_custom_call.1} parent=11 // pred_check_branch
          %199 = sbr.rel (%p197) target = $region20
        $region19: #{tpu_custom_call.1} parent=11 // pred_region
          _
        $region20: #{tpu_custom_call.1} parent=11 // pred_fallthru
          _
        // Predicated region
        $region21: #{tpu_custom_call.1} parent=11 // pred_check
          %p200 = pneg %p119
        $region22: #{tpu_custom_call.1} parent=11 // pred_check_branch
          %202 = sbr.rel (%p200) target = $region24
        $region23: #{tpu_custom_call.1} parent=11 // pred_region
          %204 = vsyncadd [#allocation7], 0
          %s205 = sshll.u32 %s3, 4
          %s206 = int_to_ptr.hbm [resolvable:$true] %s205
          %s207 = sshll.u32 [#allocation8], 4
          %s208 = int_to_ptr.vmem [resolvable:$true] %s207
          %213 = dma.hbm_to_vmem [thread:$0]  %s206, 9216, %s208, [#allocation7], 64, 64, 4
        $region24: #{tpu_custom_call.1} parent=11 // pred_fallthru
          _
        // Predicated region
        $region25: #{tpu_custom_call.1} parent=11 // pred_check
          %p214 = pneg %p140
        $region26: #{tpu_custom_call.1} parent=11 // pred_check_branch
          %216 = sbr.rel (%p214) target = $region28
        $region27: #{tpu_custom_call.1} parent=11 // pred_region
          _
        $region28: #{tpu_custom_call.1} parent=11 // pred_fallthru
          _
      $region12: #{tpu_custom_call.1} parent=5 // pred_fallthru
        _
      %p217 = scmp.lt.s32.totalorder %s18, 4
      // Predicated region
      $region29: #{tpu_custom_call.1} parent=5 // pred_check
        %p218 = pneg %p217
      $region30: #{tpu_custom_call.1} parent=5 // pred_check_branch
        %220 = sbr.rel (%p218) target = $region32
      $region31: #{tpu_custom_call.1} parent=5 // pred_region
        // Predicated region
        $region33: #{tpu_custom_call.1} parent=31 // pred_check
          %p221 = pneg %p50
        $region34: #{tpu_custom_call.1} parent=31 // pred_check_branch
          %223 = sbr.rel (%p221) target = $region36
        $region35: #{tpu_custom_call.1} parent=31 // pred_region
          %s224 = sand.u32 %s40, 1
          %s225 = scalar_lea.sflag [#allocation4], %s224
          %s226 = sand.u32 %s40, 1
          %s227 = smul.addr %s226, 160
          %s228 = scalar_lea.vmem [#allocation3], %s227
          %230 = vsyncadd %s225, 0
          %s231 = smul.addr %s25, 40
          %s232 = smul.addr %s231, 4
          %s233 = scalar_lea.hbm %s0, %s232
          %s234 = sshll.u32 %s233, 4
          %s235 = int_to_ptr.hbm [resolvable:$true] %s234
          %s236 = sshll.u32 %s228, 4
          %s237 = int_to_ptr.vmem [resolvable:$true] %s236
          %242 = dma.hbm_to_vmem [thread:$0]  %s235, 2560, %s237, %s225, 64, 64, 4
        $region36: #{tpu_custom_call.1} parent=31 // pred_fallthru
          _
      $region32: #{tpu_custom_call.1} parent=5 // pred_fallthru
        _
      %p243 = scmp.le.s32.totalorder 1, %s18
      %p244 = scmp.lt.s32.totalorder %s18, 5
      %p245 = pnand %p243, %p244
      %p246 = pneg %p245
      // Predicated region
      $region37: #{tpu_custom_call.1} parent=5 // pred_check
        _
      $region38: #{tpu_custom_call.1} parent=5 // pred_check_branch
        %248 = sbr.rel (%p245) target = $region40
      $region39: #{tpu_custom_call.1} parent=5 // pred_region
        %s249 = ssub.s32 %s18, 1
        %s250 = sand.u32 %s43, 1
        %s251 = scalar_lea.sflag [#allocation4], %s250
        %s252 = sand.u32 %s43, 1
        %s253 = smul.addr %s252, 160
        %s254 = scalar_lea.vmem [#allocation3], %s253
        // Predicated region
        $region41: #{tpu_custom_call.1} parent=39 // pred_check
          %p255 = pneg %p56
        $region42: #{tpu_custom_call.1} parent=39 // pred_check_branch
          %257 = sbr.rel (%p255) target = $region44
        $region43: #{tpu_custom_call.1} parent=39 // pred_region
          %259 = dma.done %s251, 2560
        $region44: #{tpu_custom_call.1} parent=39 // pred_fallthru
          _
        // Predicated region
        $region45: #{tpu_custom_call.1} parent=39 // pred_check
          %p260 = pneg %p77
        $region46: #{tpu_custom_call.1} parent=39 // pred_check_branch
          %262 = sbr.rel (%p260) target = $region48
        $region47: #{tpu_custom_call.1} parent=39 // pred_region
          %264 = dma.done [#allocation7], 9216
        $region48: #{tpu_custom_call.1} parent=39 // pred_fallthru
          _
        // Predicated region
        $region49: #{tpu_custom_call.1} parent=39 // pred_check
          %p265 = pneg %p119
        $region50: #{tpu_custom_call.1} parent=39 // pred_check_branch
          %267 = sbr.rel (%p265) target = $region52
        $region51: #{tpu_custom_call.1} parent=39 // pred_region
          %269 = dma.done [#allocation7], 9216
        $region52: #{tpu_custom_call.1} parent=39 // pred_fallthru
          _
        %s270 = sand.u32 %s43, 1
        %s271 = scalar_lea.sflag [#allocation4], %s270
        %s272 = sand.u32 %s43, 1
        %s273 = smul.addr %s272, 160
        %s274 = scalar_lea.vmem [#allocation3], %s273
        %p275 = pneg %p56
        %p276 = pneg %p53
        %p277 = pneg %p77
        %p278 = pneg %p74
        %p279 = pneg %p98
        %p280 = pneg %p95
        %p281 = pneg %p119
        %p282 = pneg %p116
        %p283 = pneg %p140
        %p284 = pneg %p137
        %p285 = pneg %p168
        %p286 = pneg %p165
        %s287 = sand.u32 %s155, 1
        %s288 = scalar_lea.sflag [#allocation5], %s287
        %s289 = sand.u32 %s155, 1
        %s290 = smul.addr %s289, 64
        %s291 = scalar_lea.vmem [#allocation9], %s290
        %s292 = smul.u32 8, %s28
        %s294 = smul.u32 %s28, 8
        %v295 = vld [vmem:[%s2] sm:$0x1]
        %v296 = vld [vmem:[%s4] sm:$0x1]
        %s297 = smul.u32 %s294, 2
        %s298 = smul.addr %s297, 4
        %s299 = scalar_lea.vmem %s254, %s298 [#allocation3]
        %v300 = vld [vmem:[%s299] sm:$0xf]
        %v301 = vld [vmem:[%s299 + $0x4] sm:$0xf]
        %v302 = vld [vmem:[%s299 + $0x8] sm:$0xf]
        %v303 = vld [vmem:[%s299 + $0xc] sm:$0xf]
        %v304 = vld [vmem:[%s299 + $0x10] sm:$0xf]
        %v305 = vld [vmem:[%s299 + $0x14] sm:$0xf]
        %v306 = vld [vmem:[%s299 + $0x18] sm:$0xf]
        %v307 = vld [vmem:[%s299 + $0x1c] sm:$0xf]
        %v308 = vld [vmem:[%s299 + $0x20] sm:$0xf]
        %v309 = vld [vmem:[%s299 + $0x24] sm:$0xf]
        %v310 = vld [vmem:[%s299 + $0x28] sm:$0xf]
        %v311 = vld [vmem:[%s299 + $0x2c] sm:$0xf]
        %v312 = vld [vmem:[%s299 + $0x30] sm:$0xf]
        %v313 = vld [vmem:[%s299 + $0x34] sm:$0xf]
        %v314 = vld [vmem:[%s299 + $0x38] sm:$0xf]
        %v315 = vld [vmem:[%s299 + $0x3c] sm:$0xf]
        %v316 = vld [vmem:[%s299 + $0x40] sm:$0xf]
        %v317 = vld [vmem:[%s299 + $0x44] sm:$0xf]
        %v318 = vld [vmem:[%s299 + $0x48] sm:$0xf]
        %v319 = vld [vmem:[%s299 + $0x4c] sm:$0xf]
        %v320 = vld [vmem:[%s299 + $0x50] sm:$0xf]
        %v321 = vld [vmem:[%s299 + $0x54] sm:$0xf]
        %v322 = vld [vmem:[%s299 + $0x58] sm:$0xf]
        %v323 = vld [vmem:[%s299 + $0x5c] sm:$0xf]
        %v348 = vunpack.c.l.b16 %v300
        %v349 = vunpack.c.l.b16 %v301
        %v350 = vunpack.c.l.b16 %v302
        %v351 = vunpack.c.l.b16 %v303
        %v352 = vunpack.c.l.b16 %v304
        %v353 = vunpack.c.l.b16 %v305
        %v354 = vunpack.c.l.b16 %v306
        %v355 = vunpack.c.l.b16 %v307
        %v356 = vunpack.c.l.b16 %v308
        %v357 = vunpack.c.l.b16 %v309
        %v358 = vunpack.c.l.b16 %v310
        %v359 = vunpack.c.l.b16 %v311
        %v360 = vunpack.c.l.b16 %v312
        %v361 = vunpack.c.l.b16 %v313
        %v362 = vunpack.c.l.b16 %v314
        %v363 = vunpack.c.l.b16 %v315
        %v364 = vunpack.c.l.b16 %v316
        %v365 = vunpack.c.l.b16 %v317
        %v366 = vunpack.c.l.b16 %v318
        %v367 = vunpack.c.l.b16 %v319
        %v368 = vunpack.c.l.b16 %v320
        %v369 = vunpack.c.l.b16 %v321
        %v370 = vunpack.c.l.b16 %v322
        %v371 = vunpack.c.l.b16 %v323
        %v372 = vpack.c.b16 %v349, %v348
        %v373 = vpack.c.b16 %v351, %v350
        %v374 = vpack.c.b16 %v353, %v352
        %v375 = vpack.c.b16 %v355, %v354
        %v376 = vpack.c.b16 %v357, %v356
        %v377 = vpack.c.b16 %v359, %v358
        %v378 = vpack.c.b16 %v361, %v360
        %v379 = vpack.c.b16 %v363, %v362
        %v380 = vpack.c.b16 %v365, %v364
        %v381 = vpack.c.b16 %v367, %v366
        %v382 = vpack.c.b16 %v369, %v368
        %v383 = vpack.c.b16 %v371, %v370
        %v385 = vshrl.u32 %v372, 16
        %v387 = vrot.slane %v385, 7
        %v388 = vshll.u32 %v372, 16
        %v390 = vor.u32 %v387, %v388
        %v392 = vshrl.u32 %v373, 16
        %v394 = vrot.slane %v392, 7
        %v395 = vshll.u32 %v373, 16
        %v397 = vor.u32 %v394, %v395
        %v399 = vshrl.u32 %v374, 16
        %v401 = vrot.slane %v399, 7
        %v402 = vshll.u32 %v374, 16
        %v404 = vor.u32 %v401, %v402
        %v406 = vshrl.u32 %v375, 16
        %v408 = vrot.slane %v406, 7
        %v409 = vshll.u32 %v375, 16
        %v411 = vor.u32 %v408, %v409
        %v413 = vshrl.u32 %v376, 16
        %v415 = vrot.slane %v413, 7
        %v416 = vshll.u32 %v376, 16
        %v418 = vor.u32 %v415, %v416
        %v420 = vshrl.u32 %v377, 16
        %v422 = vrot.slane %v420, 7
        %v423 = vshll.u32 %v377, 16
        %v425 = vor.u32 %v422, %v423
        %v427 = vshrl.u32 %v378, 16
        %v429 = vrot.slane %v427, 7
        %v430 = vshll.u32 %v378, 16
        %v432 = vor.u32 %v429, %v430
        %v434 = vshrl.u32 %v379, 16
        %v436 = vrot.slane %v434, 7
        %v437 = vshll.u32 %v379, 16
        %v439 = vor.u32 %v436, %v437
        %v441 = vshrl.u32 %v380, 16
        %v443 = vrot.slane %v441, 7
        %v444 = vshll.u32 %v380, 16
        %v446 = vor.u32 %v443, %v444
        %v448 = vshrl.u32 %v381, 16
        %v450 = vrot.slane %v448, 7
        %v451 = vshll.u32 %v381, 16
        %v453 = vor.u32 %v450, %v451
        %v455 = vshrl.u32 %v382, 16
        %v457 = vrot.slane %v455, 7
        %v458 = vshll.u32 %v382, 16
        %v460 = vor.u32 %v457, %v458
        %v462 = vshrl.u32 %v383, 16
        %v464 = vrot.slane %v462, 7
        %v465 = vshll.u32 %v383, 16
        %v467 = vor.u32 %v464, %v465
        %vm480 = vcmask 1040384
        %vm481 = vsmask.f32 256
        %vm482 = vmand %vm480, %vm481
        %v483 = vsel %vm482, 0, %v390
        %v484 = vsel %vm482, 0, %v397
        %v485 = vsel %vm482, 0, %v404
        %v486 = vsel %vm482, 0, %v411
        %v487 = vsel %vm482, 0, %v418
        %v488 = vsel %vm482, 0, %v425
        %v489 = vsel %vm482, 0, %v432
        %v490 = vsel %vm482, 0, %v439
        %v491 = vsel %vm482, 0, %v446
        %v492 = vsel %vm482, 0, %v453
        %v493 = vsel %vm482, 0, %v460
        %v494 = vsel %vm482, 0, %v467
        %v495 = vrot.slane %v388, 1
        %v496 = vor.u32 %v385, %v495
        %v497 = vrot.slane %v395, 1
        %v498 = vor.u32 %v392, %v497
        %v499 = vrot.slane %v402, 1
        %v500 = vor.u32 %v399, %v499
        %v501 = vrot.slane %v409, 1
        %v502 = vor.u32 %v406, %v501
        %v503 = vrot.slane %v416, 1
        %v504 = vor.u32 %v413, %v503
        %v505 = vrot.slane %v423, 1
        %v506 = vor.u32 %v420, %v505
        %v507 = vrot.slane %v430, 1
        %v508 = vor.u32 %v427, %v507
        %v509 = vrot.slane %v437, 1
        %v510 = vor.u32 %v434, %v509
        %v511 = vrot.slane %v444, 1
        %v512 = vor.u32 %v441, %v511
        %v513 = vrot.slane %v451, 1
        %v514 = vor.u32 %v448, %v513
        %v515 = vrot.slane %v458, 1
        %v516 = vor.u32 %v455, %v515
        %v517 = vrot.slane %v465, 1
        %v518 = vor.u32 %v462, %v517
        %vm531 = vcmask 1047552
        %vm532 = vsmask.f32 7424
        %vm533 = vmand %vm531, %vm532
        %v534 = vsel %vm533, %v496, 0
        %v535 = vsel %vm533, %v498, 0
        %v536 = vsel %vm533, %v500, 0
        %v537 = vsel %vm533, %v502, 0
        %v538 = vsel %vm533, %v504, 0
        %v539 = vsel %vm533, %v506, 0
        %v540 = vsel %vm533, %v508, 0
        %v541 = vsel %vm533, %v510, 0
        %v542 = vsel %vm533, %v512, 0
        %v543 = vsel %vm533, %v514, 0
        %v544 = vsel %vm533, %v516, 0
        %v545 = vsel %vm533, %v518, 0
        %v558 = vld [vmem:[#allocation6] sm:$0xf]
        %v559 = vld [vmem:[#allocation6 + $0x4] sm:$0xf]
        %v560 = vld [vmem:[#allocation6 + $0x8] sm:$0xf]
        %v561 = vld [vmem:[#allocation6 + $0xc] sm:$0xf]
        %v562 = vld [vmem:[#allocation6 + $0x10] sm:$0xf]
        %v563 = vld [vmem:[#allocation6 + $0x14] sm:$0xf]
        %v564 = vld [vmem:[#allocation6 + $0x18] sm:$0xf]
        %v565 = vld [vmem:[#allocation6 + $0x1c] sm:$0xf]
        %v566 = vld [vmem:[#allocation6 + $0x20] sm:$0xf]
        %v567 = vld [vmem:[#allocation6 + $0x24] sm:$0xf]
        %v568 = vld [vmem:[#allocation6 + $0x28] sm:$0xf]
        %v569 = vld [vmem:[#allocation6 + $0x2c] sm:$0xf]
        %v570 = vld [vmem:[#allocation6 + $0x30] sm:$0xf]
        %v571 = vld [vmem:[#allocation6 + $0x34] sm:$0xf]
        %v572 = vld [vmem:[#allocation6 + $0x38] sm:$0xf]
        %v573 = vld [vmem:[#allocation6 + $0x3c] sm:$0xf]
        %v574 = vld [vmem:[#allocation6 + $0x40] sm:$0xf]
        %v575 = vld [vmem:[#allocation6 + $0x44] sm:$0xf]
        %v576 = vld [vmem:[#allocation6 + $0x48] sm:$0xf]
        %v577 = vld [vmem:[#allocation6 + $0x4c] sm:$0xf]
        %v578 = vld [vmem:[#allocation6 + $0x50] sm:$0xf]
        %v579 = vld [vmem:[#allocation6 + $0x54] sm:$0xf]
        %v580 = vld [vmem:[#allocation6 + $0x58] sm:$0xf]
        %v581 = vld [vmem:[#allocation6 + $0x5c] sm:$0xf]
        %v582 = vld [vmem:[#allocation6 + $0x60] sm:$0xf]
        %v583 = vld [vmem:[#allocation6 + $0x64] sm:$0xf]
        %v584 = vld [vmem:[#allocation6 + $0x68] sm:$0xf]
        %v585 = vld [vmem:[#allocation6 + $0x6c] sm:$0xf]
        %v586 = vld [vmem:[#allocation6 + $0x70] sm:$0xf]
        %v587 = vld [vmem:[#allocation6 + $0x74] sm:$0xf]
        %v588 = vld [vmem:[#allocation6 + $0x78] sm:$0xf]
        %v589 = vld [vmem:[#allocation6 + $0x7c] sm:$0xf]
        %v590 = vld [vmem:[#allocation6 + $0x80] sm:$0xf]
        %v591 = vld [vmem:[#allocation6 + $0x84] sm:$0xf]
        %v592 = vld [vmem:[#allocation6 + $0x88] sm:$0xf]
        %v593 = vld [vmem:[#allocation6 + $0x8c] sm:$0xf]
        %v594 = vld [vmem:[#allocation6 + $0x90] sm:$0xf]
        %v595 = vld [vmem:[#allocation6 + $0x94] sm:$0xf]
        %v596 = vld [vmem:[#allocation6 + $0x98] sm:$0xf]
        %v597 = vld [vmem:[#allocation6 + $0x9c] sm:$0xf]
        %v598 = vld [vmem:[#allocation6 + $0xa0] sm:$0xf]
        %v599 = vld [vmem:[#allocation6 + $0xa4] sm:$0xf]
        %v600 = vld [vmem:[#allocation6 + $0xa8] sm:$0xf]
        %v601 = vld [vmem:[#allocation6 + $0xac] sm:$0xf]
        %v602 = vld [vmem:[#allocation6 + $0xb0] sm:$0xf]
        %v603 = vld [vmem:[#allocation6 + $0xb4] sm:$0xf]
        %v604 = vld [vmem:[#allocation6 + $0xb8] sm:$0xf]
        %v605 = vld [vmem:[#allocation6 + $0xbc] sm:$0xf]
        %v606 = vld [vmem:[#allocation6 + $0xc0] sm:$0xf]
        %v607 = vld [vmem:[#allocation6 + $0xc4] sm:$0xf]
        %v608 = vld [vmem:[#allocation6 + $0xc8] sm:$0xf]
        %v609 = vld [vmem:[#allocation6 + $0xcc] sm:$0xf]
        %v610 = vld [vmem:[#allocation6 + $0xd0] sm:$0xf]
        %v611 = vld [vmem:[#allocation6 + $0xd4] sm:$0xf]
        %v612 = vld [vmem:[#allocation6 + $0xd8] sm:$0xf]
        %v613 = vld [vmem:[#allocation6 + $0xdc] sm:$0xf]
        %v614 = vld [vmem:[#allocation6 + $0xe0] sm:$0xf]
        %v615 = vld [vmem:[#allocation6 + $0xe4] sm:$0xf]
        %v616 = vld [vmem:[#allocation6 + $0xe8] sm:$0xf]
        %v617 = vld [vmem:[#allocation6 + $0xec] sm:$0xf]
        %v618 = vld [vmem:[#allocation6 + $0xf0] sm:$0xf]
        %v619 = vld [vmem:[#allocation6 + $0xf4] sm:$0xf]
        %v620 = vld [vmem:[#allocation6 + $0xf8] sm:$0xf]
        %v621 = vld [vmem:[#allocation6 + $0xfc] sm:$0xf]
        %v622 = vld [vmem:[#allocation6 + $0x100] sm:$0xf]
        %v623 = vld [vmem:[#allocation6 + $0x104] sm:$0xf]
        %v624 = vld [vmem:[#allocation6 + $0x108] sm:$0xf]
        %v625 = vld [vmem:[#allocation6 + $0x10c] sm:$0xf]
        %v626 = vld [vmem:[#allocation6 + $0x110] sm:$0xf]
        %v627 = vld [vmem:[#allocation6 + $0x114] sm:$0xf]
        %v628 = vld [vmem:[#allocation6 + $0x118] sm:$0xf]
        %v629 = vld [vmem:[#allocation6 + $0x11c] sm:$0xf]
        %v630 = vld [vmem:[#allocation6 + $0x120] sm:$0xf]
        %v631 = vld [vmem:[#allocation6 + $0x124] sm:$0xf]
        %v632 = vld [vmem:[#allocation6 + $0x128] sm:$0xf]
        %v633 = vld [vmem:[#allocation6 + $0x12c] sm:$0xf]
        %v634 = vld [vmem:[#allocation6 + $0x130] sm:$0xf]
        %v635 = vld [vmem:[#allocation6 + $0x134] sm:$0xf]
        %v636 = vld [vmem:[#allocation6 + $0x138] sm:$0xf]
        %v637 = vld [vmem:[#allocation6 + $0x13c] sm:$0xf]
        %v638 = vld [vmem:[#allocation6 + $0x140] sm:$0xf]
        %v639 = vld [vmem:[#allocation6 + $0x144] sm:$0xf]
        %v640 = vld [vmem:[#allocation6 + $0x148] sm:$0xf]
        %v641 = vld [vmem:[#allocation6 + $0x14c] sm:$0xf]
        %v642 = vld [vmem:[#allocation6 + $0x150] sm:$0xf]
        %v643 = vld [vmem:[#allocation6 + $0x154] sm:$0xf]
        %v644 = vld [vmem:[#allocation6 + $0x158] sm:$0xf]
        %v645 = vld [vmem:[#allocation6 + $0x15c] sm:$0xf]
        %v646 = vld [vmem:[#allocation6 + $0x160] sm:$0xf]
        %v647 = vld [vmem:[#allocation6 + $0x164] sm:$0xf]
        %v648 = vld [vmem:[#allocation6 + $0x168] sm:$0xf]
        %v649 = vld [vmem:[#allocation6 + $0x16c] sm:$0xf]
        %v650 = vld [vmem:[#allocation6 + $0x170] sm:$0xf]
        %v651 = vld [vmem:[#allocation6 + $0x174] sm:$0xf]
        %v652 = vld [vmem:[#allocation6 + $0x178] sm:$0xf]
        %v653 = vld [vmem:[#allocation6 + $0x17c] sm:$0xf]
        %v654 = vld [vmem:[#allocation6 + $0x180] sm:$0xf]
        %v655 = vld [vmem:[#allocation6 + $0x184] sm:$0xf]
        %v656 = vld [vmem:[#allocation6 + $0x188] sm:$0xf]
        %v657 = vld [vmem:[#allocation6 + $0x18c] sm:$0xf]
        %v658 = vld [vmem:[#allocation6 + $0x190] sm:$0xf]
        %v659 = vld [vmem:[#allocation6 + $0x194] sm:$0xf]
        %v660 = vld [vmem:[#allocation6 + $0x198] sm:$0xf]
        %v661 = vld [vmem:[#allocation6 + $0x19c] sm:$0xf]
        %v662 = vld [vmem:[#allocation6 + $0x1a0] sm:$0xf]
        %v663 = vld [vmem:[#allocation6 + $0x1a4] sm:$0xf]
        %v664 = vld [vmem:[#allocation6 + $0x1a8] sm:$0xf]
        %v665 = vld [vmem:[#allocation6 + $0x1ac] sm:$0xf]
        %v666 = vld [vmem:[#allocation6 + $0x1b0] sm:$0xf]
        %v667 = vld [vmem:[#allocation6 + $0x1b4] sm:$0xf]
        %v668 = vld [vmem:[#allocation6 + $0x1b8] sm:$0xf]
        %v669 = vld [vmem:[#allocation6 + $0x1bc] sm:$0xf]
        %v670 = vld [vmem:[#allocation6 + $0x1c0] sm:$0xf]
        %v671 = vld [vmem:[#allocation6 + $0x1c4] sm:$0xf]
        %v672 = vld [vmem:[#allocation6 + $0x1c8] sm:$0xf]
        %v673 = vld [vmem:[#allocation6 + $0x1cc] sm:$0xf]
        %v674 = vld [vmem:[#allocation6 + $0x1d0] sm:$0xf]
        %v675 = vld [vmem:[#allocation6 + $0x1d4] sm:$0xf]
        %v676 = vld [vmem:[#allocation6 + $0x1d8] sm:$0xf]
        %v677 = vld [vmem:[#allocation6 + $0x1dc] sm:$0xf]
        %v678 = vld [vmem:[#allocation6 + $0x1e0] sm:$0xf]
        %v679 = vld [vmem:[#allocation6 + $0x1e4] sm:$0xf]
        %v680 = vld [vmem:[#allocation6 + $0x1e8] sm:$0xf]
        %v681 = vld [vmem:[#allocation6 + $0x1ec] sm:$0xf]
        %v682 = vld [vmem:[#allocation6 + $0x1f0] sm:$0xf]
        %v683 = vld [vmem:[#allocation6 + $0x1f4] sm:$0xf]
        %v684 = vld [vmem:[#allocation6 + $0x1f8] sm:$0xf]
        %v685 = vld [vmem:[#allocation6 + $0x1fc] sm:$0xf]
        %v686 = vld [vmem:[#allocation6 + $0x200] sm:$0xf]
        %v687 = vld [vmem:[#allocation6 + $0x204] sm:$0xf]
        %v688 = vld [vmem:[#allocation6 + $0x208] sm:$0xf]
        %v689 = vld [vmem:[#allocation6 + $0x20c] sm:$0xf]
        %v690 = vld [vmem:[#allocation6 + $0x210] sm:$0xf]
        %v691 = vld [vmem:[#allocation6 + $0x214] sm:$0xf]
        %v692 = vld [vmem:[#allocation6 + $0x218] sm:$0xf]
        %v693 = vld [vmem:[#allocation6 + $0x21c] sm:$0xf]
        %v694 = vld [vmem:[#allocation6 + $0x220] sm:$0xf]
        %v695 = vld [vmem:[#allocation6 + $0x224] sm:$0xf]
        %v696 = vld [vmem:[#allocation6 + $0x228] sm:$0xf]
        %v697 = vld [vmem:[#allocation6 + $0x22c] sm:$0xf]
        %v698 = vld [vmem:[#allocation6 + $0x230] sm:$0xf]
        %v699 = vld [vmem:[#allocation6 + $0x234] sm:$0xf]
        %v700 = vld [vmem:[#allocation6 + $0x238] sm:$0xf]
        %v701 = vld [vmem:[#allocation6 + $0x23c] sm:$0xf]
        %v703 = vperm.slane %v295, 0
        %v849 = vunpack.c.l.b16 %v558
        %v850 = vunpack.c.l.b16 %v559
        %v851 = vunpack.c.l.b16 %v560
        %v852 = vunpack.c.l.b16 %v561
        %v853 = vunpack.c.l.b16 %v562
        %v854 = vunpack.c.l.b16 %v563
        %v855 = vunpack.c.l.b16 %v564
        %v856 = vunpack.c.l.b16 %v565
        %v857 = vunpack.c.l.b16 %v566
        %v858 = vunpack.c.l.b16 %v567
        %v859 = vunpack.c.l.b16 %v568
        %v860 = vunpack.c.l.b16 %v569
        %v861 = vunpack.c.l.b16 %v570
        %v862 = vunpack.c.l.b16 %v571
        %v863 = vunpack.c.l.b16 %v572
        %v864 = vunpack.c.l.b16 %v573
        %v865 = vunpack.c.l.b16 %v574
        %v866 = vunpack.c.l.b16 %v575
        %v867 = vunpack.c.l.b16 %v576
        %v868 = vunpack.c.l.b16 %v577
        %v869 = vunpack.c.l.b16 %v578
        %v870 = vunpack.c.l.b16 %v579
        %v871 = vunpack.c.l.b16 %v580
        %v872 = vunpack.c.l.b16 %v581
        %v873 = vunpack.c.l.b16 %v582
        %v874 = vunpack.c.l.b16 %v583
        %v875 = vunpack.c.l.b16 %v584
        %v876 = vunpack.c.l.b16 %v585
        %v877 = vunpack.c.l.b16 %v586
        %v878 = vunpack.c.l.b16 %v587
        %v879 = vunpack.c.l.b16 %v588
        %v880 = vunpack.c.l.b16 %v589
        %v881 = vunpack.c.l.b16 %v590
        %v882 = vunpack.c.l.b16 %v591
        %v883 = vunpack.c.l.b16 %v592
        %v884 = vunpack.c.l.b16 %v593
        %v885 = vunpack.c.l.b16 %v594
        %v886 = vunpack.c.l.b16 %v595
        %v887 = vunpack.c.l.b16 %v596
        %v888 = vunpack.c.l.b16 %v597
        %v889 = vunpack.c.l.b16 %v598
        %v890 = vunpack.c.l.b16 %v599
        %v891 = vunpack.c.l.b16 %v600
        %v892 = vunpack.c.l.b16 %v601
        %v893 = vunpack.c.l.b16 %v602
        %v894 = vunpack.c.l.b16 %v603
        %v895 = vunpack.c.l.b16 %v604
        %v896 = vunpack.c.l.b16 %v605
        %v897 = vunpack.c.l.b16 %v606
        %v898 = vunpack.c.l.b16 %v607
        %v899 = vunpack.c.l.b16 %v608
        %v900 = vunpack.c.l.b16 %v609
        %v901 = vunpack.c.l.b16 %v610
        %v902 = vunpack.c.l.b16 %v611
        %v903 = vunpack.c.l.b16 %v612
        %v904 = vunpack.c.l.b16 %v613
        %v905 = vunpack.c.l.b16 %v614
        %v906 = vunpack.c.l.b16 %v615
        %v907 = vunpack.c.l.b16 %v616
        %v908 = vunpack.c.l.b16 %v617
        %v909 = vunpack.c.l.b16 %v618
        %v910 = vunpack.c.l.b16 %v619
        %v911 = vunpack.c.l.b16 %v620
        %v912 = vunpack.c.l.b16 %v621
        %v913 = vunpack.c.l.b16 %v622
        %v914 = vunpack.c.l.b16 %v623
        %v915 = vunpack.c.l.b16 %v624
        %v916 = vunpack.c.l.b16 %v625
        %v917 = vunpack.c.l.b16 %v626
        %v918 = vunpack.c.l.b16 %v627
        %v919 = vunpack.c.l.b16 %v628
        %v920 = vunpack.c.l.b16 %v629
        %v921 = vunpack.c.l.b16 %v630
        %v922 = vunpack.c.l.b16 %v631
        %v923 = vunpack.c.l.b16 %v632
        %v924 = vunpack.c.l.b16 %v633
        %v925 = vunpack.c.l.b16 %v634
        %v926 = vunpack.c.l.b16 %v635
        %v927 = vunpack.c.l.b16 %v636
        %v928 = vunpack.c.l.b16 %v637
        %v929 = vunpack.c.l.b16 %v638
        %v930 = vunpack.c.l.b16 %v639
        %v931 = vunpack.c.l.b16 %v640
        %v932 = vunpack.c.l.b16 %v641
        %v933 = vunpack.c.l.b16 %v642
        %v934 = vunpack.c.l.b16 %v643
        %v935 = vunpack.c.l.b16 %v644
        %v936 = vunpack.c.l.b16 %v645
        %v937 = vunpack.c.l.b16 %v646
        %v938 = vunpack.c.l.b16 %v647
        %v939 = vunpack.c.l.b16 %v648
        %v940 = vunpack.c.l.b16 %v649
        %v941 = vunpack.c.l.b16 %v650
        %v942 = vunpack.c.l.b16 %v651
        %v943 = vunpack.c.l.b16 %v652
        %v944 = vunpack.c.l.b16 %v653
        %v945 = vunpack.c.l.b16 %v654
        %v946 = vunpack.c.l.b16 %v655
        %v947 = vunpack.c.l.b16 %v656
        %v948 = vunpack.c.l.b16 %v657
        %v949 = vunpack.c.l.b16 %v658
        %v950 = vunpack.c.l.b16 %v659
        %v951 = vunpack.c.l.b16 %v660
        %v952 = vunpack.c.l.b16 %v661
        %v953 = vunpack.c.l.b16 %v662
        %v954 = vunpack.c.l.b16 %v663
        %v955 = vunpack.c.l.b16 %v664
        %v956 = vunpack.c.l.b16 %v665
        %v957 = vunpack.c.l.b16 %v666
        %v958 = vunpack.c.l.b16 %v667
        %v959 = vunpack.c.l.b16 %v668
        %v960 = vunpack.c.l.b16 %v669
        %v961 = vunpack.c.l.b16 %v670
        %v962 = vunpack.c.l.b16 %v671
        %v963 = vunpack.c.l.b16 %v672
        %v964 = vunpack.c.l.b16 %v673
        %v965 = vunpack.c.l.b16 %v674
        %v966 = vunpack.c.l.b16 %v675
        %v967 = vunpack.c.l.b16 %v676
        %v968 = vunpack.c.l.b16 %v677
        %v969 = vunpack.c.l.b16 %v678
        %v970 = vunpack.c.l.b16 %v679
        %v971 = vunpack.c.l.b16 %v680
        %v972 = vunpack.c.l.b16 %v681
        %v973 = vunpack.c.l.b16 %v682
        %v974 = vunpack.c.l.b16 %v683
        %v975 = vunpack.c.l.b16 %v684
        %v976 = vunpack.c.l.b16 %v685
        %v977 = vunpack.c.l.b16 %v686
        %v978 = vunpack.c.l.b16 %v687
        %v979 = vunpack.c.l.b16 %v688
        %v980 = vunpack.c.l.b16 %v689
        %v981 = vunpack.c.l.b16 %v690
        %v982 = vunpack.c.l.b16 %v691
        %v983 = vunpack.c.l.b16 %v692
        %v984 = vunpack.c.l.b16 %v693
        %v985 = vunpack.c.l.b16 %v694
        %v986 = vunpack.c.l.b16 %v695
        %v987 = vunpack.c.l.b16 %v696
        %v988 = vunpack.c.l.b16 %v697
        %v989 = vunpack.c.l.b16 %v698
        %v990 = vunpack.c.l.b16 %v699
        %v991 = vunpack.c.l.b16 %v700
        %v992 = vunpack.c.l.b16 %v701
        %v993 = vpack.c.b16 %v850, %v849
        %v994 = vpack.c.b16 %v852, %v851
        %v995 = vpack.c.b16 %v854, %v853
        %v996 = vpack.c.b16 %v856, %v855
        %v997 = vpack.c.b16 %v858, %v857
        %v998 = vpack.c.b16 %v860, %v859
        %v999 = vpack.c.b16 %v862, %v861
        %v1000 = vpack.c.b16 %v864, %v863
        %v1001 = vpack.c.b16 %v866, %v865
        %v1002 = vpack.c.b16 %v868, %v867
        %v1003 = vpack.c.b16 %v870, %v869
        %v1004 = vpack.c.b16 %v872, %v871
        %v1005 = vpack.c.b16 %v874, %v873
        %v1006 = vpack.c.b16 %v876, %v875
        %v1007 = vpack.c.b16 %v878, %v877
        %v1008 = vpack.c.b16 %v880, %v879
        %v1009 = vpack.c.b16 %v882, %v881
        %v1010 = vpack.c.b16 %v884, %v883
        %v1011 = vpack.c.b16 %v886, %v885
        %v1012 = vpack.c.b16 %v888, %v887
        %v1013 = vpack.c.b16 %v890, %v889
        %v1014 = vpack.c.b16 %v892, %v891
        %v1015 = vpack.c.b16 %v894, %v893
        %v1016 = vpack.c.b16 %v896, %v895
        %v1017 = vpack.c.b16 %v898, %v897
        %v1018 = vpack.c.b16 %v900, %v899
        %v1019 = vpack.c.b16 %v902, %v901
        %v1020 = vpack.c.b16 %v904, %v903
        %v1021 = vpack.c.b16 %v906, %v905
        %v1022 = vpack.c.b16 %v908, %v907
        %v1023 = vpack.c.b16 %v910, %v909
        %v1024 = vpack.c.b16 %v912, %v911
        %v1025 = vpack.c.b16 %v914, %v913
        %v1026 = vpack.c.b16 %v916, %v915
        %v1027 = vpack.c.b16 %v918, %v917
        %v1028 = vpack.c.b16 %v920, %v919
        %v1029 = vpack.c.b16 %v922, %v921
        %v1030 = vpack.c.b16 %v924, %v923
        %v1031 = vpack.c.b16 %v926, %v925
        %v1032 = vpack.c.b16 %v928, %v927
        %v1033 = vpack.c.b16 %v930, %v929
        %v1034 = vpack.c.b16 %v932, %v931
        %v1035 = vpack.c.b16 %v934, %v933
        %v1036 = vpack.c.b16 %v936, %v935
        %v1037 = vpack.c.b16 %v938, %v937
        %v1038 = vpack.c.b16 %v940, %v939
        %v1039 = vpack.c.b16 %v942, %v941
        %v1040 = vpack.c.b16 %v944, %v943
        %v1041 = vpack.c.b16 %v946, %v945
        %v1042 = vpack.c.b16 %v948, %v947
        %v1043 = vpack.c.b16 %v950, %v949
        %v1044 = vpack.c.b16 %v952, %v951
        %v1045 = vpack.c.b16 %v954, %v953
        %v1046 = vpack.c.b16 %v956, %v955
        %v1047 = vpack.c.b16 %v958, %v957
        %v1048 = vpack.c.b16 %v960, %v959
        %v1049 = vpack.c.b16 %v962, %v961
        %v1050 = vpack.c.b16 %v964, %v963
        %v1051 = vpack.c.b16 %v966, %v965
        %v1052 = vpack.c.b16 %v968, %v967
        %v1053 = vpack.c.b16 %v970, %v969
        %v1054 = vpack.c.b16 %v972, %v971
        %v1055 = vpack.c.b16 %v974, %v973
        %v1056 = vpack.c.b16 %v976, %v975
        %v1057 = vpack.c.b16 %v978, %v977
        %v1058 = vpack.c.b16 %v980, %v979
        %v1059 = vpack.c.b16 %v982, %v981
        %v1060 = vpack.c.b16 %v984, %v983
        %v1061 = vpack.c.b16 %v986, %v985
        %v1062 = vpack.c.b16 %v988, %v987
        %v1063 = vpack.c.b16 %v990, %v989
        %v1064 = vpack.c.b16 %v992, %v991
        %1137 = vmatpush.bf16.msra.mxu0 %v1000
        %1138 = vmatpush.bf16.msra.mxu0 %v999
        %1139 = vmatpush.bf16.msra.mxu0 %v998
        %1140 = vmatpush.bf16.msra.mxu0 %v997
        %1141 = vmatpush.bf16.msra.mxu0 %v996
        %1142 = vmatpush.bf16.msra.mxu0 %v995
        %1143 = vmatpush.bf16.msra.mxu0 %v994
        %1144 = vmatpush.bf16.msra.mxu0 %v993
        %1145 = vmatmul.bf16.gmra.mxu0 %v483
        %v1146 = vpop.f32.mrf.mxu0
        %v1147 = vadd.f32 %v703, %v1146
        %v1148 = vpop.f32.mrf.mxu0
        %v1149 = vadd.f32 %v703, %v1148
        %1150 = vmatmul.bf16.gmra.mxu0 %v484
        %v1151 = vpop.f32.mrf.mxu0
        %v1152 = vadd.f32 %v703, %v1151
        %v1153 = vpop.f32.mrf.mxu0
        %v1154 = vadd.f32 %v703, %v1153
        %1155 = vmatmul.bf16.gmra.mxu0 %v485
        %v1156 = vpop.f32.mrf.mxu0
        %v1157 = vadd.f32 %v703, %v1156
        %v1158 = vpop.f32.mrf.mxu0
        %v1159 = vadd.f32 %v703, %v1158
        %1160 = vmatmul.bf16.gmra.mxu0 %v486
        %v1161 = vpop.f32.mrf.mxu0
        %v1162 = vadd.f32 %v703, %v1161
        %v1163 = vpop.f32.mrf.mxu0
        %v1164 = vadd.f32 %v703, %v1163
        %1165 = vmatmul.bf16.gmra.mxu0 %v487
        %v1166 = vpop.f32.mrf.mxu0
        %v1167 = vadd.f32 %v703, %v1166
        %v1168 = vpop.f32.mrf.mxu0
        %v1169 = vadd.f32 %v703, %v1168
        %1170 = vmatmul.bf16.gmra.mxu0 %v488
        %v1171 = vpop.f32.mrf.mxu0
        %v1172 = vadd.f32 %v703, %v1171
        %v1173 = vpop.f32.mrf.mxu0
        %v1174 = vadd.f32 %v703, %v1173
        %1175 = vmatmul.bf16.gmra.mxu0 %v489
        %v1176 = vpop.f32.mrf.mxu0
        %v1177 = vadd.f32 %v703, %v1176
        %v1178 = vpop.f32.mrf.mxu0
        %v1179 = vadd.f32 %v703, %v1178
        %1180 = vmatmul.bf16.gmra.mxu0 %v490
        %v1181 = vpop.f32.mrf.mxu0
        %v1182 = vadd.f32 %v703, %v1181
        %v1183 = vpop.f32.mrf.mxu0
        %v1184 = vadd.f32 %v703, %v1183
        %1185 = vmatmul.bf16.gmra.mxu0 %v491
        %v1186 = vpop.f32.mrf.mxu0
        %v1187 = vadd.f32 %v703, %v1186
        %v1188 = vpop.f32.mrf.mxu0
        %v1189 = vadd.f32 %v703, %v1188
        %1190 = vmatmul.bf16.gmra.mxu0 %v492
        %v1191 = vpop.f32.mrf.mxu0
        %v1192 = vadd.f32 %v703, %v1191
        %v1193 = vpop.f32.mrf.mxu0
        %v1194 = vadd.f32 %v703, %v1193
        %1195 = vdwg.mxu0
        %1196 = vmatpush.bf16.msra.mxu0 %v1008
        %1197 = vmatpush.bf16.msra.mxu0 %v1007
        %1198 = vmatpush.bf16.msra.mxu0 %v1006
        %1199 = vmatpush.bf16.msra.mxu0 %v1005
        %1200 = vmatpush.bf16.msra.mxu0 %v1004
        %1201 = vmatpush.bf16.msra.mxu0 %v1003
        %1202 = vmatpush.bf16.msra.mxu0 %v1002
        %1203 = vmatpush.bf16.msra.mxu0 %v1001
        %1204 = vmatmul.bf16.gmra.mxu0 %v372
        %v1205 = vpop.f32.mrf.mxu0
        %v1206 = vadd.f32 %v1147, %v1205
        %v1207 = vpop.f32.mrf.mxu0
        %v1208 = vadd.f32 %v1149, %v1207
        %1209 = vmatmul.bf16.gmra.mxu0 %v373
        %v1210 = vpop.f32.mrf.mxu0
        %v1211 = vadd.f32 %v1152, %v1210
        %v1212 = vpop.f32.mrf.mxu0
        %v1213 = vadd.f32 %v1154, %v1212
        %1214 = vmatmul.bf16.gmra.mxu0 %v374
        %v1215 = vpop.f32.mrf.mxu0
        %v1216 = vadd.f32 %v1157, %v1215
        %v1217 = vpop.f32.mrf.mxu0
        %v1218 = vadd.f32 %v1159, %v1217
        %1219 = vmatmul.bf16.gmra.mxu0 %v375
        %v1220 = vpop.f32.mrf.mxu0
        %v1221 = vadd.f32 %v1162, %v1220
        %v1222 = vpop.f32.mrf.mxu0
        %v1223 = vadd.f32 %v1164, %v1222
        %1224 = vmatmul.bf16.gmra.mxu0 %v376
        %v1225 = vpop.f32.mrf.mxu0
        %v1226 = vadd.f32 %v1167, %v1225
        %v1227 = vpop.f32.mrf.mxu0
        %v1228 = vadd.f32 %v1169, %v1227
        %1229 = vmatmul.bf16.gmra.mxu0 %v377
        %v1230 = vpop.f32.mrf.mxu0
        %v1231 = vadd.f32 %v1172, %v1230
        %v1232 = vpop.f32.mrf.mxu0
        %v1233 = vadd.f32 %v1174, %v1232
        %1234 = vmatmul.bf16.gmra.mxu0 %v378
        %v1235 = vpop.f32.mrf.mxu0
        %v1236 = vadd.f32 %v1177, %v1235
        %v1237 = vpop.f32.mrf.mxu0
        %v1238 = vadd.f32 %v1179, %v1237
        %1239 = vmatmul.bf16.gmra.mxu0 %v379
        %v1240 = vpop.f32.mrf.mxu0
        %v1241 = vadd.f32 %v1182, %v1240
        %v1242 = vpop.f32.mrf.mxu0
        %v1243 = vadd.f32 %v1184, %v1242
        %1244 = vmatmul.bf16.gmra.mxu0 %v380
        %v1245 = vpop.f32.mrf.mxu0
        %v1246 = vadd.f32 %v1187, %v1245
        %v1247 = vpop.f32.mrf.mxu0
        %v1248 = vadd.f32 %v1189, %v1247
        %1249 = vmatmul.bf16.gmra.mxu0 %v381
        %v1250 = vpop.f32.mrf.mxu0
        %v1251 = vadd.f32 %v1192, %v1250
        %v1252 = vpop.f32.mrf.mxu0
        %v1253 = vadd.f32 %v1194, %v1252
        %1254 = vdwg.mxu0
        %1255 = vmatpush.bf16.msra.mxu0 %v1016
        %1256 = vmatpush.bf16.msra.mxu0 %v1015
        %1257 = vmatpush.bf16.msra.mxu0 %v1014
        %1258 = vmatpush.bf16.msra.mxu0 %v1013
        %1259 = vmatpush.bf16.msra.mxu0 %v1012
        %1260 = vmatpush.bf16.msra.mxu0 %v1011
        %1261 = vmatpush.bf16.msra.mxu0 %v1010
        %1262 = vmatpush.bf16.msra.mxu0 %v1009
        %1263 = vmatmul.bf16.gmra.mxu0 %v534
        %v1264 = vpop.f32.mrf.mxu0
        %v1265 = vadd.f32 %v1206, %v1264
        %v1266 = vpop.f32.mrf.mxu0
        %v1267 = vadd.f32 %v1208, %v1266
        %1268 = vmatmul.bf16.gmra.mxu0 %v535
        %v1269 = vpop.f32.mrf.mxu0
        %v1270 = vadd.f32 %v1211, %v1269
        %v1271 = vpop.f32.mrf.mxu0
        %v1272 = vadd.f32 %v1213, %v1271
        %1273 = vmatmul.bf16.gmra.mxu0 %v536
        %v1274 = vpop.f32.mrf.mxu0
        %v1275 = vadd.f32 %v1216, %v1274
        %v1276 = vpop.f32.mrf.mxu0
        %v1277 = vadd.f32 %v1218, %v1276
        %1278 = vmatmul.bf16.gmra.mxu0 %v537
        %v1279 = vpop.f32.mrf.mxu0
        %v1280 = vadd.f32 %v1221, %v1279
        %v1281 = vpop.f32.mrf.mxu0
        %v1282 = vadd.f32 %v1223, %v1281
        %1283 = vmatmul.bf16.gmra.mxu0 %v538
        %v1284 = vpop.f32.mrf.mxu0
        %v1285 = vadd.f32 %v1226, %v1284
        %v1286 = vpop.f32.mrf.mxu0
        %v1287 = vadd.f32 %v1228, %v1286
        %1288 = vmatmul.bf16.gmra.mxu0 %v539
        %v1289 = vpop.f32.mrf.mxu0
        %v1290 = vadd.f32 %v1231, %v1289
        %v1291 = vpop.f32.mrf.mxu0
        %v1292 = vadd.f32 %v1233, %v1291
        %1293 = vmatmul.bf16.gmra.mxu0 %v540
        %v1294 = vpop.f32.mrf.mxu0
        %v1295 = vadd.f32 %v1236, %v1294
        %v1296 = vpop.f32.mrf.mxu0
        %v1297 = vadd.f32 %v1238, %v1296
        %1298 = vmatmul.bf16.gmra.mxu0 %v541
        %v1299 = vpop.f32.mrf.mxu0
        %v1300 = vadd.f32 %v1241, %v1299
        %v1301 = vpop.f32.mrf.mxu0
        %v1302 = vadd.f32 %v1243, %v1301
        %1303 = vmatmul.bf16.gmra.mxu0 %v542
        %v1304 = vpop.f32.mrf.mxu0
        %v1305 = vadd.f32 %v1246, %v1304
        %v1306 = vpop.f32.mrf.mxu0
        %v1307 = vadd.f32 %v1248, %v1306
        %1308 = vmatmul.bf16.gmra.mxu0 %v543
        %v1309 = vpop.f32.mrf.mxu0
        %v1310 = vadd.f32 %v1251, %v1309
        %v1311 = vpop.f32.mrf.mxu0
        %v1312 = vadd.f32 %v1253, %v1311
        %1313 = vdwg.mxu0
        %1314 = vmatpush.bf16.msra.mxu0 %v1024
        %1315 = vmatpush.bf16.msra.mxu0 %v1023
        %1316 = vmatpush.bf16.msra.mxu0 %v1022
        %1317 = vmatpush.bf16.msra.mxu0 %v1021
        %1318 = vmatpush.bf16.msra.mxu0 %v1020
        %1319 = vmatpush.bf16.msra.mxu0 %v1019
        %1320 = vmatpush.bf16.msra.mxu0 %v1018
        %1321 = vmatpush.bf16.msra.mxu0 %v1017
        %1322 = vmatmul.bf16.gmra.mxu0 %v484
        %v1323 = vpop.f32.mrf.mxu0
        %v1324 = vadd.f32 %v1265, %v1323
        %v1325 = vpop.f32.mrf.mxu0
        %v1326 = vadd.f32 %v1267, %v1325
        %1327 = vmatmul.bf16.gmra.mxu0 %v485
        %v1328 = vpop.f32.mrf.mxu0
        %v1329 = vadd.f32 %v1270, %v1328
        %v1330 = vpop.f32.mrf.mxu0
        %v1331 = vadd.f32 %v1272, %v1330
        %1332 = vmatmul.bf16.gmra.mxu0 %v486
        %v1333 = vpop.f32.mrf.mxu0
        %v1334 = vadd.f32 %v1275, %v1333
        %v1335 = vpop.f32.mrf.mxu0
        %v1336 = vadd.f32 %v1277, %v1335
        %1337 = vmatmul.bf16.gmra.mxu0 %v487
        %v1338 = vpop.f32.mrf.mxu0
        %v1339 = vadd.f32 %v1280, %v1338
        %v1340 = vpop.f32.mrf.mxu0
        %v1341 = vadd.f32 %v1282, %v1340
        %1342 = vmatmul.bf16.gmra.mxu0 %v488
        %v1343 = vpop.f32.mrf.mxu0
        %v1344 = vadd.f32 %v1285, %v1343
        %v1345 = vpop.f32.mrf.mxu0
        %v1346 = vadd.f32 %v1287, %v1345
        %1347 = vmatmul.bf16.gmra.mxu0 %v489
        %v1348 = vpop.f32.mrf.mxu0
        %v1349 = vadd.f32 %v1290, %v1348
        %v1350 = vpop.f32.mrf.mxu0
        %v1351 = vadd.f32 %v1292, %v1350
        %1352 = vmatmul.bf16.gmra.mxu0 %v490
        %v1353 = vpop.f32.mrf.mxu0
        %v1354 = vadd.f32 %v1295, %v1353
        %v1355 = vpop.f32.mrf.mxu0
        %v1356 = vadd.f32 %v1297, %v1355
        %1357 = vmatmul.bf16.gmra.mxu0 %v491
        %v1358 = vpop.f32.mrf.mxu0
        %v1359 = vadd.f32 %v1300, %v1358
        %v1360 = vpop.f32.mrf.mxu0
        %v1361 = vadd.f32 %v1302, %v1360
        %1362 = vmatmul.bf16.gmra.mxu0 %v492
        %v1363 = vpop.f32.mrf.mxu0
        %v1364 = vadd.f32 %v1305, %v1363
        %v1365 = vpop.f32.mrf.mxu0
        %v1366 = vadd.f32 %v1307, %v1365
        %1367 = vmatmul.bf16.gmra.mxu0 %v493
        %v1368 = vpop.f32.mrf.mxu0
        %v1369 = vadd.f32 %v1310, %v1368
        %v1370 = vpop.f32.mrf.mxu0
        %v1371 = vadd.f32 %v1312, %v1370
        %1372 = vdwg.mxu0
        %1373 = vmatpush.bf16.msra.mxu0 %v1032
        %1374 = vmatpush.bf16.msra.mxu0 %v1031
        %1375 = vmatpush.bf16.msra.mxu0 %v1030
        %1376 = vmatpush.bf16.msra.mxu0 %v1029
        %1377 = vmatpush.bf16.msra.mxu0 %v1028
        %1378 = vmatpush.bf16.msra.mxu0 %v1027
        %1379 = vmatpush.bf16.msra.mxu0 %v1026
        %1380 = vmatpush.bf16.msra.mxu0 %v1025
        %1381 = vmatmul.bf16.gmra.mxu0 %v373
        %v1382 = vpop.f32.mrf.mxu0
        %v1383 = vadd.f32 %v1324, %v1382
        %v1384 = vpop.f32.mrf.mxu0
        %v1385 = vadd.f32 %v1326, %v1384
        %1386 = vmatmul.bf16.gmra.mxu0 %v374
        %v1387 = vpop.f32.mrf.mxu0
        %v1388 = vadd.f32 %v1329, %v1387
        %v1389 = vpop.f32.mrf.mxu0
        %v1390 = vadd.f32 %v1331, %v1389
        %1391 = vmatmul.bf16.gmra.mxu0 %v375
        %v1392 = vpop.f32.mrf.mxu0
        %v1393 = vadd.f32 %v1334, %v1392
        %v1394 = vpop.f32.mrf.mxu0
        %v1395 = vadd.f32 %v1336, %v1394
        %1396 = vmatmul.bf16.gmra.mxu0 %v376
        %v1397 = vpop.f32.mrf.mxu0
        %v1398 = vadd.f32 %v1339, %v1397
        %v1399 = vpop.f32.mrf.mxu0
        %v1400 = vadd.f32 %v1341, %v1399
        %1401 = vmatmul.bf16.gmra.mxu0 %v377
        %v1402 = vpop.f32.mrf.mxu0
        %v1403 = vadd.f32 %v1344, %v1402
        %v1404 = vpop.f32.mrf.mxu0
        %v1405 = vadd.f32 %v1346, %v1404
        %1406 = vmatmul.bf16.gmra.mxu0 %v378
        %v1407 = vpop.f32.mrf.mxu0
        %v1408 = vadd.f32 %v1349, %v1407
        %v1409 = vpop.f32.mrf.mxu0
        %v1410 = vadd.f32 %v1351, %v1409
        %1411 = vmatmul.bf16.gmra.mxu0 %v379
        %v1412 = vpop.f32.mrf.mxu0
        %v1413 = vadd.f32 %v1354, %v1412
        %v1414 = vpop.f32.mrf.mxu0
        %v1415 = vadd.f32 %v1356, %v1414
        %1416 = vmatmul.bf16.gmra.mxu0 %v380
        %v1417 = vpop.f32.mrf.mxu0
        %v1418 = vadd.f32 %v1359, %v1417
        %v1419 = vpop.f32.mrf.mxu0
        %v1420 = vadd.f32 %v1361, %v1419
        %1421 = vmatmul.bf16.gmra.mxu0 %v381
        %v1422 = vpop.f32.mrf.mxu0
        %v1423 = vadd.f32 %v1364, %v1422
        %v1424 = vpop.f32.mrf.mxu0
        %v1425 = vadd.f32 %v1366, %v1424
        %1426 = vmatmul.bf16.gmra.mxu0 %v382
        %v1427 = vpop.f32.mrf.mxu0
        %v1428 = vadd.f32 %v1369, %v1427
        %v1429 = vpop.f32.mrf.mxu0
        %v1430 = vadd.f32 %v1371, %v1429
        %1431 = vdwg.mxu0
        %1432 = vmatpush.bf16.msra.mxu0 %v1040
        %1433 = vmatpush.bf16.msra.mxu0 %v1039
        %1434 = vmatpush.bf16.msra.mxu0 %v1038
        %1435 = vmatpush.bf16.msra.mxu0 %v1037
        %1436 = vmatpush.bf16.msra.mxu0 %v1036
        %1437 = vmatpush.bf16.msra.mxu0 %v1035
        %1438 = vmatpush.bf16.msra.mxu0 %v1034
        %1439 = vmatpush.bf16.msra.mxu0 %v1033
        %1440 = vmatmul.bf16.gmra.mxu0 %v535
        %v1441 = vpop.f32.mrf.mxu0
        %v1442 = vadd.f32 %v1383, %v1441
        %v1443 = vpop.f32.mrf.mxu0
        %v1444 = vadd.f32 %v1385, %v1443
        %1445 = vmatmul.bf16.gmra.mxu0 %v536
        %v1446 = vpop.f32.mrf.mxu0
        %v1447 = vadd.f32 %v1388, %v1446
        %v1448 = vpop.f32.mrf.mxu0
        %v1449 = vadd.f32 %v1390, %v1448
        %1450 = vmatmul.bf16.gmra.mxu0 %v537
        %v1451 = vpop.f32.mrf.mxu0
        %v1452 = vadd.f32 %v1393, %v1451
        %v1453 = vpop.f32.mrf.mxu0
        %v1454 = vadd.f32 %v1395, %v1453
        %1455 = vmatmul.bf16.gmra.mxu0 %v538
        %v1456 = vpop.f32.mrf.mxu0
        %v1457 = vadd.f32 %v1398, %v1456
        %v1458 = vpop.f32.mrf.mxu0
        %v1459 = vadd.f32 %v1400, %v1458
        %1460 = vmatmul.bf16.gmra.mxu0 %v539
        %v1461 = vpop.f32.mrf.mxu0
        %v1462 = vadd.f32 %v1403, %v1461
        %v1463 = vpop.f32.mrf.mxu0
        %v1464 = vadd.f32 %v1405, %v1463
        %1465 = vmatmul.bf16.gmra.mxu0 %v540
        %v1466 = vpop.f32.mrf.mxu0
        %v1467 = vadd.f32 %v1408, %v1466
        %v1468 = vpop.f32.mrf.mxu0
        %v1469 = vadd.f32 %v1410, %v1468
        %1470 = vmatmul.bf16.gmra.mxu0 %v541
        %v1471 = vpop.f32.mrf.mxu0
        %v1472 = vadd.f32 %v1413, %v1471
        %v1473 = vpop.f32.mrf.mxu0
        %v1474 = vadd.f32 %v1415, %v1473
        %1475 = vmatmul.bf16.gmra.mxu0 %v542
        %v1476 = vpop.f32.mrf.mxu0
        %v1477 = vadd.f32 %v1418, %v1476
        %v1478 = vpop.f32.mrf.mxu0
        %v1479 = vadd.f32 %v1420, %v1478
        %1480 = vmatmul.bf16.gmra.mxu0 %v543
        %v1481 = vpop.f32.mrf.mxu0
        %v1482 = vadd.f32 %v1423, %v1481
        %v1483 = vpop.f32.mrf.mxu0
        %v1484 = vadd.f32 %v1425, %v1483
        %1485 = vmatmul.bf16.gmra.mxu0 %v544
        %v1486 = vpop.f32.mrf.mxu0
        %v1487 = vadd.f32 %v1428, %v1486
        %v1488 = vpop.f32.mrf.mxu0
        %v1489 = vadd.f32 %v1430, %v1488
        %1490 = vdwg.mxu0
        %1491 = vmatpush.bf16.msra.mxu0 %v1048
        %1492 = vmatpush.bf16.msra.mxu0 %v1047
        %1493 = vmatpush.bf16.msra.mxu0 %v1046
        %1494 = vmatpush.bf16.msra.mxu0 %v1045
        %1495 = vmatpush.bf16.msra.mxu0 %v1044
        %1496 = vmatpush.bf16.msra.mxu0 %v1043
        %1497 = vmatpush.bf16.msra.mxu0 %v1042
        %1498 = vmatpush.bf16.msra.mxu0 %v1041
        %1499 = vmatmul.bf16.gmra.mxu0 %v485
        %v1500 = vpop.f32.mrf.mxu0
        %v1501 = vadd.f32 %v1442, %v1500
        %v1502 = vpop.f32.mrf.mxu0
        %v1503 = vadd.f32 %v1444, %v1502
        %1504 = vmatmul.bf16.gmra.mxu0 %v486
        %v1505 = vpop.f32.mrf.mxu0
        %v1506 = vadd.f32 %v1447, %v1505
        %v1507 = vpop.f32.mrf.mxu0
        %v1508 = vadd.f32 %v1449, %v1507
        %1509 = vmatmul.bf16.gmra.mxu0 %v487
        %v1510 = vpop.f32.mrf.mxu0
        %v1511 = vadd.f32 %v1452, %v1510
        %v1512 = vpop.f32.mrf.mxu0
        %v1513 = vadd.f32 %v1454, %v1512
        %1514 = vmatmul.bf16.gmra.mxu0 %v488
        %v1515 = vpop.f32.mrf.mxu0
        %v1516 = vadd.f32 %v1457, %v1515
        %v1517 = vpop.f32.mrf.mxu0
        %v1518 = vadd.f32 %v1459, %v1517
        %1519 = vmatmul.bf16.gmra.mxu0 %v489
        %v1520 = vpop.f32.mrf.mxu0
        %v1521 = vadd.f32 %v1462, %v1520
        %v1522 = vpop.f32.mrf.mxu0
        %v1523 = vadd.f32 %v1464, %v1522
        %1524 = vmatmul.bf16.gmra.mxu0 %v490
        %v1525 = vpop.f32.mrf.mxu0
        %v1526 = vadd.f32 %v1467, %v1525
        %v1527 = vpop.f32.mrf.mxu0
        %v1528 = vadd.f32 %v1469, %v1527
        %1529 = vmatmul.bf16.gmra.mxu0 %v491
        %v1530 = vpop.f32.mrf.mxu0
        %v1531 = vadd.f32 %v1472, %v1530
        %v1532 = vpop.f32.mrf.mxu0
        %v1533 = vadd.f32 %v1474, %v1532
        %1534 = vmatmul.bf16.gmra.mxu0 %v492
        %v1535 = vpop.f32.mrf.mxu0
        %v1536 = vadd.f32 %v1477, %v1535
        %v1537 = vpop.f32.mrf.mxu0
        %v1538 = vadd.f32 %v1479, %v1537
        %1539 = vmatmul.bf16.gmra.mxu0 %v493
        %v1540 = vpop.f32.mrf.mxu0
        %v1541 = vadd.f32 %v1482, %v1540
        %v1542 = vpop.f32.mrf.mxu0
        %v1543 = vadd.f32 %v1484, %v1542
        %1544 = vmatmul.bf16.gmra.mxu0 %v494
        %v1545 = vpop.f32.mrf.mxu0
        %v1546 = vadd.f32 %v1487, %v1545
        %v1547 = vpop.f32.mrf.mxu0
        %v1548 = vadd.f32 %v1489, %v1547
        %1549 = vdwg.mxu0
        %1550 = vmatpush.bf16.msra.mxu0 %v1056
        %1551 = vmatpush.bf16.msra.mxu0 %v1055
        %1552 = vmatpush.bf16.msra.mxu0 %v1054
        %1553 = vmatpush.bf16.msra.mxu0 %v1053
        %1554 = vmatpush.bf16.msra.mxu0 %v1052
        %1555 = vmatpush.bf16.msra.mxu0 %v1051
        %1556 = vmatpush.bf16.msra.mxu0 %v1050
        %1557 = vmatpush.bf16.msra.mxu0 %v1049
        %1558 = vmatmul.bf16.gmra.mxu0 %v374
        %v1559 = vpop.f32.mrf.mxu0
        %v1560 = vadd.f32 %v1501, %v1559
        %v1561 = vpop.f32.mrf.mxu0
        %v1562 = vadd.f32 %v1503, %v1561
        %1563 = vmatmul.bf16.gmra.mxu0 %v375
        %v1564 = vpop.f32.mrf.mxu0
        %v1565 = vadd.f32 %v1506, %v1564
        %v1566 = vpop.f32.mrf.mxu0
        %v1567 = vadd.f32 %v1508, %v1566
        %1568 = vmatmul.bf16.gmra.mxu0 %v376
        %v1569 = vpop.f32.mrf.mxu0
        %v1570 = vadd.f32 %v1511, %v1569
        %v1571 = vpop.f32.mrf.mxu0
        %v1572 = vadd.f32 %v1513, %v1571
        %1573 = vmatmul.bf16.gmra.mxu0 %v377
        %v1574 = vpop.f32.mrf.mxu0
        %v1575 = vadd.f32 %v1516, %v1574
        %v1576 = vpop.f32.mrf.mxu0
        %v1577 = vadd.f32 %v1518, %v1576
        %1578 = vmatmul.bf16.gmra.mxu0 %v378
        %v1579 = vpop.f32.mrf.mxu0
        %v1580 = vadd.f32 %v1521, %v1579
        %v1581 = vpop.f32.mrf.mxu0
        %v1582 = vadd.f32 %v1523, %v1581
        %1583 = vmatmul.bf16.gmra.mxu0 %v379
        %v1584 = vpop.f32.mrf.mxu0
        %v1585 = vadd.f32 %v1526, %v1584
        %v1586 = vpop.f32.mrf.mxu0
        %v1587 = vadd.f32 %v1528, %v1586
        %1588 = vmatmul.bf16.gmra.mxu0 %v380
        %v1589 = vpop.f32.mrf.mxu0
        %v1590 = vadd.f32 %v1531, %v1589
        %v1591 = vpop.f32.mrf.mxu0
        %v1592 = vadd.f32 %v1533, %v1591
        %1593 = vmatmul.bf16.gmra.mxu0 %v381
        %v1594 = vpop.f32.mrf.mxu0
        %v1595 = vadd.f32 %v1536, %v1594
        %v1596 = vpop.f32.mrf.mxu0
        %v1597 = vadd.f32 %v1538, %v1596
        %1598 = vmatmul.bf16.gmra.mxu0 %v382
        %v1599 = vpop.f32.mrf.mxu0
        %v1600 = vadd.f32 %v1541, %v1599
        %v1601 = vpop.f32.mrf.mxu0
        %v1602 = vadd.f32 %v1543, %v1601
        %1603 = vmatmul.bf16.gmra.mxu0 %v383
        %v1604 = vpop.f32.mrf.mxu0
        %v1605 = vadd.f32 %v1546, %v1604
        %v1606 = vpop.f32.mrf.mxu0
        %v1607 = vadd.f32 %v1548, %v1606
        %1608 = vdwg.mxu0
        %1609 = vmatpush.bf16.msra.mxu0 %v1064
        %1610 = vmatpush.bf16.msra.mxu0 %v1063
        %1611 = vmatpush.bf16.msra.mxu0 %v1062
        %1612 = vmatpush.bf16.msra.mxu0 %v1061
        %1613 = vmatpush.bf16.msra.mxu0 %v1060
        %1614 = vmatpush.bf16.msra.mxu0 %v1059
        %1615 = vmatpush.bf16.msra.mxu0 %v1058
        %1616 = vmatpush.bf16.msra.mxu0 %v1057
        %1617 = vmatmul.bf16.gmra.mxu0 %v536
        %v1618 = vpop.f32.mrf.mxu0
        %v1619 = vadd.f32 %v1560, %v1618
        %v1620 = vpop.f32.mrf.mxu0
        %v1621 = vadd.f32 %v1562, %v1620
        %1622 = vmatmul.bf16.gmra.mxu0 %v537
        %v1623 = vpop.f32.mrf.mxu0
        %v1624 = vadd.f32 %v1565, %v1623
        %v1625 = vpop.f32.mrf.mxu0
        %v1626 = vadd.f32 %v1567, %v1625
        %1627 = vmatmul.bf16.gmra.mxu0 %v538
        %v1628 = vpop.f32.mrf.mxu0
        %v1629 = vadd.f32 %v1570, %v1628
        %v1630 = vpop.f32.mrf.mxu0
        %v1631 = vadd.f32 %v1572, %v1630
        %1632 = vmatmul.bf16.gmra.mxu0 %v539
        %v1633 = vpop.f32.mrf.mxu0
        %v1634 = vadd.f32 %v1575, %v1633
        %v1635 = vpop.f32.mrf.mxu0
        %v1636 = vadd.f32 %v1577, %v1635
        %1637 = vmatmul.bf16.gmra.mxu0 %v540
        %v1638 = vpop.f32.mrf.mxu0
        %v1639 = vadd.f32 %v1580, %v1638
        %v1640 = vpop.f32.mrf.mxu0
        %v1641 = vadd.f32 %v1582, %v1640
        %1642 = vmatmul.bf16.gmra.mxu0 %v541
        %v1643 = vpop.f32.mrf.mxu0
        %v1644 = vadd.f32 %v1585, %v1643
        %v1645 = vpop.f32.mrf.mxu0
        %v1646 = vadd.f32 %v1587, %v1645
        %1647 = vmatmul.bf16.gmra.mxu0 %v542
        %v1648 = vpop.f32.mrf.mxu0
        %v1649 = vadd.f32 %v1590, %v1648
        %v1650 = vpop.f32.mrf.mxu0
        %v1651 = vadd.f32 %v1592, %v1650
        %1652 = vmatmul.bf16.gmra.mxu0 %v543
        %v1653 = vpop.f32.mrf.mxu0
        %v1654 = vadd.f32 %v1595, %v1653
        %v1655 = vpop.f32.mrf.mxu0
        %v1656 = vadd.f32 %v1597, %v1655
        %1657 = vmatmul.bf16.gmra.mxu0 %v544
        %v1658 = vpop.f32.mrf.mxu0
        %v1659 = vadd.f32 %v1600, %v1658
        %v1660 = vpop.f32.mrf.mxu0
        %v1661 = vadd.f32 %v1602, %v1660
        %1662 = vmatmul.bf16.gmra.mxu0 %v545
        %v1663 = vpop.f32.mrf.mxu0
        %v1664 = vadd.f32 %v1605, %v1663
        %v1665 = vpop.f32.mrf.mxu0
        %v1666 = vadd.f32 %v1607, %v1665
        %1667 = vdwg.mxu0
        %v1668 = vmax.f32 %v1619, 0.0
        %v1669 = vmax.f32 %v1621, 0.0
        %v1670 = vmax.f32 %v1624, 0.0
        %v1671 = vmax.f32 %v1626, 0.0
        %v1672 = vmax.f32 %v1629, 0.0
        %v1673 = vmax.f32 %v1631, 0.0
        %v1674 = vmax.f32 %v1634, 0.0
        %v1675 = vmax.f32 %v1636, 0.0
        %v1676 = vmax.f32 %v1639, 0.0
        %v1677 = vmax.f32 %v1641, 0.0
        %v1678 = vmax.f32 %v1644, 0.0
        %v1679 = vmax.f32 %v1646, 0.0
        %v1680 = vmax.f32 %v1649, 0.0
        %v1681 = vmax.f32 %v1651, 0.0
        %v1682 = vmax.f32 %v1654, 0.0
        %v1683 = vmax.f32 %v1656, 0.0
        %v1684 = vmax.f32 %v1659, 0.0
        %v1685 = vmax.f32 %v1661, 0.0
        %v1686 = vmax.f32 %v1664, 0.0
        %v1687 = vmax.f32 %v1666, 0.0
        %v1688 = vpack.c.bf16 %v1668, %v1668
        %v1689 = vpack.c.bf16 %v1669, %v1669
        %v1690 = vpack.c.bf16 %v1670, %v1670
        %v1691 = vpack.c.bf16 %v1671, %v1671
        %v1692 = vpack.c.bf16 %v1672, %v1672
        %v1693 = vpack.c.bf16 %v1673, %v1673
        %v1694 = vpack.c.bf16 %v1674, %v1674
        %v1695 = vpack.c.bf16 %v1675, %v1675
        %v1696 = vpack.c.bf16 %v1676, %v1676
        %v1697 = vpack.c.bf16 %v1677, %v1677
        %v1698 = vpack.c.bf16 %v1678, %v1678
        %v1699 = vpack.c.bf16 %v1679, %v1679
        %v1700 = vpack.c.bf16 %v1680, %v1680
        %v1701 = vpack.c.bf16 %v1681, %v1681
        %v1702 = vpack.c.bf16 %v1682, %v1682
        %v1703 = vpack.c.bf16 %v1683, %v1683
        %v1704 = vpack.c.bf16 %v1684, %v1684
        %v1705 = vpack.c.bf16 %v1685, %v1685
        %v1706 = vpack.c.bf16 %v1686, %v1686
        %v1707 = vpack.c.bf16 %v1687, %v1687
        %1708 = vst [vmem:[#allocation2] sm:$0xf] %v1688
        %1709 = vst [vmem:[#allocation2 + $0x4] sm:$0xf] %v1689
        %1710 = vst [vmem:[#allocation2 + $0x8] sm:$0xf] %v1690
        %1711 = vst [vmem:[#allocation2 + $0xc] sm:$0xf] %v1691
        %1712 = vst [vmem:[#allocation2 + $0x10] sm:$0xf] %v1692
        %1713 = vst [vmem:[#allocation2 + $0x14] sm:$0xf] %v1693
        %1714 = vst [vmem:[#allocation2 + $0x18] sm:$0xf] %v1694
        %1715 = vst [vmem:[#allocation2 + $0x1c] sm:$0xf] %v1695
        %1716 = vst [vmem:[#allocation2 + $0x20] sm:$0xf] %v1696
        %1717 = vst [vmem:[#allocation2 + $0x24] sm:$0xf] %v1697
        %1718 = vst [vmem:[#allocation2 + $0x28] sm:$0xf] %v1698
        %1719 = vst [vmem:[#allocation2 + $0x2c] sm:$0xf] %v1699
        %1720 = vst [vmem:[#allocation2 + $0x30] sm:$0xf] %v1700
        %1721 = vst [vmem:[#allocation2 + $0x34] sm:$0xf] %v1701
        %1722 = vst [vmem:[#allocation2 + $0x38] sm:$0xf] %v1702
        %1723 = vst [vmem:[#allocation2 + $0x3c] sm:$0xf] %v1703
        %1724 = vst [vmem:[#allocation2 + $0x40] sm:$0xf] %v1704
        %1725 = vst [vmem:[#allocation2 + $0x44] sm:$0xf] %v1705
        %1726 = vst [vmem:[#allocation2 + $0x48] sm:$0xf] %v1706
        %1727 = vst [vmem:[#allocation2 + $0x4c] sm:$0xf] %v1707
        %p1728 = scmp.eq.s32.totalorder %s28, 0
        // Predicated region
        $region53: #{tpu_custom_call.1} parent=39 // pred_check
          %p1729 = pneg %p1728
        $region54: #{tpu_custom_call.1} parent=39 // pred_check_branch
          %1731 = sbr.rel (%p1729) target = $region56
        $region55: #{tpu_custom_call.1} parent=39 // pred_region
          %1732 = vst [vmem:[#allocation2] sm:$0xf] 0
          %1733 = vst [vmem:[#allocation2 + $0x4] sm:$0xf] 0
        $region56: #{tpu_custom_call.1} parent=39 // pred_fallthru
          _
        %p1734 = scmp.eq.s32.totalorder %s28, 1
        // Predicated region
        $region57: #{tpu_custom_call.1} parent=39 // pred_check
          %p1735 = pneg %p1734
        $region58: #{tpu_custom_call.1} parent=39 // pred_check_branch
          %1737 = sbr.rel (%p1735) target = $region60
        $region59: #{tpu_custom_call.1} parent=39 // pred_region
          %s1738 = scalar_lea.vmem [#allocation2], 72
          %1739 = vst [vmem:[%s1738] sm:$0xf] 0
          %1740 = vst [vmem:[%s1738 + $0x4] sm:$0xf] 0
        $region60: #{tpu_custom_call.1} parent=39 // pred_fallthru
          _
        %v1741 = vld [vmem:[#allocation2] sm:$0xf]
        %v1742 = vld [vmem:[#allocation2 + $0x4] sm:$0xf]
        %v1743 = vld [vmem:[#allocation2 + $0x8] sm:$0xf]
        %v1744 = vld [vmem:[#allocation2 + $0xc] sm:$0xf]
        %v1745 = vld [vmem:[#allocation2 + $0x10] sm:$0xf]
        %v1746 = vld [vmem:[#allocation2 + $0x14] sm:$0xf]
        %v1747 = vld [vmem:[#allocation2 + $0x18] sm:$0xf]
        %v1748 = vld [vmem:[#allocation2 + $0x1c] sm:$0xf]
        %v1749 = vld [vmem:[#allocation2 + $0x20] sm:$0xf]
        %v1750 = vld [vmem:[#allocation2 + $0x24] sm:$0xf]
        %v1751 = vld [vmem:[#allocation2 + $0x28] sm:$0xf]
        %v1752 = vld [vmem:[#allocation2 + $0x2c] sm:$0xf]
        %v1753 = vld [vmem:[#allocation2 + $0x30] sm:$0xf]
        %v1754 = vld [vmem:[#allocation2 + $0x34] sm:$0xf]
        %v1755 = vld [vmem:[#allocation2 + $0x38] sm:$0xf]
        %v1756 = vld [vmem:[#allocation2 + $0x3c] sm:$0xf]
        %v1757 = vld [vmem:[#allocation2 + $0x40] sm:$0xf]
        %v1758 = vld [vmem:[#allocation2 + $0x44] sm:$0xf]
        %v1759 = vld [vmem:[#allocation2 + $0x48] sm:$0xf]
        %v1760 = vld [vmem:[#allocation2 + $0x4c] sm:$0xf]
        %v1781 = vunpack.c.l.b16 %v1741
        %v1782 = vunpack.c.l.b16 %v1742
        %v1783 = vunpack.c.l.b16 %v1743
        %v1784 = vunpack.c.l.b16 %v1744
        %v1785 = vunpack.c.l.b16 %v1745
        %v1786 = vunpack.c.l.b16 %v1746
        %v1787 = vunpack.c.l.b16 %v1747
        %v1788 = vunpack.c.l.b16 %v1748
        %v1789 = vunpack.c.l.b16 %v1749
        %v1790 = vunpack.c.l.b16 %v1750
        %v1791 = vunpack.c.l.b16 %v1751
        %v1792 = vunpack.c.l.b16 %v1752
        %v1793 = vunpack.c.l.b16 %v1753
        %v1794 = vunpack.c.l.b16 %v1754
        %v1795 = vunpack.c.l.b16 %v1755
        %v1796 = vunpack.c.l.b16 %v1756
        %v1797 = vunpack.c.l.b16 %v1757
        %v1798 = vunpack.c.l.b16 %v1758
        %v1799 = vunpack.c.l.b16 %v1759
        %v1800 = vunpack.c.l.b16 %v1760
        %v1801 = vpack.c.b16 %v1782, %v1781
        %v1802 = vpack.c.b16 %v1784, %v1783
        %v1803 = vpack.c.b16 %v1786, %v1785
        %v1804 = vpack.c.b16 %v1788, %v1787
        %v1805 = vpack.c.b16 %v1790, %v1789
        %v1806 = vpack.c.b16 %v1792, %v1791
        %v1807 = vpack.c.b16 %v1794, %v1793
        %v1808 = vpack.c.b16 %v1796, %v1795
        %v1809 = vpack.c.b16 %v1798, %v1797
        %v1810 = vpack.c.b16 %v1800, %v1799
        %v1812 = vshrl.u32 %v1801, 16
        %v1814 = vrot.slane %v1812, 7
        %v1815 = vshll.u32 %v1801, 16
        %v1817 = vor.u32 %v1814, %v1815
        %v1819 = vshrl.u32 %v1802, 16
        %v1821 = vrot.slane %v1819, 7
        %v1822 = vshll.u32 %v1802, 16
        %v1824 = vor.u32 %v1821, %v1822
        %v1826 = vshrl.u32 %v1803, 16
        %v1828 = vrot.slane %v1826, 7
        %v1829 = vshll.u32 %v1803, 16
        %v1831 = vor.u32 %v1828, %v1829
        %v1833 = vshrl.u32 %v1804, 16
        %v1835 = vrot.slane %v1833, 7
        %v1836 = vshll.u32 %v1804, 16
        %v1838 = vor.u32 %v1835, %v1836
        %v1840 = vshrl.u32 %v1805, 16
        %v1842 = vrot.slane %v1840, 7
        %v1843 = vshll.u32 %v1805, 16
        %v1845 = vor.u32 %v1842, %v1843
        %v1847 = vshrl.u32 %v1806, 16
        %v1849 = vrot.slane %v1847, 7
        %v1850 = vshll.u32 %v1806, 16
        %v1852 = vor.u32 %v1849, %v1850
        %v1854 = vshrl.u32 %v1807, 16
        %v1856 = vrot.slane %v1854, 7
        %v1857 = vshll.u32 %v1807, 16
        %v1859 = vor.u32 %v1856, %v1857
        %v1861 = vshrl.u32 %v1808, 16
        %v1863 = vrot.slane %v1861, 7
        %v1864 = vshll.u32 %v1808, 16
        %v1866 = vor.u32 %v1863, %v1864
        %v1868 = vshrl.u32 %v1809, 16
        %v1870 = vrot.slane %v1868, 7
        %v1871 = vshll.u32 %v1809, 16
        %v1873 = vor.u32 %v1870, %v1871
        %v1875 = vshrl.u32 %v1810, 16
        %v1877 = vrot.slane %v1875, 7
        %v1878 = vshll.u32 %v1810, 16
        %v1880 = vor.u32 %v1877, %v1878
        %v1891 = vsel %vm482, 0, %v1817
        %v1892 = vsel %vm482, 0, %v1824
        %v1893 = vsel %vm482, 0, %v1831
        %v1894 = vsel %vm482, 0, %v1838
        %v1895 = vsel %vm482, 0, %v1845
        %v1896 = vsel %vm482, 0, %v1852
        %v1897 = vsel %vm482, 0, %v1859
        %v1898 = vsel %vm482, 0, %v1866
        %v1899 = vsel %vm482, 0, %v1873
        %v1900 = vsel %vm482, 0, %v1880
        %v1901 = vrot.slane %v1815, 1
        %v1902 = vor.u32 %v1812, %v1901
        %v1903 = vrot.slane %v1822, 1
        %v1904 = vor.u32 %v1819, %v1903
        %v1905 = vrot.slane %v1829, 1
        %v1906 = vor.u32 %v1826, %v1905
        %v1907 = vrot.slane %v1836, 1
        %v1908 = vor.u32 %v1833, %v1907
        %v1909 = vrot.slane %v1843, 1
        %v1910 = vor.u32 %v1840, %v1909
        %v1911 = vrot.slane %v1850, 1
        %v1912 = vor.u32 %v1847, %v1911
        %v1913 = vrot.slane %v1857, 1
        %v1914 = vor.u32 %v1854, %v1913
        %v1915 = vrot.slane %v1864, 1
        %v1916 = vor.u32 %v1861, %v1915
        %v1917 = vrot.slane %v1871, 1
        %v1918 = vor.u32 %v1868, %v1917
        %v1919 = vrot.slane %v1878, 1
        %v1920 = vor.u32 %v1875, %v1919
        %v1931 = vsel %vm533, %v1902, 0
        %v1932 = vsel %vm533, %v1904, 0
        %v1933 = vsel %vm533, %v1906, 0
        %v1934 = vsel %vm533, %v1908, 0
        %v1935 = vsel %vm533, %v1910, 0
        %v1936 = vsel %vm533, %v1912, 0
        %v1937 = vsel %vm533, %v1914, 0
        %v1938 = vsel %vm533, %v1916, 0
        %v1939 = vsel %vm533, %v1918, 0
        %v1940 = vsel %vm533, %v1920, 0
        %v1951 = vld [vmem:[#allocation8] sm:$0xf]
        %v1952 = vld [vmem:[#allocation8 + $0x4] sm:$0xf]
        %v1953 = vld [vmem:[#allocation8 + $0x8] sm:$0xf]
        %v1954 = vld [vmem:[#allocation8 + $0xc] sm:$0xf]
        %v1955 = vld [vmem:[#allocation8 + $0x10] sm:$0xf]
        %v1956 = vld [vmem:[#allocation8 + $0x14] sm:$0xf]
        %v1957 = vld [vmem:[#allocation8 + $0x18] sm:$0xf]
        %v1958 = vld [vmem:[#allocation8 + $0x1c] sm:$0xf]
        %v1959 = vld [vmem:[#allocation8 + $0x20] sm:$0xf]
        %v1960 = vld [vmem:[#allocation8 + $0x24] sm:$0xf]
        %v1961 = vld [vmem:[#allocation8 + $0x28] sm:$0xf]
        %v1962 = vld [vmem:[#allocation8 + $0x2c] sm:$0xf]
        %v1963 = vld [vmem:[#allocation8 + $0x30] sm:$0xf]
        %v1964 = vld [vmem:[#allocation8 + $0x34] sm:$0xf]
        %v1965 = vld [vmem:[#allocation8 + $0x38] sm:$0xf]
        %v1966 = vld [vmem:[#allocation8 + $0x3c] sm:$0xf]
        %v1967 = vld [vmem:[#allocation8 + $0x40] sm:$0xf]
        %v1968 = vld [vmem:[#allocation8 + $0x44] sm:$0xf]
        %v1969 = vld [vmem:[#allocation8 + $0x48] sm:$0xf]
        %v1970 = vld [vmem:[#allocation8 + $0x4c] sm:$0xf]
        %v1971 = vld [vmem:[#allocation8 + $0x50] sm:$0xf]
        %v1972 = vld [vmem:[#allocation8 + $0x54] sm:$0xf]
        %v1973 = vld [vmem:[#allocation8 + $0x58] sm:$0xf]
        %v1974 = vld [vmem:[#allocation8 + $0x5c] sm:$0xf]
        %v1975 = vld [vmem:[#allocation8 + $0x60] sm:$0xf]
        %v1976 = vld [vmem:[#allocation8 + $0x64] sm:$0xf]
        %v1977 = vld [vmem:[#allocation8 + $0x68] sm:$0xf]
        %v1978 = vld [vmem:[#allocation8 + $0x6c] sm:$0xf]
        %v1979 = vld [vmem:[#allocation8 + $0x70] sm:$0xf]
        %v1980 = vld [vmem:[#allocation8 + $0x74] sm:$0xf]
        %v1981 = vld [vmem:[#allocation8 + $0x78] sm:$0xf]
        %v1982 = vld [vmem:[#allocation8 + $0x7c] sm:$0xf]
        %v1983 = vld [vmem:[#allocation8 + $0x80] sm:$0xf]
        %v1984 = vld [vmem:[#allocation8 + $0x84] sm:$0xf]
        %v1985 = vld [vmem:[#allocation8 + $0x88] sm:$0xf]
        %v1986 = vld [vmem:[#allocation8 + $0x8c] sm:$0xf]
        %v1987 = vld [vmem:[#allocation8 + $0x90] sm:$0xf]
        %v1988 = vld [vmem:[#allocation8 + $0x94] sm:$0xf]
        %v1989 = vld [vmem:[#allocation8 + $0x98] sm:$0xf]
        %v1990 = vld [vmem:[#allocation8 + $0x9c] sm:$0xf]
        %v1991 = vld [vmem:[#allocation8 + $0xa0] sm:$0xf]
        %v1992 = vld [vmem:[#allocation8 + $0xa4] sm:$0xf]
        %v1993 = vld [vmem:[#allocation8 + $0xa8] sm:$0xf]
        %v1994 = vld [vmem:[#allocation8 + $0xac] sm:$0xf]
        %v1995 = vld [vmem:[#allocation8 + $0xb0] sm:$0xf]
        %v1996 = vld [vmem:[#allocation8 + $0xb4] sm:$0xf]
        %v1997 = vld [vmem:[#allocation8 + $0xb8] sm:$0xf]
        %v1998 = vld [vmem:[#allocation8 + $0xbc] sm:$0xf]
        %v1999 = vld [vmem:[#allocation8 + $0xc0] sm:$0xf]
        %v2000 = vld [vmem:[#allocation8 + $0xc4] sm:$0xf]
        %v2001 = vld [vmem:[#allocation8 + $0xc8] sm:$0xf]
        %v2002 = vld [vmem:[#allocation8 + $0xcc] sm:$0xf]
        %v2003 = vld [vmem:[#allocation8 + $0xd0] sm:$0xf]
        %v2004 = vld [vmem:[#allocation8 + $0xd4] sm:$0xf]
        %v2005 = vld [vmem:[#allocation8 + $0xd8] sm:$0xf]
        %v2006 = vld [vmem:[#allocation8 + $0xdc] sm:$0xf]
        %v2007 = vld [vmem:[#allocation8 + $0xe0] sm:$0xf]
        %v2008 = vld [vmem:[#allocation8 + $0xe4] sm:$0xf]
        %v2009 = vld [vmem:[#allocation8 + $0xe8] sm:$0xf]
        %v2010 = vld [vmem:[#allocation8 + $0xec] sm:$0xf]
        %v2011 = vld [vmem:[#allocation8 + $0xf0] sm:$0xf]
        %v2012 = vld [vmem:[#allocation8 + $0xf4] sm:$0xf]
        %v2013 = vld [vmem:[#allocation8 + $0xf8] sm:$0xf]
        %v2014 = vld [vmem:[#allocation8 + $0xfc] sm:$0xf]
        %v2015 = vld [vmem:[#allocation8 + $0x100] sm:$0xf]
        %v2016 = vld [vmem:[#allocation8 + $0x104] sm:$0xf]
        %v2017 = vld [vmem:[#allocation8 + $0x108] sm:$0xf]
        %v2018 = vld [vmem:[#allocation8 + $0x10c] sm:$0xf]
        %v2019 = vld [vmem:[#allocation8 + $0x110] sm:$0xf]
        %v2020 = vld [vmem:[#allocation8 + $0x114] sm:$0xf]
        %v2021 = vld [vmem:[#allocation8 + $0x118] sm:$0xf]
        %v2022 = vld [vmem:[#allocation8 + $0x11c] sm:$0xf]
        %v2023 = vld [vmem:[#allocation8 + $0x120] sm:$0xf]
        %v2024 = vld [vmem:[#allocation8 + $0x124] sm:$0xf]
        %v2025 = vld [vmem:[#allocation8 + $0x128] sm:$0xf]
        %v2026 = vld [vmem:[#allocation8 + $0x12c] sm:$0xf]
        %v2027 = vld [vmem:[#allocation8 + $0x130] sm:$0xf]
        %v2028 = vld [vmem:[#allocation8 + $0x134] sm:$0xf]
        %v2029 = vld [vmem:[#allocation8 + $0x138] sm:$0xf]
        %v2030 = vld [vmem:[#allocation8 + $0x13c] sm:$0xf]
        %v2031 = vld [vmem:[#allocation8 + $0x140] sm:$0xf]
        %v2032 = vld [vmem:[#allocation8 + $0x144] sm:$0xf]
        %v2033 = vld [vmem:[#allocation8 + $0x148] sm:$0xf]
        %v2034 = vld [vmem:[#allocation8 + $0x14c] sm:$0xf]
        %v2035 = vld [vmem:[#allocation8 + $0x150] sm:$0xf]
        %v2036 = vld [vmem:[#allocation8 + $0x154] sm:$0xf]
        %v2037 = vld [vmem:[#allocation8 + $0x158] sm:$0xf]
        %v2038 = vld [vmem:[#allocation8 + $0x15c] sm:$0xf]
        %v2039 = vld [vmem:[#allocation8 + $0x160] sm:$0xf]
        %v2040 = vld [vmem:[#allocation8 + $0x164] sm:$0xf]
        %v2041 = vld [vmem:[#allocation8 + $0x168] sm:$0xf]
        %v2042 = vld [vmem:[#allocation8 + $0x16c] sm:$0xf]
        %v2043 = vld [vmem:[#allocation8 + $0x170] sm:$0xf]
        %v2044 = vld [vmem:[#allocation8 + $0x174] sm:$0xf]
        %v2045 = vld [vmem:[#allocation8 + $0x178] sm:$0xf]
        %v2046 = vld [vmem:[#allocation8 + $0x17c] sm:$0xf]
        %v2047 = vld [vmem:[#allocation8 + $0x180] sm:$0xf]
        %v2048 = vld [vmem:[#allocation8 + $0x184] sm:$0xf]
        %v2049 = vld [vmem:[#allocation8 + $0x188] sm:$0xf]
        %v2050 = vld [vmem:[#allocation8 + $0x18c] sm:$0xf]
        %v2051 = vld [vmem:[#allocation8 + $0x190] sm:$0xf]
        %v2052 = vld [vmem:[#allocation8 + $0x194] sm:$0xf]
        %v2053 = vld [vmem:[#allocation8 + $0x198] sm:$0xf]
        %v2054 = vld [vmem:[#allocation8 + $0x19c] sm:$0xf]
        %v2055 = vld [vmem:[#allocation8 + $0x1a0] sm:$0xf]
        %v2056 = vld [vmem:[#allocation8 + $0x1a4] sm:$0xf]
        %v2057 = vld [vmem:[#allocation8 + $0x1a8] sm:$0xf]
        %v2058 = vld [vmem:[#allocation8 + $0x1ac] sm:$0xf]
        %v2059 = vld [vmem:[#allocation8 + $0x1b0] sm:$0xf]
        %v2060 = vld [vmem:[#allocation8 + $0x1b4] sm:$0xf]
        %v2061 = vld [vmem:[#allocation8 + $0x1b8] sm:$0xf]
        %v2062 = vld [vmem:[#allocation8 + $0x1bc] sm:$0xf]
        %v2063 = vld [vmem:[#allocation8 + $0x1c0] sm:$0xf]
        %v2064 = vld [vmem:[#allocation8 + $0x1c4] sm:$0xf]
        %v2065 = vld [vmem:[#allocation8 + $0x1c8] sm:$0xf]
        %v2066 = vld [vmem:[#allocation8 + $0x1cc] sm:$0xf]
        %v2067 = vld [vmem:[#allocation8 + $0x1d0] sm:$0xf]
        %v2068 = vld [vmem:[#allocation8 + $0x1d4] sm:$0xf]
        %v2069 = vld [vmem:[#allocation8 + $0x1d8] sm:$0xf]
        %v2070 = vld [vmem:[#allocation8 + $0x1dc] sm:$0xf]
        %v2071 = vld [vmem:[#allocation8 + $0x1e0] sm:$0xf]
        %v2072 = vld [vmem:[#allocation8 + $0x1e4] sm:$0xf]
        %v2073 = vld [vmem:[#allocation8 + $0x1e8] sm:$0xf]
        %v2074 = vld [vmem:[#allocation8 + $0x1ec] sm:$0xf]
        %v2075 = vld [vmem:[#allocation8 + $0x1f0] sm:$0xf]
        %v2076 = vld [vmem:[#allocation8 + $0x1f4] sm:$0xf]
        %v2077 = vld [vmem:[#allocation8 + $0x1f8] sm:$0xf]
        %v2078 = vld [vmem:[#allocation8 + $0x1fc] sm:$0xf]
        %v2079 = vld [vmem:[#allocation8 + $0x200] sm:$0xf]
        %v2080 = vld [vmem:[#allocation8 + $0x204] sm:$0xf]
        %v2081 = vld [vmem:[#allocation8 + $0x208] sm:$0xf]
        %v2082 = vld [vmem:[#allocation8 + $0x20c] sm:$0xf]
        %v2083 = vld [vmem:[#allocation8 + $0x210] sm:$0xf]
        %v2084 = vld [vmem:[#allocation8 + $0x214] sm:$0xf]
        %v2085 = vld [vmem:[#allocation8 + $0x218] sm:$0xf]
        %v2086 = vld [vmem:[#allocation8 + $0x21c] sm:$0xf]
        %v2087 = vld [vmem:[#allocation8 + $0x220] sm:$0xf]
        %v2088 = vld [vmem:[#allocation8 + $0x224] sm:$0xf]
        %v2089 = vld [vmem:[#allocation8 + $0x228] sm:$0xf]
        %v2090 = vld [vmem:[#allocation8 + $0x22c] sm:$0xf]
        %v2091 = vld [vmem:[#allocation8 + $0x230] sm:$0xf]
        %v2092 = vld [vmem:[#allocation8 + $0x234] sm:$0xf]
        %v2093 = vld [vmem:[#allocation8 + $0x238] sm:$0xf]
        %v2094 = vld [vmem:[#allocation8 + $0x23c] sm:$0xf]
        %v2095 = vunpack.c.l.bf16 %v304
        %v2096 = vunpack.c.l.bf16 %v305
        %v2097 = vunpack.c.l.bf16 %v306
        %v2098 = vunpack.c.l.bf16 %v307
        %v2099 = vunpack.c.l.bf16 %v308
        %v2100 = vunpack.c.l.bf16 %v309
        %v2101 = vunpack.c.l.bf16 %v310
        %v2102 = vunpack.c.l.bf16 %v311
        %v2103 = vunpack.c.l.bf16 %v312
        %v2104 = vunpack.c.l.bf16 %v313
        %v2105 = vunpack.c.l.bf16 %v314
        %v2106 = vunpack.c.l.bf16 %v315
        %v2107 = vunpack.c.l.bf16 %v316
        %v2108 = vunpack.c.l.bf16 %v317
        %v2109 = vunpack.c.l.bf16 %v318
        %v2110 = vunpack.c.l.bf16 %v319
        %v2112 = vperm.slane %v296, 0
        %v2258 = vunpack.c.l.b16 %v1951
        %v2259 = vunpack.c.l.b16 %v1952
        %v2260 = vunpack.c.l.b16 %v1953
        %v2261 = vunpack.c.l.b16 %v1954
        %v2262 = vunpack.c.l.b16 %v1955
        %v2263 = vunpack.c.l.b16 %v1956
        %v2264 = vunpack.c.l.b16 %v1957
        %v2265 = vunpack.c.l.b16 %v1958
        %v2266 = vunpack.c.l.b16 %v1959
        %v2267 = vunpack.c.l.b16 %v1960
        %v2268 = vunpack.c.l.b16 %v1961
        %v2269 = vunpack.c.l.b16 %v1962
        %v2270 = vunpack.c.l.b16 %v1963
        %v2271 = vunpack.c.l.b16 %v1964
        %v2272 = vunpack.c.l.b16 %v1965
        %v2273 = vunpack.c.l.b16 %v1966
        %v2274 = vunpack.c.l.b16 %v1967
        %v2275 = vunpack.c.l.b16 %v1968
        %v2276 = vunpack.c.l.b16 %v1969
        %v2277 = vunpack.c.l.b16 %v1970
        %v2278 = vunpack.c.l.b16 %v1971
        %v2279 = vunpack.c.l.b16 %v1972
        %v2280 = vunpack.c.l.b16 %v1973
        %v2281 = vunpack.c.l.b16 %v1974
        %v2282 = vunpack.c.l.b16 %v1975
        %v2283 = vunpack.c.l.b16 %v1976
        %v2284 = vunpack.c.l.b16 %v1977
        %v2285 = vunpack.c.l.b16 %v1978
        %v2286 = vunpack.c.l.b16 %v1979
        %v2287 = vunpack.c.l.b16 %v1980
        %v2288 = vunpack.c.l.b16 %v1981
        %v2289 = vunpack.c.l.b16 %v1982
        %v2290 = vunpack.c.l.b16 %v1983
        %v2291 = vunpack.c.l.b16 %v1984
        %v2292 = vunpack.c.l.b16 %v1985
        %v2293 = vunpack.c.l.b16 %v1986
        %v2294 = vunpack.c.l.b16 %v1987
        %v2295 = vunpack.c.l.b16 %v1988
        %v2296 = vunpack.c.l.b16 %v1989
        %v2297 = vunpack.c.l.b16 %v1990
        %v2298 = vunpack.c.l.b16 %v1991
        %v2299 = vunpack.c.l.b16 %v1992
        %v2300 = vunpack.c.l.b16 %v1993
        %v2301 = vunpack.c.l.b16 %v1994
        %v2302 = vunpack.c.l.b16 %v1995
        %v2303 = vunpack.c.l.b16 %v1996
        %v2304 = vunpack.c.l.b16 %v1997
        %v2305 = vunpack.c.l.b16 %v1998
        %v2306 = vunpack.c.l.b16 %v1999
        %v2307 = vunpack.c.l.b16 %v2000
        %v2308 = vunpack.c.l.b16 %v2001
        %v2309 = vunpack.c.l.b16 %v2002
        %v2310 = vunpack.c.l.b16 %v2003
        %v2311 = vunpack.c.l.b16 %v2004
        %v2312 = vunpack.c.l.b16 %v2005
        %v2313 = vunpack.c.l.b16 %v2006
        %v2314 = vunpack.c.l.b16 %v2007
        %v2315 = vunpack.c.l.b16 %v2008
        %v2316 = vunpack.c.l.b16 %v2009
        %v2317 = vunpack.c.l.b16 %v2010
        %v2318 = vunpack.c.l.b16 %v2011
        %v2319 = vunpack.c.l.b16 %v2012
        %v2320 = vunpack.c.l.b16 %v2013
        %v2321 = vunpack.c.l.b16 %v2014
        %v2322 = vunpack.c.l.b16 %v2015
        %v2323 = vunpack.c.l.b16 %v2016
        %v2324 = vunpack.c.l.b16 %v2017
        %v2325 = vunpack.c.l.b16 %v2018
        %v2326 = vunpack.c.l.b16 %v2019
        %v2327 = vunpack.c.l.b16 %v2020
        %v2328 = vunpack.c.l.b16 %v2021
        %v2329 = vunpack.c.l.b16 %v2022
        %v2330 = vunpack.c.l.b16 %v2023
        %v2331 = vunpack.c.l.b16 %v2024
        %v2332 = vunpack.c.l.b16 %v2025
        %v2333 = vunpack.c.l.b16 %v2026
        %v2334 = vunpack.c.l.b16 %v2027
        %v2335 = vunpack.c.l.b16 %v2028
        %v2336 = vunpack.c.l.b16 %v2029
        %v2337 = vunpack.c.l.b16 %v2030
        %v2338 = vunpack.c.l.b16 %v2031
        %v2339 = vunpack.c.l.b16 %v2032
        %v2340 = vunpack.c.l.b16 %v2033
        %v2341 = vunpack.c.l.b16 %v2034
        %v2342 = vunpack.c.l.b16 %v2035
        %v2343 = vunpack.c.l.b16 %v2036
        %v2344 = vunpack.c.l.b16 %v2037
        %v2345 = vunpack.c.l.b16 %v2038
        %v2346 = vunpack.c.l.b16 %v2039
        %v2347 = vunpack.c.l.b16 %v2040
        %v2348 = vunpack.c.l.b16 %v2041
        %v2349 = vunpack.c.l.b16 %v2042
        %v2350 = vunpack.c.l.b16 %v2043
        %v2351 = vunpack.c.l.b16 %v2044
        %v2352 = vunpack.c.l.b16 %v2045
        %v2353 = vunpack.c.l.b16 %v2046
        %v2354 = vunpack.c.l.b16 %v2047
        %v2355 = vunpack.c.l.b16 %v2048
        %v2356 = vunpack.c.l.b16 %v2049
        %v2357 = vunpack.c.l.b16 %v2050
        %v2358 = vunpack.c.l.b16 %v2051
        %v2359 = vunpack.c.l.b16 %v2052
        %v2360 = vunpack.c.l.b16 %v2053
        %v2361 = vunpack.c.l.b16 %v2054
        %v2362 = vunpack.c.l.b16 %v2055
        %v2363 = vunpack.c.l.b16 %v2056
        %v2364 = vunpack.c.l.b16 %v2057
        %v2365 = vunpack.c.l.b16 %v2058
        %v2366 = vunpack.c.l.b16 %v2059
        %v2367 = vunpack.c.l.b16 %v2060
        %v2368 = vunpack.c.l.b16 %v2061
        %v2369 = vunpack.c.l.b16 %v2062
        %v2370 = vunpack.c.l.b16 %v2063
        %v2371 = vunpack.c.l.b16 %v2064
        %v2372 = vunpack.c.l.b16 %v2065
        %v2373 = vunpack.c.l.b16 %v2066
        %v2374 = vunpack.c.l.b16 %v2067
        %v2375 = vunpack.c.l.b16 %v2068
        %v2376 = vunpack.c.l.b16 %v2069
        %v2377 = vunpack.c.l.b16 %v2070
        %v2378 = vunpack.c.l.b16 %v2071
        %v2379 = vunpack.c.l.b16 %v2072
        %v2380 = vunpack.c.l.b16 %v2073
        %v2381 = vunpack.c.l.b16 %v2074
        %v2382 = vunpack.c.l.b16 %v2075
        %v2383 = vunpack.c.l.b16 %v2076
        %v2384 = vunpack.c.l.b16 %v2077
        %v2385 = vunpack.c.l.b16 %v2078
        %v2386 = vunpack.c.l.b16 %v2079
        %v2387 = vunpack.c.l.b16 %v2080
        %v2388 = vunpack.c.l.b16 %v2081
        %v2389 = vunpack.c.l.b16 %v2082
        %v2390 = vunpack.c.l.b16 %v2083
        %v2391 = vunpack.c.l.b16 %v2084
        %v2392 = vunpack.c.l.b16 %v2085
        %v2393 = vunpack.c.l.b16 %v2086
        %v2394 = vunpack.c.l.b16 %v2087
        %v2395 = vunpack.c.l.b16 %v2088
        %v2396 = vunpack.c.l.b16 %v2089
        %v2397 = vunpack.c.l.b16 %v2090
        %v2398 = vunpack.c.l.b16 %v2091
        %v2399 = vunpack.c.l.b16 %v2092
        %v2400 = vunpack.c.l.b16 %v2093
        %v2401 = vunpack.c.l.b16 %v2094
        %v2402 = vpack.c.b16 %v2259, %v2258
        %v2403 = vpack.c.b16 %v2261, %v2260
        %v2404 = vpack.c.b16 %v2263, %v2262
        %v2405 = vpack.c.b16 %v2265, %v2264
        %v2406 = vpack.c.b16 %v2267, %v2266
        %v2407 = vpack.c.b16 %v2269, %v2268
        %v2408 = vpack.c.b16 %v2271, %v2270
        %v2409 = vpack.c.b16 %v2273, %v2272
        %v2410 = vpack.c.b16 %v2275, %v2274
        %v2411 = vpack.c.b16 %v2277, %v2276
        %v2412 = vpack.c.b16 %v2279, %v2278
        %v2413 = vpack.c.b16 %v2281, %v2280
        %v2414 = vpack.c.b16 %v2283, %v2282
        %v2415 = vpack.c.b16 %v2285, %v2284
        %v2416 = vpack.c.b16 %v2287, %v2286
        %v2417 = vpack.c.b16 %v2289, %v2288
        %v2418 = vpack.c.b16 %v2291, %v2290
        %v2419 = vpack.c.b16 %v2293, %v2292
        %v2420 = vpack.c.b16 %v2295, %v2294
        %v2421 = vpack.c.b16 %v2297, %v2296
        %v2422 = vpack.c.b16 %v2299, %v2298
        %v2423 = vpack.c.b16 %v2301, %v2300
        %v2424 = vpack.c.b16 %v2303, %v2302
        %v2425 = vpack.c.b16 %v2305, %v2304
        %v2426 = vpack.c.b16 %v2307, %v2306
        %v2427 = vpack.c.b16 %v2309, %v2308
        %v2428 = vpack.c.b16 %v2311, %v2310
        %v2429 = vpack.c.b16 %v2313, %v2312
        %v2430 = vpack.c.b16 %v2315, %v2314
        %v2431 = vpack.c.b16 %v2317, %v2316
        %v2432 = vpack.c.b16 %v2319, %v2318
        %v2433 = vpack.c.b16 %v2321, %v2320
        %v2434 = vpack.c.b16 %v2323, %v2322
        %v2435 = vpack.c.b16 %v2325, %v2324
        %v2436 = vpack.c.b16 %v2327, %v2326
        %v2437 = vpack.c.b16 %v2329, %v2328
        %v2438 = vpack.c.b16 %v2331, %v2330
        %v2439 = vpack.c.b16 %v2333, %v2332
        %v2440 = vpack.c.b16 %v2335, %v2334
        %v2441 = vpack.c.b16 %v2337, %v2336
        %v2442 = vpack.c.b16 %v2339, %v2338
        %v2443 = vpack.c.b16 %v2341, %v2340
        %v2444 = vpack.c.b16 %v2343, %v2342
        %v2445 = vpack.c.b16 %v2345, %v2344
        %v2446 = vpack.c.b16 %v2347, %v2346
        %v2447 = vpack.c.b16 %v2349, %v2348
        %v2448 = vpack.c.b16 %v2351, %v2350
        %v2449 = vpack.c.b16 %v2353, %v2352
        %v2450 = vpack.c.b16 %v2355, %v2354
        %v2451 = vpack.c.b16 %v2357, %v2356
        %v2452 = vpack.c.b16 %v2359, %v2358
        %v2453 = vpack.c.b16 %v2361, %v2360
        %v2454 = vpack.c.b16 %v2363, %v2362
        %v2455 = vpack.c.b16 %v2365, %v2364
        %v2456 = vpack.c.b16 %v2367, %v2366
        %v2457 = vpack.c.b16 %v2369, %v2368
        %v2458 = vpack.c.b16 %v2371, %v2370
        %v2459 = vpack.c.b16 %v2373, %v2372
        %v2460 = vpack.c.b16 %v2375, %v2374
        %v2461 = vpack.c.b16 %v2377, %v2376
        %v2462 = vpack.c.b16 %v2379, %v2378
        %v2463 = vpack.c.b16 %v2381, %v2380
        %v2464 = vpack.c.b16 %v2383, %v2382
        %v2465 = vpack.c.b16 %v2385, %v2384
        %v2466 = vpack.c.b16 %v2387, %v2386
        %v2467 = vpack.c.b16 %v2389, %v2388
        %v2468 = vpack.c.b16 %v2391, %v2390
        %v2469 = vpack.c.b16 %v2393, %v2392
        %v2470 = vpack.c.b16 %v2395, %v2394
        %v2471 = vpack.c.b16 %v2397, %v2396
        %v2472 = vpack.c.b16 %v2399, %v2398
        %v2473 = vpack.c.b16 %v2401, %v2400
        %2546 = vmatpush.bf16.msra.mxu0 %v2409
        %2547 = vmatpush.bf16.msra.mxu0 %v2408
        %2548 = vmatpush.bf16.msra.mxu0 %v2407
        %2549 = vmatpush.bf16.msra.mxu0 %v2406
        %2550 = vmatpush.bf16.msra.mxu0 %v2405
        %2551 = vmatpush.bf16.msra.mxu0 %v2404
        %2552 = vmatpush.bf16.msra.mxu0 %v2403
        %2553 = vmatpush.bf16.msra.mxu0 %v2402
        %2554 = vmatmul.bf16.gmra.mxu0 %v1891
        %v2555 = vpop.f32.mrf.mxu0
        %v2556 = vadd.f32 %v2112, %v2555
        %v2557 = vpop.f32.mrf.mxu0
        %v2558 = vadd.f32 %v2112, %v2557
        %2559 = vmatmul.bf16.gmra.mxu0 %v1892
        %v2560 = vpop.f32.mrf.mxu0
        %v2561 = vadd.f32 %v2112, %v2560
        %v2562 = vpop.f32.mrf.mxu0
        %v2563 = vadd.f32 %v2112, %v2562
        %2564 = vmatmul.bf16.gmra.mxu0 %v1893
        %v2565 = vpop.f32.mrf.mxu0
        %v2566 = vadd.f32 %v2112, %v2565
        %v2567 = vpop.f32.mrf.mxu0
        %v2568 = vadd.f32 %v2112, %v2567
        %2569 = vmatmul.bf16.gmra.mxu0 %v1894
        %v2570 = vpop.f32.mrf.mxu0
        %v2571 = vadd.f32 %v2112, %v2570
        %v2572 = vpop.f32.mrf.mxu0
        %v2573 = vadd.f32 %v2112, %v2572
        %2574 = vmatmul.bf16.gmra.mxu0 %v1895
        %v2575 = vpop.f32.mrf.mxu0
        %v2576 = vadd.f32 %v2112, %v2575
        %v2577 = vpop.f32.mrf.mxu0
        %v2578 = vadd.f32 %v2112, %v2577
        %2579 = vmatmul.bf16.gmra.mxu0 %v1896
        %v2580 = vpop.f32.mrf.mxu0
        %v2581 = vadd.f32 %v2112, %v2580
        %v2582 = vpop.f32.mrf.mxu0
        %v2583 = vadd.f32 %v2112, %v2582
        %2584 = vmatmul.bf16.gmra.mxu0 %v1897
        %v2585 = vpop.f32.mrf.mxu0
        %v2586 = vadd.f32 %v2112, %v2585
        %v2587 = vpop.f32.mrf.mxu0
        %v2588 = vadd.f32 %v2112, %v2587
        %2589 = vmatmul.bf16.gmra.mxu0 %v1898
        %v2590 = vpop.f32.mrf.mxu0
        %v2591 = vadd.f32 %v2112, %v2590
        %v2592 = vpop.f32.mrf.mxu0
        %v2593 = vadd.f32 %v2112, %v2592
        %2594 = vdwg.mxu0
        %2595 = vmatpush.bf16.msra.mxu0 %v2417
        %2596 = vmatpush.bf16.msra.mxu0 %v2416
        %2597 = vmatpush.bf16.msra.mxu0 %v2415
        %2598 = vmatpush.bf16.msra.mxu0 %v2414
        %2599 = vmatpush.bf16.msra.mxu0 %v2413
        %2600 = vmatpush.bf16.msra.mxu0 %v2412
        %2601 = vmatpush.bf16.msra.mxu0 %v2411
        %2602 = vmatpush.bf16.msra.mxu0 %v2410
        %2603 = vmatmul.bf16.gmra.mxu0 %v1801
        %v2604 = vpop.f32.mrf.mxu0
        %v2605 = vadd.f32 %v2556, %v2604
        %v2606 = vpop.f32.mrf.mxu0
        %v2607 = vadd.f32 %v2558, %v2606
        %2608 = vmatmul.bf16.gmra.mxu0 %v1802
        %v2609 = vpop.f32.mrf.mxu0
        %v2610 = vadd.f32 %v2561, %v2609
        %v2611 = vpop.f32.mrf.mxu0
        %v2612 = vadd.f32 %v2563, %v2611
        %2613 = vmatmul.bf16.gmra.mxu0 %v1803
        %v2614 = vpop.f32.mrf.mxu0
        %v2615 = vadd.f32 %v2566, %v2614
        %v2616 = vpop.f32.mrf.mxu0
        %v2617 = vadd.f32 %v2568, %v2616
        %2618 = vmatmul.bf16.gmra.mxu0 %v1804
        %v2619 = vpop.f32.mrf.mxu0
        %v2620 = vadd.f32 %v2571, %v2619
        %v2621 = vpop.f32.mrf.mxu0
        %v2622 = vadd.f32 %v2573, %v2621
        %2623 = vmatmul.bf16.gmra.mxu0 %v1805
        %v2624 = vpop.f32.mrf.mxu0
        %v2625 = vadd.f32 %v2576, %v2624
        %v2626 = vpop.f32.mrf.mxu0
        %v2627 = vadd.f32 %v2578, %v2626
        %2628 = vmatmul.bf16.gmra.mxu0 %v1806
        %v2629 = vpop.f32.mrf.mxu0
        %v2630 = vadd.f32 %v2581, %v2629
        %v2631 = vpop.f32.mrf.mxu0
        %v2632 = vadd.f32 %v2583, %v2631
        %2633 = vmatmul.bf16.gmra.mxu0 %v1807
        %v2634 = vpop.f32.mrf.mxu0
        %v2635 = vadd.f32 %v2586, %v2634
        %v2636 = vpop.f32.mrf.mxu0
        %v2637 = vadd.f32 %v2588, %v2636
        %2638 = vmatmul.bf16.gmra.mxu0 %v1808
        %v2639 = vpop.f32.mrf.mxu0
        %v2640 = vadd.f32 %v2591, %v2639
        %v2641 = vpop.f32.mrf.mxu0
        %v2642 = vadd.f32 %v2593, %v2641
        %2643 = vdwg.mxu0
        %2644 = vmatpush.bf16.msra.mxu0 %v2425
        %2645 = vmatpush.bf16.msra.mxu0 %v2424
        %2646 = vmatpush.bf16.msra.mxu0 %v2423
        %2647 = vmatpush.bf16.msra.mxu0 %v2422
        %2648 = vmatpush.bf16.msra.mxu0 %v2421
        %2649 = vmatpush.bf16.msra.mxu0 %v2420
        %2650 = vmatpush.bf16.msra.mxu0 %v2419
        %2651 = vmatpush.bf16.msra.mxu0 %v2418
        %2652 = vmatmul.bf16.gmra.mxu0 %v1931
        %v2653 = vpop.f32.mrf.mxu0
        %v2654 = vadd.f32 %v2605, %v2653
        %v2655 = vpop.f32.mrf.mxu0
        %v2656 = vadd.f32 %v2607, %v2655
        %2657 = vmatmul.bf16.gmra.mxu0 %v1932
        %v2658 = vpop.f32.mrf.mxu0
        %v2659 = vadd.f32 %v2610, %v2658
        %v2660 = vpop.f32.mrf.mxu0
        %v2661 = vadd.f32 %v2612, %v2660
        %2662 = vmatmul.bf16.gmra.mxu0 %v1933
        %v2663 = vpop.f32.mrf.mxu0
        %v2664 = vadd.f32 %v2615, %v2663
        %v2665 = vpop.f32.mrf.mxu0
        %v2666 = vadd.f32 %v2617, %v2665
        %2667 = vmatmul.bf16.gmra.mxu0 %v1934
        %v2668 = vpop.f32.mrf.mxu0
        %v2669 = vadd.f32 %v2620, %v2668
        %v2670 = vpop.f32.mrf.mxu0
        %v2671 = vadd.f32 %v2622, %v2670
        %2672 = vmatmul.bf16.gmra.mxu0 %v1935
        %v2673 = vpop.f32.mrf.mxu0
        %v2674 = vadd.f32 %v2625, %v2673
        %v2675 = vpop.f32.mrf.mxu0
        %v2676 = vadd.f32 %v2627, %v2675
        %2677 = vmatmul.bf16.gmra.mxu0 %v1936
        %v2678 = vpop.f32.mrf.mxu0
        %v2679 = vadd.f32 %v2630, %v2678
        %v2680 = vpop.f32.mrf.mxu0
        %v2681 = vadd.f32 %v2632, %v2680
        %2682 = vmatmul.bf16.gmra.mxu0 %v1937
        %v2683 = vpop.f32.mrf.mxu0
        %v2684 = vadd.f32 %v2635, %v2683
        %v2685 = vpop.f32.mrf.mxu0
        %v2686 = vadd.f32 %v2637, %v2685
        %2687 = vmatmul.bf16.gmra.mxu0 %v1938
        %v2688 = vpop.f32.mrf.mxu0
        %v2689 = vadd.f32 %v2640, %v2688
        %v2690 = vpop.f32.mrf.mxu0
        %v2691 = vadd.f32 %v2642, %v2690
        %2692 = vdwg.mxu0
        %2693 = vmatpush.bf16.msra.mxu0 %v2433
        %2694 = vmatpush.bf16.msra.mxu0 %v2432
        %2695 = vmatpush.bf16.msra.mxu0 %v2431
        %2696 = vmatpush.bf16.msra.mxu0 %v2430
        %2697 = vmatpush.bf16.msra.mxu0 %v2429
        %2698 = vmatpush.bf16.msra.mxu0 %v2428
        %2699 = vmatpush.bf16.msra.mxu0 %v2427
        %2700 = vmatpush.bf16.msra.mxu0 %v2426
        %2701 = vmatmul.bf16.gmra.mxu0 %v1892
        %v2702 = vpop.f32.mrf.mxu0
        %v2703 = vadd.f32 %v2654, %v2702
        %v2704 = vpop.f32.mrf.mxu0
        %v2705 = vadd.f32 %v2656, %v2704
        %2706 = vmatmul.bf16.gmra.mxu0 %v1893
        %v2707 = vpop.f32.mrf.mxu0
        %v2708 = vadd.f32 %v2659, %v2707
        %v2709 = vpop.f32.mrf.mxu0
        %v2710 = vadd.f32 %v2661, %v2709
        %2711 = vmatmul.bf16.gmra.mxu0 %v1894
        %v2712 = vpop.f32.mrf.mxu0
        %v2713 = vadd.f32 %v2664, %v2712
        %v2714 = vpop.f32.mrf.mxu0
        %v2715 = vadd.f32 %v2666, %v2714
        %2716 = vmatmul.bf16.gmra.mxu0 %v1895
        %v2717 = vpop.f32.mrf.mxu0
        %v2718 = vadd.f32 %v2669, %v2717
        %v2719 = vpop.f32.mrf.mxu0
        %v2720 = vadd.f32 %v2671, %v2719
        %2721 = vmatmul.bf16.gmra.mxu0 %v1896
        %v2722 = vpop.f32.mrf.mxu0
        %v2723 = vadd.f32 %v2674, %v2722
        %v2724 = vpop.f32.mrf.mxu0
        %v2725 = vadd.f32 %v2676, %v2724
        %2726 = vmatmul.bf16.gmra.mxu0 %v1897
        %v2727 = vpop.f32.mrf.mxu0
        %v2728 = vadd.f32 %v2679, %v2727
        %v2729 = vpop.f32.mrf.mxu0
        %v2730 = vadd.f32 %v2681, %v2729
        %2731 = vmatmul.bf16.gmra.mxu0 %v1898
        %v2732 = vpop.f32.mrf.mxu0
        %v2733 = vadd.f32 %v2684, %v2732
        %v2734 = vpop.f32.mrf.mxu0
        %v2735 = vadd.f32 %v2686, %v2734
        %2736 = vmatmul.bf16.gmra.mxu0 %v1899
        %v2737 = vpop.f32.mrf.mxu0
        %v2738 = vadd.f32 %v2689, %v2737
        %v2739 = vpop.f32.mrf.mxu0
        %v2740 = vadd.f32 %v2691, %v2739
        %2741 = vdwg.mxu0
        %2742 = vmatpush.bf16.msra.mxu0 %v2441
        %2743 = vmatpush.bf16.msra.mxu0 %v2440
        %2744 = vmatpush.bf16.msra.mxu0 %v2439
        %2745 = vmatpush.bf16.msra.mxu0 %v2438
        %2746 = vmatpush.bf16.msra.mxu0 %v2437
        %2747 = vmatpush.bf16.msra.mxu0 %v2436
        %2748 = vmatpush.bf16.msra.mxu0 %v2435
        %2749 = vmatpush.bf16.msra.mxu0 %v2434
        %2750 = vmatmul.bf16.gmra.mxu0 %v1802
        %v2751 = vpop.f32.mrf.mxu0
        %v2752 = vadd.f32 %v2703, %v2751
        %v2753 = vpop.f32.mrf.mxu0
        %v2754 = vadd.f32 %v2705, %v2753
        %2755 = vmatmul.bf16.gmra.mxu0 %v1803
        %v2756 = vpop.f32.mrf.mxu0
        %v2757 = vadd.f32 %v2708, %v2756
        %v2758 = vpop.f32.mrf.mxu0
        %v2759 = vadd.f32 %v2710, %v2758
        %2760 = vmatmul.bf16.gmra.mxu0 %v1804
        %v2761 = vpop.f32.mrf.mxu0
        %v2762 = vadd.f32 %v2713, %v2761
        %v2763 = vpop.f32.mrf.mxu0
        %v2764 = vadd.f32 %v2715, %v2763
        %2765 = vmatmul.bf16.gmra.mxu0 %v1805
        %v2766 = vpop.f32.mrf.mxu0
        %v2767 = vadd.f32 %v2718, %v2766
        %v2768 = vpop.f32.mrf.mxu0
        %v2769 = vadd.f32 %v2720, %v2768
        %2770 = vmatmul.bf16.gmra.mxu0 %v1806
        %v2771 = vpop.f32.mrf.mxu0
        %v2772 = vadd.f32 %v2723, %v2771
        %v2773 = vpop.f32.mrf.mxu0
        %v2774 = vadd.f32 %v2725, %v2773
        %2775 = vmatmul.bf16.gmra.mxu0 %v1807
        %v2776 = vpop.f32.mrf.mxu0
        %v2777 = vadd.f32 %v2728, %v2776
        %v2778 = vpop.f32.mrf.mxu0
        %v2779 = vadd.f32 %v2730, %v2778
        %2780 = vmatmul.bf16.gmra.mxu0 %v1808
        %v2781 = vpop.f32.mrf.mxu0
        %v2782 = vadd.f32 %v2733, %v2781
        %v2783 = vpop.f32.mrf.mxu0
        %v2784 = vadd.f32 %v2735, %v2783
        %2785 = vmatmul.bf16.gmra.mxu0 %v1809
        %v2786 = vpop.f32.mrf.mxu0
        %v2787 = vadd.f32 %v2738, %v2786
        %v2788 = vpop.f32.mrf.mxu0
        %v2789 = vadd.f32 %v2740, %v2788
        %2790 = vdwg.mxu0
        %2791 = vmatpush.bf16.msra.mxu0 %v2449
        %2792 = vmatpush.bf16.msra.mxu0 %v2448
        %2793 = vmatpush.bf16.msra.mxu0 %v2447
        %2794 = vmatpush.bf16.msra.mxu0 %v2446
        %2795 = vmatpush.bf16.msra.mxu0 %v2445
        %2796 = vmatpush.bf16.msra.mxu0 %v2444
        %2797 = vmatpush.bf16.msra.mxu0 %v2443
        %2798 = vmatpush.bf16.msra.mxu0 %v2442
        %2799 = vmatmul.bf16.gmra.mxu0 %v1932
        %v2800 = vpop.f32.mrf.mxu0
        %v2801 = vadd.f32 %v2752, %v2800
        %v2802 = vpop.f32.mrf.mxu0
        %v2803 = vadd.f32 %v2754, %v2802
        %2804 = vmatmul.bf16.gmra.mxu0 %v1933
        %v2805 = vpop.f32.mrf.mxu0
        %v2806 = vadd.f32 %v2757, %v2805
        %v2807 = vpop.f32.mrf.mxu0
        %v2808 = vadd.f32 %v2759, %v2807
        %2809 = vmatmul.bf16.gmra.mxu0 %v1934
        %v2810 = vpop.f32.mrf.mxu0
        %v2811 = vadd.f32 %v2762, %v2810
        %v2812 = vpop.f32.mrf.mxu0
        %v2813 = vadd.f32 %v2764, %v2812
        %2814 = vmatmul.bf16.gmra.mxu0 %v1935
        %v2815 = vpop.f32.mrf.mxu0
        %v2816 = vadd.f32 %v2767, %v2815
        %v2817 = vpop.f32.mrf.mxu0
        %v2818 = vadd.f32 %v2769, %v2817
        %2819 = vmatmul.bf16.gmra.mxu0 %v1936
        %v2820 = vpop.f32.mrf.mxu0
        %v2821 = vadd.f32 %v2772, %v2820
        %v2822 = vpop.f32.mrf.mxu0
        %v2823 = vadd.f32 %v2774, %v2822
        %2824 = vmatmul.bf16.gmra.mxu0 %v1937
        %v2825 = vpop.f32.mrf.mxu0
        %v2826 = vadd.f32 %v2777, %v2825
        %v2827 = vpop.f32.mrf.mxu0
        %v2828 = vadd.f32 %v2779, %v2827
        %2829 = vmatmul.bf16.gmra.mxu0 %v1938
        %v2830 = vpop.f32.mrf.mxu0
        %v2831 = vadd.f32 %v2782, %v2830
        %v2832 = vpop.f32.mrf.mxu0
        %v2833 = vadd.f32 %v2784, %v2832
        %2834 = vmatmul.bf16.gmra.mxu0 %v1939
        %v2835 = vpop.f32.mrf.mxu0
        %v2836 = vadd.f32 %v2787, %v2835
        %v2837 = vpop.f32.mrf.mxu0
        %v2838 = vadd.f32 %v2789, %v2837
        %2839 = vdwg.mxu0
        %2840 = vmatpush.bf16.msra.mxu0 %v2457
        %2841 = vmatpush.bf16.msra.mxu0 %v2456
        %2842 = vmatpush.bf16.msra.mxu0 %v2455
        %2843 = vmatpush.bf16.msra.mxu0 %v2454
        %2844 = vmatpush.bf16.msra.mxu0 %v2453
        %2845 = vmatpush.bf16.msra.mxu0 %v2452
        %2846 = vmatpush.bf16.msra.mxu0 %v2451
        %2847 = vmatpush.bf16.msra.mxu0 %v2450
        %2848 = vmatmul.bf16.gmra.mxu0 %v1893
        %v2849 = vpop.f32.mrf.mxu0
        %v2850 = vadd.f32 %v2801, %v2849
        %v2851 = vpop.f32.mrf.mxu0
        %v2852 = vadd.f32 %v2803, %v2851
        %2853 = vmatmul.bf16.gmra.mxu0 %v1894
        %v2854 = vpop.f32.mrf.mxu0
        %v2855 = vadd.f32 %v2806, %v2854
        %v2856 = vpop.f32.mrf.mxu0
        %v2857 = vadd.f32 %v2808, %v2856
        %2858 = vmatmul.bf16.gmra.mxu0 %v1895
        %v2859 = vpop.f32.mrf.mxu0
        %v2860 = vadd.f32 %v2811, %v2859
        %v2861 = vpop.f32.mrf.mxu0
        %v2862 = vadd.f32 %v2813, %v2861
        %2863 = vmatmul.bf16.gmra.mxu0 %v1896
        %v2864 = vpop.f32.mrf.mxu0
        %v2865 = vadd.f32 %v2816, %v2864
        %v2866 = vpop.f32.mrf.mxu0
        %v2867 = vadd.f32 %v2818, %v2866
        %2868 = vmatmul.bf16.gmra.mxu0 %v1897
        %v2869 = vpop.f32.mrf.mxu0
        %v2870 = vadd.f32 %v2821, %v2869
        %v2871 = vpop.f32.mrf.mxu0
        %v2872 = vadd.f32 %v2823, %v2871
        %2873 = vmatmul.bf16.gmra.mxu0 %v1898
        %v2874 = vpop.f32.mrf.mxu0
        %v2875 = vadd.f32 %v2826, %v2874
        %v2876 = vpop.f32.mrf.mxu0
        %v2877 = vadd.f32 %v2828, %v2876
        %2878 = vmatmul.bf16.gmra.mxu0 %v1899
        %v2879 = vpop.f32.mrf.mxu0
        %v2880 = vadd.f32 %v2831, %v2879
        %v2881 = vpop.f32.mrf.mxu0
        %v2882 = vadd.f32 %v2833, %v2881
        %2883 = vmatmul.bf16.gmra.mxu0 %v1900
        %v2884 = vpop.f32.mrf.mxu0
        %v2885 = vadd.f32 %v2836, %v2884
        %v2886 = vpop.f32.mrf.mxu0
        %v2887 = vadd.f32 %v2838, %v2886
        %2888 = vdwg.mxu0
        %2889 = vmatpush.bf16.msra.mxu0 %v2465
        %2890 = vmatpush.bf16.msra.mxu0 %v2464
        %2891 = vmatpush.bf16.msra.mxu0 %v2463
        %2892 = vmatpush.bf16.msra.mxu0 %v2462
        %2893 = vmatpush.bf16.msra.mxu0 %v2461
        %2894 = vmatpush.bf16.msra.mxu0 %v2460
        %2895 = vmatpush.bf16.msra.mxu0 %v2459
        %2896 = vmatpush.bf16.msra.mxu0 %v2458
        %2897 = vmatmul.bf16.gmra.mxu0 %v1803
        %v2898 = vpop.f32.mrf.mxu0
        %v2899 = vadd.f32 %v2850, %v2898
        %v2900 = vpop.f32.mrf.mxu0
        %v2901 = vadd.f32 %v2852, %v2900
        %2902 = vmatmul.bf16.gmra.mxu0 %v1804
        %v2903 = vpop.f32.mrf.mxu0
        %v2904 = vadd.f32 %v2855, %v2903
        %v2905 = vpop.f32.mrf.mxu0
        %v2906 = vadd.f32 %v2857, %v2905
        %2907 = vmatmul.bf16.gmra.mxu0 %v1805
        %v2908 = vpop.f32.mrf.mxu0
        %v2909 = vadd.f32 %v2860, %v2908
        %v2910 = vpop.f32.mrf.mxu0
        %v2911 = vadd.f32 %v2862, %v2910
        %2912 = vmatmul.bf16.gmra.mxu0 %v1806
        %v2913 = vpop.f32.mrf.mxu0
        %v2914 = vadd.f32 %v2865, %v2913
        %v2915 = vpop.f32.mrf.mxu0
        %v2916 = vadd.f32 %v2867, %v2915
        %2917 = vmatmul.bf16.gmra.mxu0 %v1807
        %v2918 = vpop.f32.mrf.mxu0
        %v2919 = vadd.f32 %v2870, %v2918
        %v2920 = vpop.f32.mrf.mxu0
        %v2921 = vadd.f32 %v2872, %v2920
        %2922 = vmatmul.bf16.gmra.mxu0 %v1808
        %v2923 = vpop.f32.mrf.mxu0
        %v2924 = vadd.f32 %v2875, %v2923
        %v2925 = vpop.f32.mrf.mxu0
        %v2926 = vadd.f32 %v2877, %v2925
        %2927 = vmatmul.bf16.gmra.mxu0 %v1809
        %v2928 = vpop.f32.mrf.mxu0
        %v2929 = vadd.f32 %v2880, %v2928
        %v2930 = vpop.f32.mrf.mxu0
        %v2931 = vadd.f32 %v2882, %v2930
        %2932 = vmatmul.bf16.gmra.mxu0 %v1810
        %v2933 = vpop.f32.mrf.mxu0
        %v2934 = vadd.f32 %v2885, %v2933
        %v2935 = vpop.f32.mrf.mxu0
        %v2936 = vadd.f32 %v2887, %v2935
        %2937 = vdwg.mxu0
        %2938 = vmatpush.bf16.msra.mxu0 %v2473
        %2939 = vmatpush.bf16.msra.mxu0 %v2472
        %2940 = vmatpush.bf16.msra.mxu0 %v2471
        %2941 = vmatpush.bf16.msra.mxu0 %v2470
        %2942 = vmatpush.bf16.msra.mxu0 %v2469
        %2943 = vmatpush.bf16.msra.mxu0 %v2468
        %2944 = vmatpush.bf16.msra.mxu0 %v2467
        %2945 = vmatpush.bf16.msra.mxu0 %v2466
        %2946 = vmatmul.bf16.gmra.mxu0 %v1933
        %v2947 = vpop.f32.mrf.mxu0
        %v2948 = vadd.f32 %v2899, %v2947
        %v2949 = vpop.f32.mrf.mxu0
        %v2950 = vadd.f32 %v2901, %v2949
        %2951 = vmatmul.bf16.gmra.mxu0 %v1934
        %v2952 = vpop.f32.mrf.mxu0
        %v2953 = vadd.f32 %v2904, %v2952
        %v2954 = vpop.f32.mrf.mxu0
        %v2955 = vadd.f32 %v2906, %v2954
        %2956 = vmatmul.bf16.gmra.mxu0 %v1935
        %v2957 = vpop.f32.mrf.mxu0
        %v2958 = vadd.f32 %v2909, %v2957
        %v2959 = vpop.f32.mrf.mxu0
        %v2960 = vadd.f32 %v2911, %v2959
        %2961 = vmatmul.bf16.gmra.mxu0 %v1936
        %v2962 = vpop.f32.mrf.mxu0
        %v2963 = vadd.f32 %v2914, %v2962
        %v2964 = vpop.f32.mrf.mxu0
        %v2965 = vadd.f32 %v2916, %v2964
        %2966 = vmatmul.bf16.gmra.mxu0 %v1937
        %v2967 = vpop.f32.mrf.mxu0
        %v2968 = vadd.f32 %v2919, %v2967
        %v2969 = vpop.f32.mrf.mxu0
        %v2970 = vadd.f32 %v2921, %v2969
        %2971 = vmatmul.bf16.gmra.mxu0 %v1938
        %v2972 = vpop.f32.mrf.mxu0
        %v2973 = vadd.f32 %v2924, %v2972
        %v2974 = vpop.f32.mrf.mxu0
        %v2975 = vadd.f32 %v2926, %v2974
        %2976 = vmatmul.bf16.gmra.mxu0 %v1939
        %v2977 = vpop.f32.mrf.mxu0
        %v2978 = vadd.f32 %v2929, %v2977
        %v2979 = vpop.f32.mrf.mxu0
        %v2980 = vadd.f32 %v2931, %v2979
        %2981 = vmatmul.bf16.gmra.mxu0 %v1940
        %v2982 = vpop.f32.mrf.mxu0
        %v2983 = vadd.f32 %v2934, %v2982
        %v2984 = vpop.f32.mrf.mxu0
        %v2985 = vadd.f32 %v2936, %v2984
        %2986 = vdwg.mxu0
        %v2987 = vadd.f32 %v2948, %v2095
        %v2988 = vadd.f32 %v2950, %v2096
        %v2989 = vadd.f32 %v2953, %v2097
        %v2990 = vadd.f32 %v2955, %v2098
        %v2991 = vadd.f32 %v2958, %v2099
        %v2992 = vadd.f32 %v2960, %v2100
        %v2993 = vadd.f32 %v2963, %v2101
        %v2994 = vadd.f32 %v2965, %v2102
        %v2995 = vadd.f32 %v2968, %v2103
        %v2996 = vadd.f32 %v2970, %v2104
        %v2997 = vadd.f32 %v2973, %v2105
        %v2998 = vadd.f32 %v2975, %v2106
        %v2999 = vadd.f32 %v2978, %v2107
        %v3000 = vadd.f32 %v2980, %v2108
        %v3001 = vadd.f32 %v2983, %v2109
        %v3002 = vadd.f32 %v2985, %v2110
        %v3003 = vmax.f32 %v2987, 0.0
        %v3004 = vmax.f32 %v2988, 0.0
        %v3005 = vmax.f32 %v2989, 0.0
        %v3006 = vmax.f32 %v2990, 0.0
        %v3007 = vmax.f32 %v2991, 0.0
        %v3008 = vmax.f32 %v2992, 0.0
        %v3009 = vmax.f32 %v2993, 0.0
        %v3010 = vmax.f32 %v2994, 0.0
        %v3011 = vmax.f32 %v2995, 0.0
        %v3012 = vmax.f32 %v2996, 0.0
        %v3013 = vmax.f32 %v2997, 0.0
        %v3014 = vmax.f32 %v2998, 0.0
        %v3015 = vmax.f32 %v2999, 0.0
        %v3016 = vmax.f32 %v3000, 0.0
        %v3017 = vmax.f32 %v3001, 0.0
        %v3018 = vmax.f32 %v3002, 0.0
        %v3019 = vpack.c.bf16 %v3003, %v3003
        %v3020 = vpack.c.bf16 %v3004, %v3004
        %v3021 = vpack.c.bf16 %v3005, %v3005
        %v3022 = vpack.c.bf16 %v3006, %v3006
        %v3023 = vpack.c.bf16 %v3007, %v3007
        %v3024 = vpack.c.bf16 %v3008, %v3008
        %v3025 = vpack.c.bf16 %v3009, %v3009
        %v3026 = vpack.c.bf16 %v3010, %v3010
        %v3027 = vpack.c.bf16 %v3011, %v3011
        %v3028 = vpack.c.bf16 %v3012, %v3012
        %v3029 = vpack.c.bf16 %v3013, %v3013
        %v3030 = vpack.c.bf16 %v3014, %v3014
        %v3031 = vpack.c.bf16 %v3015, %v3015
        %v3032 = vpack.c.bf16 %v3016, %v3016
        %v3033 = vpack.c.bf16 %v3017, %v3017
        %v3034 = vpack.c.bf16 %v3018, %v3018
        %3035 = vst [vmem:[%s291] sm:$0xf] %v3019
        %3036 = vst [vmem:[%s291 + $0x4] sm:$0xf] %v3020
        %3037 = vst [vmem:[%s291 + $0x8] sm:$0xf] %v3021
        %3038 = vst [vmem:[%s291 + $0xc] sm:$0xf] %v3022
        %3039 = vst [vmem:[%s291 + $0x10] sm:$0xf] %v3023
        %3040 = vst [vmem:[%s291 + $0x14] sm:$0xf] %v3024
        %3041 = vst [vmem:[%s291 + $0x18] sm:$0xf] %v3025
        %3042 = vst [vmem:[%s291 + $0x1c] sm:$0xf] %v3026
        %3043 = vst [vmem:[%s291 + $0x20] sm:$0xf] %v3027
        %3044 = vst [vmem:[%s291 + $0x24] sm:$0xf] %v3028
        %3045 = vst [vmem:[%s291 + $0x28] sm:$0xf] %v3029
        %3046 = vst [vmem:[%s291 + $0x2c] sm:$0xf] %v3030
        %3047 = vst [vmem:[%s291 + $0x30] sm:$0xf] %v3031
        %3048 = vst [vmem:[%s291 + $0x34] sm:$0xf] %v3032
        %3049 = vst [vmem:[%s291 + $0x38] sm:$0xf] %v3033
        %3050 = vst [vmem:[%s291 + $0x3c] sm:$0xf] %v3034
        %s3051 = sand.u32 %s155, 1
        %s3052 = scalar_lea.sflag [#allocation5], %s3051
        %s3053 = sand.u32 %s155, 1
        %s3054 = smul.addr %s3053, 64
        %s3055 = scalar_lea.vmem [#allocation9], %s3054
        // Predicated region
        $region61: #{tpu_custom_call.1} parent=39 // pred_check
          %p3056 = pneg %p165
        $region62: #{tpu_custom_call.1} parent=39 // pred_check_branch
          %3058 = sbr.rel (%p3056) target = $region64
        $region63: #{tpu_custom_call.1} parent=39 // pred_region
          %s3059 = smul.u32 8, %s28
          %3061 = vsyncadd %s3052, 0
          %s3062 = smul.addr %s3059, 2
          %s3063 = smul.addr %s27, 32
          %s3064 = sadd.s32 %s3062, %s3063
          %s3065 = smul.addr %s3064, 4
          %s3066 = scalar_lea.hbm %s5, %s3065
          %s3067 = sshll.u32 %s3055, 4
          %s3068 = int_to_ptr.vmem [resolvable:$true] %s3067
          %s3069 = sshll.u32 %s3066, 4
          %s3070 = int_to_ptr.hbm [resolvable:$true] %s3069
          %3075 = dma.vmem_to_hbm [thread:$0]  %s3068, 1024, %s3070, %s3052, 64, 64, 4
        $region64: #{tpu_custom_call.1} parent=39 // pred_fallthru
          _
      $region40: #{tpu_custom_call.1} parent=5 // pred_fallthru
        _
      %p3076 = scmp.le.s32.totalorder 2, %s18
      // Predicated region
      $region65: #{tpu_custom_call.1} parent=5 // pred_check
        %p3077 = pneg %p3076
      $region66: #{tpu_custom_call.1} parent=5 // pred_check_branch
        %3079 = sbr.rel (%p3077) target = $region68
      $region67: #{tpu_custom_call.1} parent=5 // pred_region
        %s3080 = ssub.s32 %s18, 2
        // Predicated region
        $region69: #{tpu_custom_call.1} parent=67 // pred_check
          %p3081 = pneg %p171
        $region70: #{tpu_custom_call.1} parent=67 // pred_check_branch
          %3083 = sbr.rel (%p3081) target = $region72
        $region71: #{tpu_custom_call.1} parent=67 // pred_region
          %s3084 = sand.u32 %s156, 1
          %s3085 = scalar_lea.sflag [#allocation5], %s3084
          %s3086 = sand.u32 %s156, 1
          %s3087 = smul.addr %s3086, 64
          %s3088 = scalar_lea.vmem [#allocation9], %s3087
          %3090 = dma.done %s3085, 1024
        $region72: #{tpu_custom_call.1} parent=67 // pred_fallthru
          _
      $region68: #{tpu_custom_call.1} parent=5 // pred_fallthru
        _
    $region6: #{tpu_custom_call.1} parent=1 // loop_footer
      %s22 = sadd.s32 1, %s18
    $region7: #{tpu_custom_call.1} parent=1 // loop_footer_branch
      %17 = sbr.rel target = $region3
    $region8: #{tpu_custom_call.1} parent=1 // loop_exit
      _
    %3091 = vsyncpa [#allocation4], 1
    %s3092 = scalar_lea.sflag [#allocation4], 1
    %3093 = vsyncpa %s3092, 1
    %3094 = vsyncpa [#allocation7], 1
    %3095 = vsyncpa [#allocation5], 1
    %s3096 = scalar_lea.sflag [#allocation5], 1
    %3097 = vsyncpa %s3096, 1

// kernel: tpu_custom_call.1
$region0: #{tpu_custom_call.1}
  #allocation0 [shape = 'u32[]', space=smem, size = 0x4, offset = 0x4, fixed_abs, tag = 'smem constant byte address 0x4 - core index']
  #allocation1 [shape = 'u32[72,128]{1,0:T(1,128)}', space=vmem, size = 0x9000, scoped, tag = 'internal scratch']
  #allocation2 [shape = 'bf16[10,16,128]{2,1,0:T(8,128)(2,1)}', space=vmem, size = 0xa000, scoped, tag = 'scratch operand']
  %s0 = inlined_call_operand.hbm [shape: bf16[2,20,16,128], index: 0, kind: input, shape index: {}]
  %s1 = inlined_call_operand.hbm [shape: bf16[1152,128], index: 1, kind: input, shape index: {}]
  %s2 = inlined_call_operand.vmem [shape: f32[1,128], index: 2, kind: input, shape index: {}]
  %s3 = inlined_call_operand.hbm [shape: bf16[1152,128], index: 3, kind: input, shape index: {}]
  %s4 = inlined_call_operand.vmem [shape: f32[1,128], index: 4, kind: input, shape index: {}]
  %s5 = inlined_call_operand.hbm [shape: bf16[2,16,16,128], index: 5, kind: output, shape index: {}]
  %s6 = sld [smem:[#allocation0]]
  $region73: #{tpu_custom_call.1} parent=0
    _
  %s8 = ssub.s32 1, %s6
  %s9 = scalar_select 0, %s8, %s6
  $region1: #{tpu_custom_call.1} parent=0
    #allocation3 [shape = 'u8[163840]{0}', space=vmem, size = 0x28000, scoped, tag = 'input window, operand 0']
    #allocation4 [shape = 's32[2]{0}', space=sflag, size = 0x8, scoped, tag = 'scoped memory for tpu_custom_call.1']
    #allocation5 [shape = 's32[2]{0}', space=sflag, size = 0x8, scoped, tag = 'scoped memory for tpu_custom_call.1']
    #allocation6 [shape = 'u8[294912]{0}', space=vmem, size = 0x48000, scoped, tag = 'input window, operand 1, single buffered']
    #allocation7 [shape = 's32[1]{0}', space=sflag, size = 0x4, scoped, tag = 'scoped memory for tpu_custom_call.1']
    #allocation8 [shape = 'u8[294912]{0}', space=vmem, size = 0x48000, scoped, tag = 'input window, operand 3, single buffered']
    #allocation9 [shape = 'u8[65536]{0}', space=vmem, size = 0x10000, scoped, tag = 'output window, operand 0']
    %10 = vsyncpa [#allocation4], 0
    %s11 = scalar_lea.sflag [#allocation4], 1
    %12 = vsyncpa %s11, 0
    %13 = vsyncpa [#allocation7], 0
    %14 = vsyncpa [#allocation5], 0
    %s15 = scalar_lea.sflag [#allocation5], 1
    %16 = vsyncpa %s15, 0
    loop: start=0, step=1, limit=6
    $region2: #{tpu_custom_call.1} parent=1 // loop_pre_header
      _
    $region3: #{tpu_custom_call.1} parent=1 // loop_header
      %s18 = sphi 0, %s22
      %p19 = scmp.ge.s32.totalorder %s18, 6
      %s25 = sphi 0, %s37
      %s26 = sphi 0, %s33
      %s27 = sphi 0, %s25
      %s28 = sphi 0, %s26
      %s29 = sphi 0, %s27
      %s30 = sphi 0, %s28
      %s40 = sphi 0, %s42
      %s43 = sphi 0, %s40
      %s44 = sphi 0, %s43
      %s60 = sphi 0, %s44
      %s64 = sphi 0, %s64
      %s66 = sphi 0, %s64
      %s67 = sphi 0, %s66
      %s81 = sphi 0, %s67
      %s85 = sphi 0, %s85
      %s87 = sphi 0, %s85
      %s88 = sphi 0, %s87
      %s102 = sphi 0, %s88
      %s106 = sphi 0, %s106
      %s108 = sphi 0, %s106
      %s109 = sphi 0, %s108
      %s123 = sphi 0, %s109
      %s127 = sphi 0, %s127
      %s129 = sphi 0, %s127
      %s130 = sphi 0, %s129
      %s144 = sphi 0, %s130
      %s152 = sphi 0, %s154
      %s155 = sphi 0, %s152
      %s156 = sphi 0, %s155
      %s172 = sphi 0, %s156
    $region4: #{tpu_custom_call.1} parent=1 // loop_header_branch
      %21 = sbr.rel (%p19) target = $region8
    $region5: #{tpu_custom_call.1} parent=1 // loop_body
      %s23 = ssub.s32 %s18, 1
      %s24 = ssub.s32 %s18, 2
      %s31 = sadd.s32 1, %s26
      %p32 = scmp.ge.s32.totalorder %s31, 2
      %s33 = scalar_select %p32, 0, %s31
      %s34 = sadd.s32 1, %s25
      %s35 = scalar_select %p32, %s34, %s25
      %p36 = scmp.ge.s32.totalorder %s35, 2
      %s37 = scalar_select %p36, 0, %s35
      %s38 = ssub.s32 %s25, %s37
      %p39 = scmp.eq.s32.totalorder %s38, 0
      %s41 = sadd.s32 %s40, 1
      %s42 = scalar_select %p39, %s40, %s41
      %p45 = pneg %p39
      %p46 = scmp.eq.s32.totalorder %s18, 3
      %p47 = por %p45, %p46
      %p48 = scmp.ne.s32.totalorder %s40, %s43
      %p49 = scmp.eq.s32.totalorder %s18, 0
      %p50 = por %p48, %p49
      %p51 = scmp.ne.s32.totalorder %s40, %s43
      %p52 = scmp.eq.s32.totalorder %s23, 3
      %p53 = por %p51, %p52
      %p54 = scmp.ne.s32.totalorder %s43, %s44
      %p55 = scmp.eq.s32.totalorder %s23, 0
      %p56 = por %p54, %p55
      %p57 = scmp.ne.s32.totalorder %s43, %s44
      %p58 = scmp.eq.s32.totalorder %s24, 3
      %p59 = por %p57, %p58
      %p61 = scmp.ne.s32.totalorder %s44, %s60
      %p62 = scmp.eq.s32.totalorder %s24, 0
      %p63 = por %p61, %p62
      %s65 = sadd.s32 %s64, 1
      %p68 = scmp.eq.s32.totalorder %s18, 3
      %p69 = scmp.ne.s32.totalorder %s64, %s66
      %p70 = scmp.eq.s32.totalorder %s18, 0
      %p71 = por %p69, %p70
      %p72 = scmp.ne.s32.totalorder %s64, %s66
      %p73 = scmp.eq.s32.totalorder %s23, 3
      %p74 = por %p72, %p73
      %p75 = scmp.ne.s32.totalorder %s66, %s67
      %p76 = scmp.eq.s32.totalorder %s23, 0
      %p77 = por %p75, %p76
      %p78 = scmp.ne.s32.totalorder %s66, %s67
      %p79 = scmp.eq.s32.totalorder %s24, 3
      %p80 = por %p78, %p79
      %p82 = scmp.ne.s32.totalorder %s67, %s81
      %p83 = scmp.eq.s32.totalorder %s24, 0
      %p84 = por %p82, %p83
      %s86 = sadd.s32 %s85, 1
      %p89 = scmp.eq.s32.totalorder %s18, 3
      %p90 = scmp.ne.s32.totalorder %s85, %s87
      %p91 = scmp.eq.s32.totalorder %s18, 0
      %p92 = por %p90, %p91
      %p93 = scmp.ne.s32.totalorder %s85, %s87
      %p94 = scmp.eq.s32.totalorder %s23, 3
      %p95 = por %p93, %p94
      %p96 = scmp.ne.s32.totalorder %s87, %s88
      %p97 = scmp.eq.s32.totalorder %s23, 0
      %p98 = por %p96, %p97
      %p99 = scmp.ne.s32.totalorder %s87, %s88
      %p100 = scmp.eq.s32.totalorder %s24, 3
      %p101 = por %p99, %p100
      %p103 = scmp.ne.s32.totalorder %s88, %s102
      %p104 = scmp.eq.s32.totalorder %s24, 0
      %p105 = por %p103, %p104
      %s107 = sadd.s32 %s106, 1
      %p110 = scmp.eq.s32.totalorder %s18, 3
      %p111 = scmp.ne.s32.totalorder %s106, %s108
      %p112 = scmp.eq.s32.totalorder %s18, 0
      %p113 = por %p111, %p112
      %p114 = scmp.ne.s32.totalorder %s106, %s108
      %p115 = scmp.eq.s32.totalorder %s23, 3
      %p116 = por %p114, %p115
      %p117 = scmp.ne.s32.totalorder %s108, %s109
      %p118 = scmp.eq.s32.totalorder %s23, 0
      %p119 = por %p117, %p118
      %p120 = scmp.ne.s32.totalorder %s108, %s109
      %p121 = scmp.eq.s32.totalorder %s24, 3
      %p122 = por %p120, %p121
      %p124 = scmp.ne.s32.totalorder %s109, %s123
      %p125 = scmp.eq.s32.totalorder %s24, 0
      %p126 = por %p124, %p125
      %s128 = sadd.s32 %s127, 1
      %p131 = scmp.eq.s32.totalorder %s18, 3
      %p132 = scmp.ne.s32.totalorder %s127, %s129
      %p133 = scmp.eq.s32.totalorder %s18, 0
      %p134 = por %p132, %p133
      %p135 = scmp.ne.s32.totalorder %s127, %s129
      %p136 = scmp.eq.s32.totalorder %s23, 3
      %p137 = por %p135, %p136
      %p138 = scmp.ne.s32.totalorder %s129, %s130
      %p139 = scmp.eq.s32.totalorder %s23, 0
      %p140 = por %p138, %p139
      %p141 = scmp.ne.s32.totalorder %s129, %s130
      %p142 = scmp.eq.s32.totalorder %s24, 3
      %p143 = por %p141, %p142
      %p145 = scmp.ne.s32.totalorder %s130, %s144
      %p146 = scmp.eq.s32.totalorder %s24, 0
      %p147 = por %p145, %p146
      %s148 = ssub.s32 %s25, %s37
      %s149 = ssub.s32 %s26, %s33
      %s150 = sor.u32 %s148, %s149
      %p151 = scmp.eq.s32.totalorder %s150, 0
      %s153 = sadd.s32 %s152, 1
      %s154 = scalar_select %p151, %s152, %s153
      %p157 = pneg %p151
      %p158 = scmp.eq.s32.totalorder %s18, 3
      %p159 = por %p157, %p158
      %p160 = scmp.ne.s32.totalorder %s152, %s155
      %p161 = scmp.eq.s32.totalorder %s18, 0
      %p162 = por %p160, %p161
      %p163 = scmp.ne.s32.totalorder %s152, %s155
      %p164 = scmp.eq.s32.totalorder %s23, 3
      %p165 = por %p163, %p164
      %p166 = scmp.ne.s32.totalorder %s155, %s156
      %p167 = scmp.eq.s32.totalorder %s23, 0
      %p168 = por %p166, %p167
      %p169 = scmp.ne.s32.totalorder %s155, %s156
      %p170 = scmp.eq.s32.totalorder %s24, 3
      %p171 = por %p169, %p170
      %p173 = scmp.ne.s32.totalorder %s156, %s172
      %p174 = scmp.eq.s32.totalorder %s24, 0
      %p175 = por %p173, %p174
      %p176 = scmp.le.s32.totalorder 1, %s18
      %p177 = scmp.lt.s32.totalorder %s18, 5
      %p178 = pnand %p176, %p177
      %p179 = pneg %p178
      // Predicated region
      $region9: #{tpu_custom_call.1} parent=5 // pred_check
        _
      $region10: #{tpu_custom_call.1} parent=5 // pred_check_branch
        %181 = sbr.rel (%p178) target = $region12
      $region11: #{tpu_custom_call.1} parent=5 // pred_region
        %s182 = ssub.s32 %s18, 1
        // Predicated region
        $region13: #{tpu_custom_call.1} parent=11 // pred_check
          %p183 = pneg %p77
        $region14: #{tpu_custom_call.1} parent=11 // pred_check_branch
          %185 = sbr.rel (%p183) target = $region16
        $region15: #{tpu_custom_call.1} parent=11 // pred_region
          %187 = vsyncadd [#allocation7], 0
          %s188 = sshll.u32 %s1, 4
          %s189 = int_to_ptr.hbm [resolvable:$true] %s188
          %s190 = sshll.u32 [#allocation6], 4
          %s191 = int_to_ptr.vmem [resolvable:$true] %s190
          %196 = dma.hbm_to_vmem [thread:$0]  %s189, 9216, %s191, [#allocation7], 64, 64, 4
        $region16: #{tpu_custom_call.1} parent=11 // pred_fallthru
          _
        // Predicated region
        $region17: #{tpu_custom_call.1} parent=11 // pred_check
          %p197 = pneg %p98
        $region18: #{tpu_custom_call.1} parent=11 // pred_check_branch
          %199 = sbr.rel (%p197) target = $region20
        $region19: #{tpu_custom_call.1} parent=11 // pred_region
          _
        $region20: #{tpu_custom_call.1} parent=11 // pred_fallthru
          _
        // Predicated region
        $region21: #{tpu_custom_call.1} parent=11 // pred_check
          %p200 = pneg %p119
        $region22: #{tpu_custom_call.1} parent=11 // pred_check_branch
          %202 = sbr.rel (%p200) target = $region24
        $region23: #{tpu_custom_call.1} parent=11 // pred_region
          %204 = vsyncadd [#allocation7], 0
          %s205 = sshll.u32 %s3, 4
          %s206 = int_to_ptr.hbm [resolvable:$true] %s205
          %s207 = sshll.u32 [#allocation8], 4
          %s208 = int_to_ptr.vmem [resolvable:$true] %s207
          %213 = dma.hbm_to_vmem [thread:$0]  %s206, 9216, %s208, [#allocation7], 64, 64, 4
        $region24: #{tpu_custom_call.1} parent=11 // pred_fallthru
          _
        // Predicated region
        $region25: #{tpu_custom_call.1} parent=11 // pred_check
          %p214 = pneg %p140
        $region26: #{tpu_custom_call.1} parent=11 // pred_check_branch
          %216 = sbr.rel (%p214) target = $region28
        $region27: #{tpu_custom_call.1} parent=11 // pred_region
          _
        $region28: #{tpu_custom_call.1} parent=11 // pred_fallthru
          _
      $region12: #{tpu_custom_call.1} parent=5 // pred_fallthru
        _
      %p217 = scmp.lt.s32.totalorder %s18, 4
      // Predicated region
      $region29: #{tpu_custom_call.1} parent=5 // pred_check
        %p218 = pneg %p217
      $region30: #{tpu_custom_call.1} parent=5 // pred_check_branch
        %220 = sbr.rel (%p218) target = $region32
      $region31: #{tpu_custom_call.1} parent=5 // pred_region
        // Predicated region
        $region33: #{tpu_custom_call.1} parent=31 // pred_check
          %p221 = pneg %p50
        $region34: #{tpu_custom_call.1} parent=31 // pred_check_branch
          %223 = sbr.rel (%p221) target = $region36
        $region35: #{tpu_custom_call.1} parent=31 // pred_region
          %s224 = sand.u32 %s40, 1
          %s225 = scalar_lea.sflag [#allocation4], %s224
          %s226 = sand.u32 %s40, 1
          %s227 = smul.addr %s226, 160
          %s228 = scalar_lea.vmem [#allocation3], %s227
          %230 = vsyncadd %s225, 0
          %s231 = smul.addr %s25, 40
          %s232 = smul.addr %s231, 4
          %s233 = scalar_lea.hbm %s0, %s232
          %s234 = sshll.u32 %s233, 4
          %s235 = int_to_ptr.hbm [resolvable:$true] %s234
          %s236 = sshll.u32 %s228, 4
          %s237 = int_to_ptr.vmem [resolvable:$true] %s236
          %242 = dma.hbm_to_vmem [thread:$0]  %s235, 2560, %s237, %s225, 64, 64, 4
        $region36: #{tpu_custom_call.1} parent=31 // pred_fallthru
          _
      $region32: #{tpu_custom_call.1} parent=5 // pred_fallthru
        _
      %p243 = scmp.le.s32.totalorder 1, %s18
      %p244 = scmp.lt.s32.totalorder %s18, 5
      %p245 = pnand %p243, %p244
      %p246 = pneg %p245
      // Predicated region
      $region37: #{tpu_custom_call.1} parent=5 // pred_check
        _
      $region38: #{tpu_custom_call.1} parent=5 // pred_check_branch
        %248 = sbr.rel (%p245) target = $region40
      $region39: #{tpu_custom_call.1} parent=5 // pred_region
        %s249 = ssub.s32 %s18, 1
        %s250 = sand.u32 %s43, 1
        %s251 = scalar_lea.sflag [#allocation4], %s250
        %s252 = sand.u32 %s43, 1
        %s253 = smul.addr %s252, 160
        %s254 = scalar_lea.vmem [#allocation3], %s253
        // Predicated region
        $region41: #{tpu_custom_call.1} parent=39 // pred_check
          %p255 = pneg %p56
        $region42: #{tpu_custom_call.1} parent=39 // pred_check_branch
          %257 = sbr.rel (%p255) target = $region44
        $region43: #{tpu_custom_call.1} parent=39 // pred_region
          %259 = dma.done %s251, 2560
        $region44: #{tpu_custom_call.1} parent=39 // pred_fallthru
          _
        // Predicated region
        $region45: #{tpu_custom_call.1} parent=39 // pred_check
          %p260 = pneg %p77
        $region46: #{tpu_custom_call.1} parent=39 // pred_check_branch
          %262 = sbr.rel (%p260) target = $region48
        $region47: #{tpu_custom_call.1} parent=39 // pred_region
          %264 = dma.done [#allocation7], 9216
        $region48: #{tpu_custom_call.1} parent=39 // pred_fallthru
          _
        // Predicated region
        $region49: #{tpu_custom_call.1} parent=39 // pred_check
          %p265 = pneg %p119
        $region50: #{tpu_custom_call.1} parent=39 // pred_check_branch
          %267 = sbr.rel (%p265) target = $region52
        $region51: #{tpu_custom_call.1} parent=39 // pred_region
          %269 = dma.done [#allocation7], 9216
        $region52: #{tpu_custom_call.1} parent=39 // pred_fallthru
          _
        %s270 = sand.u32 %s43, 1
        %s271 = scalar_lea.sflag [#allocation4], %s270
        %s272 = sand.u32 %s43, 1
        %s273 = smul.addr %s272, 160
        %s274 = scalar_lea.vmem [#allocation3], %s273
        %p275 = pneg %p56
        %p276 = pneg %p53
        %p277 = pneg %p77
        %p278 = pneg %p74
        %p279 = pneg %p98
        %p280 = pneg %p95
        %p281 = pneg %p119
        %p282 = pneg %p116
        %p283 = pneg %p140
        %p284 = pneg %p137
        %p285 = pneg %p168
        %p286 = pneg %p165
        %s287 = sand.u32 %s155, 1
        %s288 = scalar_lea.sflag [#allocation5], %s287
        %s289 = sand.u32 %s155, 1
        %s290 = smul.addr %s289, 64
        %s291 = scalar_lea.vmem [#allocation9], %s290
        %s292 = smul.u32 8, %s28
        %s294 = smul.u32 %s28, 8
        %v295 = vld [vmem:[%s2] sm:$0x1]
        %v296 = vld [vmem:[%s4] sm:$0x1]
        %s297 = smul.u32 %s294, 2
        %s298 = smul.addr %s297, 4
        %s299 = scalar_lea.vmem %s254, %s298 [#allocation3]
        %v300 = vld [vmem:[%s299] sm:$0xf]
        %v301 = vld [vmem:[%s299 + $0x4] sm:$0xf]
        %v302 = vld [vmem:[%s299 + $0x8] sm:$0xf]
        %v303 = vld [vmem:[%s299 + $0xc] sm:$0xf]
        %v304 = vld [vmem:[%s299 + $0x10] sm:$0xf]
        %v305 = vld [vmem:[%s299 + $0x14] sm:$0xf]
        %v306 = vld [vmem:[%s299 + $0x18] sm:$0xf]
        %v307 = vld [vmem:[%s299 + $0x1c] sm:$0xf]
        %v308 = vld [vmem:[%s299 + $0x20] sm:$0xf]
        %v309 = vld [vmem:[%s299 + $0x24] sm:$0xf]
        %v310 = vld [vmem:[%s299 + $0x28] sm:$0xf]
        %v311 = vld [vmem:[%s299 + $0x2c] sm:$0xf]
        %v312 = vld [vmem:[%s299 + $0x30] sm:$0xf]
        %v313 = vld [vmem:[%s299 + $0x34] sm:$0xf]
        %v314 = vld [vmem:[%s299 + $0x38] sm:$0xf]
        %v315 = vld [vmem:[%s299 + $0x3c] sm:$0xf]
        %v316 = vld [vmem:[%s299 + $0x40] sm:$0xf]
        %v317 = vld [vmem:[%s299 + $0x44] sm:$0xf]
        %v318 = vld [vmem:[%s299 + $0x48] sm:$0xf]
        %v319 = vld [vmem:[%s299 + $0x4c] sm:$0xf]
        %v320 = vld [vmem:[%s299 + $0x50] sm:$0xf]
        %v321 = vld [vmem:[%s299 + $0x54] sm:$0xf]
        %v322 = vld [vmem:[%s299 + $0x58] sm:$0xf]
        %v323 = vld [vmem:[%s299 + $0x5c] sm:$0xf]
        %v348 = vunpack.c.l.b16 %v300
        %v349 = vunpack.c.l.b16 %v301
        %v350 = vunpack.c.l.b16 %v302
        %v351 = vunpack.c.l.b16 %v303
        %v352 = vunpack.c.l.b16 %v304
        %v353 = vunpack.c.l.b16 %v305
        %v354 = vunpack.c.l.b16 %v306
        %v355 = vunpack.c.l.b16 %v307
        %v356 = vunpack.c.l.b16 %v308
        %v357 = vunpack.c.l.b16 %v309
        %v358 = vunpack.c.l.b16 %v310
        %v359 = vunpack.c.l.b16 %v311
        %v360 = vunpack.c.l.b16 %v312
        %v361 = vunpack.c.l.b16 %v313
        %v362 = vunpack.c.l.b16 %v314
        %v363 = vunpack.c.l.b16 %v315
        %v364 = vunpack.c.l.b16 %v316
        %v365 = vunpack.c.l.b16 %v317
        %v366 = vunpack.c.l.b16 %v318
        %v367 = vunpack.c.l.b16 %v319
        %v368 = vunpack.c.l.b16 %v320
        %v369 = vunpack.c.l.b16 %v321
        %v370 = vunpack.c.l.b16 %v322
        %v371 = vunpack.c.l.b16 %v323
        %v372 = vpack.c.b16 %v349, %v348
        %v373 = vpack.c.b16 %v351, %v350
        %v374 = vpack.c.b16 %v353, %v352
        %v375 = vpack.c.b16 %v355, %v354
        %v376 = vpack.c.b16 %v357, %v356
        %v377 = vpack.c.b16 %v359, %v358
        %v378 = vpack.c.b16 %v361, %v360
        %v379 = vpack.c.b16 %v363, %v362
        %v380 = vpack.c.b16 %v365, %v364
        %v381 = vpack.c.b16 %v367, %v366
        %v382 = vpack.c.b16 %v369, %v368
        %v383 = vpack.c.b16 %v371, %v370
        %v385 = vshrl.u32 %v372, 16
        %v387 = vrot.slane %v385, 7
        %v388 = vshll.u32 %v372, 16
        %v390 = vor.u32 %v387, %v388
        %v392 = vshrl.u32 %v373, 16
        %v394 = vrot.slane %v392, 7
        %v395 = vshll.u32 %v373, 16
        %v397 = vor.u32 %v394, %v395
        %v399 = vshrl.u32 %v374, 16
        %v401 = vrot.slane %v399, 7
        %v402 = vshll.u32 %v374, 16
        %v404 = vor.u32 %v401, %v402
        %v406 = vshrl.u32 %v375, 16
        %v408 = vrot.slane %v406, 7
        %v409 = vshll.u32 %v375, 16
        %v411 = vor.u32 %v408, %v409
        %v413 = vshrl.u32 %v376, 16
        %v415 = vrot.slane %v413, 7
        %v416 = vshll.u32 %v376, 16
        %v418 = vor.u32 %v415, %v416
        %v420 = vshrl.u32 %v377, 16
        %v422 = vrot.slane %v420, 7
        %v423 = vshll.u32 %v377, 16
        %v425 = vor.u32 %v422, %v423
        %v427 = vshrl.u32 %v378, 16
        %v429 = vrot.slane %v427, 7
        %v430 = vshll.u32 %v378, 16
        %v432 = vor.u32 %v429, %v430
        %v434 = vshrl.u32 %v379, 16
        %v436 = vrot.slane %v434, 7
        %v437 = vshll.u32 %v379, 16
        %v439 = vor.u32 %v436, %v437
        %v441 = vshrl.u32 %v380, 16
        %v443 = vrot.slane %v441, 7
        %v444 = vshll.u32 %v380, 16
        %v446 = vor.u32 %v443, %v444
        %v448 = vshrl.u32 %v381, 16
        %v450 = vrot.slane %v448, 7
        %v451 = vshll.u32 %v381, 16
        %v453 = vor.u32 %v450, %v451
        %v455 = vshrl.u32 %v382, 16
        %v457 = vrot.slane %v455, 7
        %v458 = vshll.u32 %v382, 16
        %v460 = vor.u32 %v457, %v458
        %v462 = vshrl.u32 %v383, 16
        %v464 = vrot.slane %v462, 7
        %v465 = vshll.u32 %v383, 16
        %v467 = vor.u32 %v464, %v465
        %vm480 = vcmask 1040384
        %vm481 = vsmask.f32 256
        %vm482 = vmand %vm480, %vm481
        %v483 = vsel %vm482, 0, %v390
        %v484 = vsel %vm482, 0, %v397
        %v485 = vsel %vm482, 0, %v404
        %v486 = vsel %vm482, 0, %v411
        %v487 = vsel %vm482, 0, %v418
        %v488 = vsel %vm482, 0, %v425
        %v489 = vsel %vm482, 0, %v432
        %v490 = vsel %vm482, 0, %v439
        %v491 = vsel %vm482, 0, %v446
        %v492 = vsel %vm482, 0, %v453
        %v493 = vsel %vm482, 0, %v460
        %v494 = vsel %vm482, 0, %v467
        %v495 = vrot.slane %v388, 1
        %v496 = vor.u32 %v385, %v495
        %v497 = vrot.slane %v395, 1
        %v498 = vor.u32 %v392, %v497
        %v499 = vrot.slane %v402, 1
        %v500 = vor.u32 %v399, %v499
        %v501 = vrot.slane %v409, 1
        %v502 = vor.u32 %v406, %v501
        %v503 = vrot.slane %v416, 1
        %v504 = vor.u32 %v413, %v503
        %v505 = vrot.slane %v423, 1
        %v506 = vor.u32 %v420, %v505
        %v507 = vrot.slane %v430, 1
        %v508 = vor.u32 %v427, %v507
        %v509 = vrot.slane %v437, 1
        %v510 = vor.u32 %v434, %v509
        %v511 = vrot.slane %v444, 1
        %v512 = vor.u32 %v441, %v511
        %v513 = vrot.slane %v451, 1
        %v514 = vor.u32 %v448, %v513
        %v515 = vrot.slane %v458, 1
        %v516 = vor.u32 %v455, %v515
        %v517 = vrot.slane %v465, 1
        %v518 = vor.u32 %v462, %v517
        %vm531 = vcmask 1047552
        %vm532 = vsmask.f32 7424
        %vm533 = vmand %vm531, %vm532
        %v534 = vsel %vm533, %v496, 0
        %v535 = vsel %vm533, %v498, 0
        %v536 = vsel %vm533, %v500, 0
        %v537 = vsel %vm533, %v502, 0
        %v538 = vsel %vm533, %v504, 0
        %v539 = vsel %vm533, %v506, 0
        %v540 = vsel %vm533, %v508, 0
        %v541 = vsel %vm533, %v510, 0
        %v542 = vsel %vm533, %v512, 0
        %v543 = vsel %vm533, %v514, 0
        %v544 = vsel %vm533, %v516, 0
        %v545 = vsel %vm533, %v518, 0
        %v558 = vld [vmem:[#allocation6] sm:$0xf]
        %v559 = vld [vmem:[#allocation6 + $0x4] sm:$0xf]
        %v560 = vld [vmem:[#allocation6 + $0x8] sm:$0xf]
        %v561 = vld [vmem:[#allocation6 + $0xc] sm:$0xf]
        %v562 = vld [vmem:[#allocation6 + $0x10] sm:$0xf]
        %v563 = vld [vmem:[#allocation6 + $0x14] sm:$0xf]
        %v564 = vld [vmem:[#allocation6 + $0x18] sm:$0xf]
        %v565 = vld [vmem:[#allocation6 + $0x1c] sm:$0xf]
        %v566 = vld [vmem:[#allocation6 + $0x20] sm:$0xf]
        %v567 = vld [vmem:[#allocation6 + $0x24] sm:$0xf]
        %v568 = vld [vmem:[#allocation6 + $0x28] sm:$0xf]
        %v569 = vld [vmem:[#allocation6 + $0x2c] sm:$0xf]
        %v570 = vld [vmem:[#allocation6 + $0x30] sm:$0xf]
        %v571 = vld [vmem:[#allocation6 + $0x34] sm:$0xf]
        %v572 = vld [vmem:[#allocation6 + $0x38] sm:$0xf]
        %v573 = vld [vmem:[#allocation6 + $0x3c] sm:$0xf]
        %v574 = vld [vmem:[#allocation6 + $0x40] sm:$0xf]
        %v575 = vld [vmem:[#allocation6 + $0x44] sm:$0xf]
        %v576 = vld [vmem:[#allocation6 + $0x48] sm:$0xf]
        %v577 = vld [vmem:[#allocation6 + $0x4c] sm:$0xf]
        %v578 = vld [vmem:[#allocation6 + $0x50] sm:$0xf]
        %v579 = vld [vmem:[#allocation6 + $0x54] sm:$0xf]
        %v580 = vld [vmem:[#allocation6 + $0x58] sm:$0xf]
        %v581 = vld [vmem:[#allocation6 + $0x5c] sm:$0xf]
        %v582 = vld [vmem:[#allocation6 + $0x60] sm:$0xf]
        %v583 = vld [vmem:[#allocation6 + $0x64] sm:$0xf]
        %v584 = vld [vmem:[#allocation6 + $0x68] sm:$0xf]
        %v585 = vld [vmem:[#allocation6 + $0x6c] sm:$0xf]
        %v586 = vld [vmem:[#allocation6 + $0x70] sm:$0xf]
        %v587 = vld [vmem:[#allocation6 + $0x74] sm:$0xf]
        %v588 = vld [vmem:[#allocation6 + $0x78] sm:$0xf]
        %v589 = vld [vmem:[#allocation6 + $0x7c] sm:$0xf]
        %v590 = vld [vmem:[#allocation6 + $0x80] sm:$0xf]
        %v591 = vld [vmem:[#allocation6 + $0x84] sm:$0xf]
        %v592 = vld [vmem:[#allocation6 + $0x88] sm:$0xf]
        %v593 = vld [vmem:[#allocation6 + $0x8c] sm:$0xf]
        %v594 = vld [vmem:[#allocation6 + $0x90] sm:$0xf]
        %v595 = vld [vmem:[#allocation6 + $0x94] sm:$0xf]
        %v596 = vld [vmem:[#allocation6 + $0x98] sm:$0xf]
        %v597 = vld [vmem:[#allocation6 + $0x9c] sm:$0xf]
        %v598 = vld [vmem:[#allocation6 + $0xa0] sm:$0xf]
        %v599 = vld [vmem:[#allocation6 + $0xa4] sm:$0xf]
        %v600 = vld [vmem:[#allocation6 + $0xa8] sm:$0xf]
        %v601 = vld [vmem:[#allocation6 + $0xac] sm:$0xf]
        %v602 = vld [vmem:[#allocation6 + $0xb0] sm:$0xf]
        %v603 = vld [vmem:[#allocation6 + $0xb4] sm:$0xf]
        %v604 = vld [vmem:[#allocation6 + $0xb8] sm:$0xf]
        %v605 = vld [vmem:[#allocation6 + $0xbc] sm:$0xf]
        %v606 = vld [vmem:[#allocation6 + $0xc0] sm:$0xf]
        %v607 = vld [vmem:[#allocation6 + $0xc4] sm:$0xf]
        %v608 = vld [vmem:[#allocation6 + $0xc8] sm:$0xf]
        %v609 = vld [vmem:[#allocation6 + $0xcc] sm:$0xf]
        %v610 = vld [vmem:[#allocation6 + $0xd0] sm:$0xf]
        %v611 = vld [vmem:[#allocation6 + $0xd4] sm:$0xf]
        %v612 = vld [vmem:[#allocation6 + $0xd8] sm:$0xf]
        %v613 = vld [vmem:[#allocation6 + $0xdc] sm:$0xf]
        %v614 = vld [vmem:[#allocation6 + $0xe0] sm:$0xf]
        %v615 = vld [vmem:[#allocation6 + $0xe4] sm:$0xf]
        %v616 = vld [vmem:[#allocation6 + $0xe8] sm:$0xf]
        %v617 = vld [vmem:[#allocation6 + $0xec] sm:$0xf]
        %v618 = vld [vmem:[#allocation6 + $0xf0] sm:$0xf]
        %v619 = vld [vmem:[#allocation6 + $0xf4] sm:$0xf]
        %v620 = vld [vmem:[#allocation6 + $0xf8] sm:$0xf]
        %v621 = vld [vmem:[#allocation6 + $0xfc] sm:$0xf]
        %v622 = vld [vmem:[#allocation6 + $0x100] sm:$0xf]
        %v623 = vld [vmem:[#allocation6 + $0x104] sm:$0xf]
        %v624 = vld [vmem:[#allocation6 + $0x108] sm:$0xf]
        %v625 = vld [vmem:[#allocation6 + $0x10c] sm:$0xf]
        %v626 = vld [vmem:[#allocation6 + $0x110] sm:$0xf]
        %v627 = vld [vmem:[#allocation6 + $0x114] sm:$0xf]
        %v628 = vld [vmem:[#allocation6 + $0x118] sm:$0xf]
        %v629 = vld [vmem:[#allocation6 + $0x11c] sm:$0xf]
        %v630 = vld [vmem:[#allocation6 + $0x120] sm:$0xf]
        %v631 = vld [vmem:[#allocation6 + $0x124] sm:$0xf]
        %v632 = vld [vmem:[#allocation6 + $0x128] sm:$0xf]
        %v633 = vld [vmem:[#allocation6 + $0x12c] sm:$0xf]
        %v634 = vld [vmem:[#allocation6 + $0x130] sm:$0xf]
        %v635 = vld [vmem:[#allocation6 + $0x134] sm:$0xf]
        %v636 = vld [vmem:[#allocation6 + $0x138] sm:$0xf]
        %v637 = vld [vmem:[#allocation6 + $0x13c] sm:$0xf]
        %v638 = vld [vmem:[#allocation6 + $0x140] sm:$0xf]
        %v639 = vld [vmem:[#allocation6 + $0x144] sm:$0xf]
        %v640 = vld [vmem:[#allocation6 + $0x148] sm:$0xf]
        %v641 = vld [vmem:[#allocation6 + $0x14c] sm:$0xf]
        %v642 = vld [vmem:[#allocation6 + $0x150] sm:$0xf]
        %v643 = vld [vmem:[#allocation6 + $0x154] sm:$0xf]
        %v644 = vld [vmem:[#allocation6 + $0x158] sm:$0xf]
        %v645 = vld [vmem:[#allocation6 + $0x15c] sm:$0xf]
        %v646 = vld [vmem:[#allocation6 + $0x160] sm:$0xf]
        %v647 = vld [vmem:[#allocation6 + $0x164] sm:$0xf]
        %v648 = vld [vmem:[#allocation6 + $0x168] sm:$0xf]
        %v649 = vld [vmem:[#allocation6 + $0x16c] sm:$0xf]
        %v650 = vld [vmem:[#allocation6 + $0x170] sm:$0xf]
        %v651 = vld [vmem:[#allocation6 + $0x174] sm:$0xf]
        %v652 = vld [vmem:[#allocation6 + $0x178] sm:$0xf]
        %v653 = vld [vmem:[#allocation6 + $0x17c] sm:$0xf]
        %v654 = vld [vmem:[#allocation6 + $0x180] sm:$0xf]
        %v655 = vld [vmem:[#allocation6 + $0x184] sm:$0xf]
        %v656 = vld [vmem:[#allocation6 + $0x188] sm:$0xf]
        %v657 = vld [vmem:[#allocation6 + $0x18c] sm:$0xf]
        %v658 = vld [vmem:[#allocation6 + $0x190] sm:$0xf]
        %v659 = vld [vmem:[#allocation6 + $0x194] sm:$0xf]
        %v660 = vld [vmem:[#allocation6 + $0x198] sm:$0xf]
        %v661 = vld [vmem:[#allocation6 + $0x19c] sm:$0xf]
        %v662 = vld [vmem:[#allocation6 + $0x1a0] sm:$0xf]
        %v663 = vld [vmem:[#allocation6 + $0x1a4] sm:$0xf]
        %v664 = vld [vmem:[#allocation6 + $0x1a8] sm:$0xf]
        %v665 = vld [vmem:[#allocation6 + $0x1ac] sm:$0xf]
        %v666 = vld [vmem:[#allocation6 + $0x1b0] sm:$0xf]
        %v667 = vld [vmem:[#allocation6 + $0x1b4] sm:$0xf]
        %v668 = vld [vmem:[#allocation6 + $0x1b8] sm:$0xf]
        %v669 = vld [vmem:[#allocation6 + $0x1bc] sm:$0xf]
        %v670 = vld [vmem:[#allocation6 + $0x1c0] sm:$0xf]
        %v671 = vld [vmem:[#allocation6 + $0x1c4] sm:$0xf]
        %v672 = vld [vmem:[#allocation6 + $0x1c8] sm:$0xf]
        %v673 = vld [vmem:[#allocation6 + $0x1cc] sm:$0xf]
        %v674 = vld [vmem:[#allocation6 + $0x1d0] sm:$0xf]
        %v675 = vld [vmem:[#allocation6 + $0x1d4] sm:$0xf]
        %v676 = vld [vmem:[#allocation6 + $0x1d8] sm:$0xf]
        %v677 = vld [vmem:[#allocation6 + $0x1dc] sm:$0xf]
        %v678 = vld [vmem:[#allocation6 + $0x1e0] sm:$0xf]
        %v679 = vld [vmem:[#allocation6 + $0x1e4] sm:$0xf]
        %v680 = vld [vmem:[#allocation6 + $0x1e8] sm:$0xf]
        %v681 = vld [vmem:[#allocation6 + $0x1ec] sm:$0xf]
        %v682 = vld [vmem:[#allocation6 + $0x1f0] sm:$0xf]
        %v683 = vld [vmem:[#allocation6 + $0x1f4] sm:$0xf]
        %v684 = vld [vmem:[#allocation6 + $0x1f8] sm:$0xf]
        %v685 = vld [vmem:[#allocation6 + $0x1fc] sm:$0xf]
        %v686 = vld [vmem:[#allocation6 + $0x200] sm:$0xf]
        %v687 = vld [vmem:[#allocation6 + $0x204] sm:$0xf]
        %v688 = vld [vmem:[#allocation6 + $0x208] sm:$0xf]
        %v689 = vld [vmem:[#allocation6 + $0x20c] sm:$0xf]
        %v690 = vld [vmem:[#allocation6 + $0x210] sm:$0xf]
        %v691 = vld [vmem:[#allocation6 + $0x214] sm:$0xf]
        %v692 = vld [vmem:[#allocation6 + $0x218] sm:$0xf]
        %v693 = vld [vmem:[#allocation6 + $0x21c] sm:$0xf]
        %v694 = vld [vmem:[#allocation6 + $0x220] sm:$0xf]
        %v695 = vld [vmem:[#allocation6 + $0x224] sm:$0xf]
        %v696 = vld [vmem:[#allocation6 + $0x228] sm:$0xf]
        %v697 = vld [vmem:[#allocation6 + $0x22c] sm:$0xf]
        %v698 = vld [vmem:[#allocation6 + $0x230] sm:$0xf]
        %v699 = vld [vmem:[#allocation6 + $0x234] sm:$0xf]
        %v700 = vld [vmem:[#allocation6 + $0x238] sm:$0xf]
        %v701 = vld [vmem:[#allocation6 + $0x23c] sm:$0xf]
        %v703 = vperm.slane %v295, 0
        %v849 = vunpack.c.l.b16 %v558
        %v850 = vunpack.c.l.b16 %v559
        %v851 = vunpack.c.l.b16 %v560
        %v852 = vunpack.c.l.b16 %v561
        %v853 = vunpack.c.l.b16 %v562
        %v854 = vunpack.c.l.b16 %v563
        %v855 = vunpack.c.l.b16 %v564
        %v856 = vunpack.c.l.b16 %v565
        %v857 = vunpack.c.l.b16 %v566
        %v858 = vunpack.c.l.b16 %v567
        %v859 = vunpack.c.l.b16 %v568
        %v860 = vunpack.c.l.b16 %v569
        %v861 = vunpack.c.l.b16 %v570
        %v862 = vunpack.c.l.b16 %v571
        %v863 = vunpack.c.l.b16 %v572
        %v864 = vunpack.c.l.b16 %v573
        %v865 = vunpack.c.l.b16 %v574
        %v866 = vunpack.c.l.b16 %v575
        %v867 = vunpack.c.l.b16 %v576
        %v868 = vunpack.c.l.b16 %v577
        %v869 = vunpack.c.l.b16 %v578
        %v870 = vunpack.c.l.b16 %v579
        %v871 = vunpack.c.l.b16 %v580
        %v872 = vunpack.c.l.b16 %v581
        %v873 = vunpack.c.l.b16 %v582
        %v874 = vunpack.c.l.b16 %v583
        %v875 = vunpack.c.l.b16 %v584
        %v876 = vunpack.c.l.b16 %v585
        %v877 = vunpack.c.l.b16 %v586
        %v878 = vunpack.c.l.b16 %v587
        %v879 = vunpack.c.l.b16 %v588
        %v880 = vunpack.c.l.b16 %v589
        %v881 = vunpack.c.l.b16 %v590
        %v882 = vunpack.c.l.b16 %v591
        %v883 = vunpack.c.l.b16 %v592
        %v884 = vunpack.c.l.b16 %v593
        %v885 = vunpack.c.l.b16 %v594
        %v886 = vunpack.c.l.b16 %v595
        %v887 = vunpack.c.l.b16 %v596
        %v888 = vunpack.c.l.b16 %v597
        %v889 = vunpack.c.l.b16 %v598
        %v890 = vunpack.c.l.b16 %v599
        %v891 = vunpack.c.l.b16 %v600
        %v892 = vunpack.c.l.b16 %v601
        %v893 = vunpack.c.l.b16 %v602
        %v894 = vunpack.c.l.b16 %v603
        %v895 = vunpack.c.l.b16 %v604
        %v896 = vunpack.c.l.b16 %v605
        %v897 = vunpack.c.l.b16 %v606
        %v898 = vunpack.c.l.b16 %v607
        %v899 = vunpack.c.l.b16 %v608
        %v900 = vunpack.c.l.b16 %v609
        %v901 = vunpack.c.l.b16 %v610
        %v902 = vunpack.c.l.b16 %v611
        %v903 = vunpack.c.l.b16 %v612
        %v904 = vunpack.c.l.b16 %v613
        %v905 = vunpack.c.l.b16 %v614
        %v906 = vunpack.c.l.b16 %v615
        %v907 = vunpack.c.l.b16 %v616
        %v908 = vunpack.c.l.b16 %v617
        %v909 = vunpack.c.l.b16 %v618
        %v910 = vunpack.c.l.b16 %v619
        %v911 = vunpack.c.l.b16 %v620
        %v912 = vunpack.c.l.b16 %v621
        %v913 = vunpack.c.l.b16 %v622
        %v914 = vunpack.c.l.b16 %v623
        %v915 = vunpack.c.l.b16 %v624
        %v916 = vunpack.c.l.b16 %v625
        %v917 = vunpack.c.l.b16 %v626
        %v918 = vunpack.c.l.b16 %v627
        %v919 = vunpack.c.l.b16 %v628
        %v920 = vunpack.c.l.b16 %v629
        %v921 = vunpack.c.l.b16 %v630
        %v922 = vunpack.c.l.b16 %v631
        %v923 = vunpack.c.l.b16 %v632
        %v924 = vunpack.c.l.b16 %v633
        %v925 = vunpack.c.l.b16 %v634
        %v926 = vunpack.c.l.b16 %v635
        %v927 = vunpack.c.l.b16 %v636
        %v928 = vunpack.c.l.b16 %v637
        %v929 = vunpack.c.l.b16 %v638
        %v930 = vunpack.c.l.b16 %v639
        %v931 = vunpack.c.l.b16 %v640
        %v932 = vunpack.c.l.b16 %v641
        %v933 = vunpack.c.l.b16 %v642
        %v934 = vunpack.c.l.b16 %v643
        %v935 = vunpack.c.l.b16 %v644
        %v936 = vunpack.c.l.b16 %v645
        %v937 = vunpack.c.l.b16 %v646
        %v938 = vunpack.c.l.b16 %v647
        %v939 = vunpack.c.l.b16 %v648
        %v940 = vunpack.c.l.b16 %v649
        %v941 = vunpack.c.l.b16 %v650
        %v942 = vunpack.c.l.b16 %v651
        %v943 = vunpack.c.l.b16 %v652
        %v944 = vunpack.c.l.b16 %v653
        %v945 = vunpack.c.l.b16 %v654
        %v946 = vunpack.c.l.b16 %v655
        %v947 = vunpack.c.l.b16 %v656
        %v948 = vunpack.c.l.b16 %v657
        %v949 = vunpack.c.l.b16 %v658
        %v950 = vunpack.c.l.b16 %v659
        %v951 = vunpack.c.l.b16 %v660
        %v952 = vunpack.c.l.b16 %v661
        %v953 = vunpack.c.l.b16 %v662
        %v954 = vunpack.c.l.b16 %v663
        %v955 = vunpack.c.l.b16 %v664
        %v956 = vunpack.c.l.b16 %v665
        %v957 = vunpack.c.l.b16 %v666
        %v958 = vunpack.c.l.b16 %v667
        %v959 = vunpack.c.l.b16 %v668
        %v960 = vunpack.c.l.b16 %v669
        %v961 = vunpack.c.l.b16 %v670
        %v962 = vunpack.c.l.b16 %v671
        %v963 = vunpack.c.l.b16 %v672
        %v964 = vunpack.c.l.b16 %v673
        %v965 = vunpack.c.l.b16 %v674
        %v966 = vunpack.c.l.b16 %v675
        %v967 = vunpack.c.l.b16 %v676
        %v968 = vunpack.c.l.b16 %v677
        %v969 = vunpack.c.l.b16 %v678
        %v970 = vunpack.c.l.b16 %v679
        %v971 = vunpack.c.l.b16 %v680
        %v972 = vunpack.c.l.b16 %v681
        %v973 = vunpack.c.l.b16 %v682
        %v974 = vunpack.c.l.b16 %v683
        %v975 = vunpack.c.l.b16 %v684
        %v976 = vunpack.c.l.b16 %v685
        %v977 = vunpack.c.l.b16 %v686
        %v978 = vunpack.c.l.b16 %v687
        %v979 = vunpack.c.l.b16 %v688
        %v980 = vunpack.c.l.b16 %v689
        %v981 = vunpack.c.l.b16 %v690
        %v982 = vunpack.c.l.b16 %v691
        %v983 = vunpack.c.l.b16 %v692
        %v984 = vunpack.c.l.b16 %v693
        %v985 = vunpack.c.l.b16 %v694
        %v986 = vunpack.c.l.b16 %v695
        %v987 = vunpack.c.l.b16 %v696
        %v988 = vunpack.c.l.b16 %v697
        %v989 = vunpack.c.l.b16 %v698
        %v990 = vunpack.c.l.b16 %v699
        %v991 = vunpack.c.l.b16 %v700
        %v992 = vunpack.c.l.b16 %v701
        %v993 = vpack.c.b16 %v850, %v849
        %v994 = vpack.c.b16 %v852, %v851
        %v995 = vpack.c.b16 %v854, %v853
        %v996 = vpack.c.b16 %v856, %v855
        %v997 = vpack.c.b16 %v858, %v857
        %v998 = vpack.c.b16 %v860, %v859
        %v999 = vpack.c.b16 %v862, %v861
        %v1000 = vpack.c.b16 %v864, %v863
        %v1001 = vpack.c.b16 %v866, %v865
        %v1002 = vpack.c.b16 %v868, %v867
        %v1003 = vpack.c.b16 %v870, %v869
        %v1004 = vpack.c.b16 %v872, %v871
        %v1005 = vpack.c.b16 %v874, %v873
        %v1006 = vpack.c.b16 %v876, %v875
        %v1007 = vpack.c.b16 %v878, %v877
        %v1008 = vpack.c.b16 %v880, %v879
        %v1009 = vpack.c.b16 %v882, %v881
        %v1010 = vpack.c.b16 %v884, %v883
        %v1011 = vpack.c.b16 %v886, %v885
        %v1012 = vpack.c.b16 %v888, %v887
        %v1013 = vpack.c.b16 %v890, %v889
        %v1014 = vpack.c.b16 %v892, %v891
        %v1015 = vpack.c.b16 %v894, %v893
        %v1016 = vpack.c.b16 %v896, %v895
        %v1017 = vpack.c.b16 %v898, %v897
        %v1018 = vpack.c.b16 %v900, %v899
        %v1019 = vpack.c.b16 %v902, %v901
        %v1020 = vpack.c.b16 %v904, %v903
        %v1021 = vpack.c.b16 %v906, %v905
        %v1022 = vpack.c.b16 %v908, %v907
        %v1023 = vpack.c.b16 %v910, %v909
        %v1024 = vpack.c.b16 %v912, %v911
        %v1025 = vpack.c.b16 %v914, %v913
        %v1026 = vpack.c.b16 %v916, %v915
        %v1027 = vpack.c.b16 %v918, %v917
        %v1028 = vpack.c.b16 %v920, %v919
        %v1029 = vpack.c.b16 %v922, %v921
        %v1030 = vpack.c.b16 %v924, %v923
        %v1031 = vpack.c.b16 %v926, %v925
        %v1032 = vpack.c.b16 %v928, %v927
        %v1033 = vpack.c.b16 %v930, %v929
        %v1034 = vpack.c.b16 %v932, %v931
        %v1035 = vpack.c.b16 %v934, %v933
        %v1036 = vpack.c.b16 %v936, %v935
        %v1037 = vpack.c.b16 %v938, %v937
        %v1038 = vpack.c.b16 %v940, %v939
        %v1039 = vpack.c.b16 %v942, %v941
        %v1040 = vpack.c.b16 %v944, %v943
        %v1041 = vpack.c.b16 %v946, %v945
        %v1042 = vpack.c.b16 %v948, %v947
        %v1043 = vpack.c.b16 %v950, %v949
        %v1044 = vpack.c.b16 %v952, %v951
        %v1045 = vpack.c.b16 %v954, %v953
        %v1046 = vpack.c.b16 %v956, %v955
        %v1047 = vpack.c.b16 %v958, %v957
        %v1048 = vpack.c.b16 %v960, %v959
        %v1049 = vpack.c.b16 %v962, %v961
        %v1050 = vpack.c.b16 %v964, %v963
        %v1051 = vpack.c.b16 %v966, %v965
        %v1052 = vpack.c.b16 %v968, %v967
        %v1053 = vpack.c.b16 %v970, %v969
        %v1054 = vpack.c.b16 %v972, %v971
        %v1055 = vpack.c.b16 %v974, %v973
        %v1056 = vpack.c.b16 %v976, %v975
        %v1057 = vpack.c.b16 %v978, %v977
        %v1058 = vpack.c.b16 %v980, %v979
        %v1059 = vpack.c.b16 %v982, %v981
        %v1060 = vpack.c.b16 %v984, %v983
        %v1061 = vpack.c.b16 %v986, %v985
        %v1062 = vpack.c.b16 %v988, %v987
        %v1063 = vpack.c.b16 %v990, %v989
        %v1064 = vpack.c.b16 %v992, %v991
        %1137 = vmatpush.bf16.msra.mxu0 %v1000
        %1138 = vmatpush.bf16.msra.mxu0 %v999
        %1139 = vmatpush.bf16.msra.mxu0 %v998
        %1140 = vmatpush.bf16.msra.mxu0 %v997
        %1141 = vmatpush.bf16.msra.mxu0 %v996
        %1142 = vmatpush.bf16.msra.mxu0 %v995
        %1143 = vmatpush.bf16.msra.mxu0 %v994
        %1144 = vmatpush.bf16.msra.mxu0 %v993
        %1145 = vmatmul.bf16.gmra.mxu0 %v483
        %v1146 = vpop.f32.mrf.mxu0
        %v1147 = vadd.f32 %v703, %v1146
        %v1148 = vpop.f32.mrf.mxu0
        %v1149 = vadd.f32 %v703, %v1148
        %1150 = vmatmul.bf16.gmra.mxu0 %v484
        %v1151 = vpop.f32.mrf.mxu0
        %v1152 = vadd.f32 %v703, %v1151
        %v1153 = vpop.f32.mrf.mxu0
        %v1154 = vadd.f32 %v703, %v1153
        %1155 = vmatmul.bf16.gmra.mxu0 %v485
        %v1156 = vpop.f32.mrf.mxu0
        %v1157 = vadd.f32 %v703, %v1156
        %v1158 = vpop.f32.mrf.mxu0
        %v1159 = vadd.f32 %v703, %v1158
        %1160 = vmatmul.bf16.gmra.mxu0 %v486
        %v1161 = vpop.f32.mrf.mxu0
        %v1162 = vadd.f32 %v703, %v1161
        %v1163 = vpop.f32.mrf.mxu0
        %v1164 = vadd.f32 %v703, %v1163
        %1165 = vmatmul.bf16.gmra.mxu0 %v487
        %v1166 = vpop.f32.mrf.mxu0
        %v1167 = vadd.f32 %v703, %v1166
        %v1168 = vpop.f32.mrf.mxu0
        %v1169 = vadd.f32 %v703, %v1168
        %1170 = vmatmul.bf16.gmra.mxu0 %v488
        %v1171 = vpop.f32.mrf.mxu0
        %v1172 = vadd.f32 %v703, %v1171
        %v1173 = vpop.f32.mrf.mxu0
        %v1174 = vadd.f32 %v703, %v1173
        %1175 = vmatmul.bf16.gmra.mxu0 %v489
        %v1176 = vpop.f32.mrf.mxu0
        %v1177 = vadd.f32 %v703, %v1176
        %v1178 = vpop.f32.mrf.mxu0
        %v1179 = vadd.f32 %v703, %v1178
        %1180 = vmatmul.bf16.gmra.mxu0 %v490
        %v1181 = vpop.f32.mrf.mxu0
        %v1182 = vadd.f32 %v703, %v1181
        %v1183 = vpop.f32.mrf.mxu0
        %v1184 = vadd.f32 %v703, %v1183
        %1185 = vmatmul.bf16.gmra.mxu0 %v491
        %v1186 = vpop.f32.mrf.mxu0
        %v1187 = vadd.f32 %v703, %v1186
        %v1188 = vpop.f32.mrf.mxu0
        %v1189 = vadd.f32 %v703, %v1188
        %1190 = vmatmul.bf16.gmra.mxu0 %v492
        %v1191 = vpop.f32.mrf.mxu0
        %v1192 = vadd.f32 %v703, %v1191
        %v1193 = vpop.f32.mrf.mxu0
        %v1194 = vadd.f32 %v703, %v1193
        %1195 = vdwg.mxu0
        %1196 = vmatpush.bf16.msra.mxu0 %v1008
        %1197 = vmatpush.bf16.msra.mxu0 %v1007
        %1198 = vmatpush.bf16.msra.mxu0 %v1006
        %1199 = vmatpush.bf16.msra.mxu0 %v1005
        %1200 = vmatpush.bf16.msra.mxu0 %v1004
        %1201 = vmatpush.bf16.msra.mxu0 %v1003
        %1202 = vmatpush.bf16.msra.mxu0 %v1002
        %1203 = vmatpush.bf16.msra.mxu0 %v1001
        %1204 = vmatmul.bf16.gmra.mxu0 %v372
        %v1205 = vpop.f32.mrf.mxu0
        %v1206 = vadd.f32 %v1147, %v1205
        %v1207 = vpop.f32.mrf.mxu0
        %v1208 = vadd.f32 %v1149, %v1207
        %1209 = vmatmul.bf16.gmra.mxu0 %v373
        %v1210 = vpop.f32.mrf.mxu0
        %v1211 = vadd.f32 %v1152, %v1210
        %v1212 = vpop.f32.mrf.mxu0
        %v1213 = vadd.f32 %v1154, %v1212
        %1214 = vmatmul.bf16.gmra.mxu0 %v374
        %v1215 = vpop.f32.mrf.mxu0
        %v1216 = vadd.f32 %v1157, %v1215
        %v1217 = vpop.f32.mrf.mxu0
        %v1218 = vadd.f32 %v1159, %v1217
        %1219 = vmatmul.bf16.gmra.mxu0 %v375
        %v1220 = vpop.f32.mrf.mxu0
        %v1221 = vadd.f32 %v1162, %v1220
        %v1222 = vpop.f32.mrf.mxu0
        %v1223 = vadd.f32 %v1164, %v1222
        %1224 = vmatmul.bf16.gmra.mxu0 %v376
        %v1225 = vpop.f32.mrf.mxu0
        %v1226 = vadd.f32 %v1167, %v1225
        %v1227 = vpop.f32.mrf.mxu0
        %v1228 = vadd.f32 %v1169, %v1227
        %1229 = vmatmul.bf16.gmra.mxu0 %v377
        %v1230 = vpop.f32.mrf.mxu0
        %v1231 = vadd.f32 %v1172, %v1230
        %v1232 = vpop.f32.mrf.mxu0
        %v1233 = vadd.f32 %v1174, %v1232
        %1234 = vmatmul.bf16.gmra.mxu0 %v378
        %v1235 = vpop.f32.mrf.mxu0
        %v1236 = vadd.f32 %v1177, %v1235
        %v1237 = vpop.f32.mrf.mxu0
        %v1238 = vadd.f32 %v1179, %v1237
        %1239 = vmatmul.bf16.gmra.mxu0 %v379
        %v1240 = vpop.f32.mrf.mxu0
        %v1241 = vadd.f32 %v1182, %v1240
        %v1242 = vpop.f32.mrf.mxu0
        %v1243 = vadd.f32 %v1184, %v1242
        %1244 = vmatmul.bf16.gmra.mxu0 %v380
        %v1245 = vpop.f32.mrf.mxu0
        %v1246 = vadd.f32 %v1187, %v1245
        %v1247 = vpop.f32.mrf.mxu0
        %v1248 = vadd.f32 %v1189, %v1247
        %1249 = vmatmul.bf16.gmra.mxu0 %v381
        %v1250 = vpop.f32.mrf.mxu0
        %v1251 = vadd.f32 %v1192, %v1250
        %v1252 = vpop.f32.mrf.mxu0
        %v1253 = vadd.f32 %v1194, %v1252
        %1254 = vdwg.mxu0
        %1255 = vmatpush.bf16.msra.mxu0 %v1016
        %1256 = vmatpush.bf16.msra.mxu0 %v1015
        %1257 = vmatpush.bf16.msra.mxu0 %v1014
        %1258 = vmatpush.bf16.msra.mxu0 %v1013
        %1259 = vmatpush.bf16.msra.mxu0 %v1012
        %1260 = vmatpush.bf16.msra.mxu0 %v1011
        %1261 = vmatpush.bf16.msra.mxu0 %v1010
        %1262 = vmatpush.bf16.msra.mxu0 %v1009
        %1263 = vmatmul.bf16.gmra.mxu0 %v534
        %v1264 = vpop.f32.mrf.mxu0
        %v1265 = vadd.f32 %v1206, %v1264
        %v1266 = vpop.f32.mrf.mxu0
        %v1267 = vadd.f32 %v1208, %v1266
        %1268 = vmatmul.bf16.gmra.mxu0 %v535
        %v1269 = vpop.f32.mrf.mxu0
        %v1270 = vadd.f32 %v1211, %v1269
        %v1271 = vpop.f32.mrf.mxu0
        %v1272 = vadd.f32 %v1213, %v1271
        %1273 = vmatmul.bf16.gmra.mxu0 %v536
        %v1274 = vpop.f32.mrf.mxu0
        %v1275 = vadd.f32 %v1216, %v1274
        %v1276 = vpop.f32.mrf.mxu0
        %v1277 = vadd.f32 %v1218, %v1276
        %1278 = vmatmul.bf16.gmra.mxu0 %v537
        %v1279 = vpop.f32.mrf.mxu0
        %v1280 = vadd.f32 %v1221, %v1279
        %v1281 = vpop.f32.mrf.mxu0
        %v1282 = vadd.f32 %v1223, %v1281
        %1283 = vmatmul.bf16.gmra.mxu0 %v538
        %v1284 = vpop.f32.mrf.mxu0
        %v1285 = vadd.f32 %v1226, %v1284
        %v1286 = vpop.f32.mrf.mxu0
        %v1287 = vadd.f32 %v1228, %v1286
        %1288 = vmatmul.bf16.gmra.mxu0 %v539
        %v1289 = vpop.f32.mrf.mxu0
        %v1290 = vadd.f32 %v1231, %v1289
        %v1291 = vpop.f32.mrf.mxu0
        %v1292 = vadd.f32 %v1233, %v1291
        %1293 = vmatmul.bf16.gmra.mxu0 %v540
        %v1294 = vpop.f32.mrf.mxu0
        %v1295 = vadd.f32 %v1236, %v1294
        %v1296 = vpop.f32.mrf.mxu0
        %v1297 = vadd.f32 %v1238, %v1296
        %1298 = vmatmul.bf16.gmra.mxu0 %v541
        %v1299 = vpop.f32.mrf.mxu0
        %v1300 = vadd.f32 %v1241, %v1299
        %v1301 = vpop.f32.mrf.mxu0
        %v1302 = vadd.f32 %v1243, %v1301
        %1303 = vmatmul.bf16.gmra.mxu0 %v542
        %v1304 = vpop.f32.mrf.mxu0
        %v1305 = vadd.f32 %v1246, %v1304
        %v1306 = vpop.f32.mrf.mxu0
        %v1307 = vadd.f32 %v1248, %v1306
        %1308 = vmatmul.bf16.gmra.mxu0 %v543
        %v1309 = vpop.f32.mrf.mxu0
        %v1310 = vadd.f32 %v1251, %v1309
        %v1311 = vpop.f32.mrf.mxu0
        %v1312 = vadd.f32 %v1253, %v1311
        %1313 = vdwg.mxu0
        %1314 = vmatpush.bf16.msra.mxu0 %v1024
        %1315 = vmatpush.bf16.msra.mxu0 %v1023
        %1316 = vmatpush.bf16.msra.mxu0 %v1022
        %1317 = vmatpush.bf16.msra.mxu0 %v1021
        %1318 = vmatpush.bf16.msra.mxu0 %v1020
        %1319 = vmatpush.bf16.msra.mxu0 %v1019
        %1320 = vmatpush.bf16.msra.mxu0 %v1018
        %1321 = vmatpush.bf16.msra.mxu0 %v1017
        %1322 = vmatmul.bf16.gmra.mxu0 %v484
        %v1323 = vpop.f32.mrf.mxu0
        %v1324 = vadd.f32 %v1265, %v1323
        %v1325 = vpop.f32.mrf.mxu0
        %v1326 = vadd.f32 %v1267, %v1325
        %1327 = vmatmul.bf16.gmra.mxu0 %v485
        %v1328 = vpop.f32.mrf.mxu0
        %v1329 = vadd.f32 %v1270, %v1328
        %v1330 = vpop.f32.mrf.mxu0
        %v1331 = vadd.f32 %v1272, %v1330
        %1332 = vmatmul.bf16.gmra.mxu0 %v486
        %v1333 = vpop.f32.mrf.mxu0
        %v1334 = vadd.f32 %v1275, %v1333
        %v1335 = vpop.f32.mrf.mxu0
        %v1336 = vadd.f32 %v1277, %v1335
        %1337 = vmatmul.bf16.gmra.mxu0 %v487
        %v1338 = vpop.f32.mrf.mxu0
        %v1339 = vadd.f32 %v1280, %v1338
        %v1340 = vpop.f32.mrf.mxu0
        %v1341 = vadd.f32 %v1282, %v1340
        %1342 = vmatmul.bf16.gmra.mxu0 %v488
        %v1343 = vpop.f32.mrf.mxu0
        %v1344 = vadd.f32 %v1285, %v1343
        %v1345 = vpop.f32.mrf.mxu0
        %v1346 = vadd.f32 %v1287, %v1345
        %1347 = vmatmul.bf16.gmra.mxu0 %v489
        %v1348 = vpop.f32.mrf.mxu0
        %v1349 = vadd.f32 %v1290, %v1348
        %v1350 = vpop.f32.mrf.mxu0
        %v1351 = vadd.f32 %v1292, %v1350
        %1352 = vmatmul.bf16.gmra.mxu0 %v490
        %v1353 = vpop.f32.mrf.mxu0
        %v1354 = vadd.f32 %v1295, %v1353
        %v1355 = vpop.f32.mrf.mxu0
        %v1356 = vadd.f32 %v1297, %v1355
        %1357 = vmatmul.bf16.gmra.mxu0 %v491
        %v1358 = vpop.f32.mrf.mxu0
        %v1359 = vadd.f32 %v1300, %v1358
        %v1360 = vpop.f32.mrf.mxu0
        %v1361 = vadd.f32 %v1302, %v1360
        %1362 = vmatmul.bf16.gmra.mxu0 %v492
        %v1363 = vpop.f32.mrf.mxu0
        %v1364 = vadd.f32 %v1305, %v1363
        %v1365 = vpop.f32.mrf.mxu0
        %v1366 = vadd.f32 %v1307, %v1365
        %1367 = vmatmul.bf16.gmra.mxu0 %v493
        %v1368 = vpop.f32.mrf.mxu0
        %v1369 = vadd.f32 %v1310, %v1368
        %v1370 = vpop.f32.mrf.mxu0
        %v1371 = vadd.f32 %v1312, %v1370
        %1372 = vdwg.mxu0
        %1373 = vmatpush.bf16.msra.mxu0 %v1032
        %1374 = vmatpush.bf16.msra.mxu0 %v1031
        %1375 = vmatpush.bf16.msra.mxu0 %v1030
        %1376 = vmatpush.bf16.msra.mxu0 %v1029
        %1377 = vmatpush.bf16.msra.mxu0 %v1028
        %1378 = vmatpush.bf16.msra.mxu0 %v1027
        %1379 = vmatpush.bf16.msra.mxu0 %v1026
        %1380 = vmatpush.bf16.msra.mxu0 %v1025
        %1381 = vmatmul.bf16.gmra.mxu0 %v373
        %v1382 = vpop.f32.mrf.mxu0
        %v1383 = vadd.f32 %v1324, %v1382
        %v1384 = vpop.f32.mrf.mxu0
        %v1385 = vadd.f32 %v1326, %v1384
        %1386 = vmatmul.bf16.gmra.mxu0 %v374
        %v1387 = vpop.f32.mrf.mxu0
        %v1388 = vadd.f32 %v1329, %v1387
        %v1389 = vpop.f32.mrf.mxu0
        %v1390 = vadd.f32 %v1331, %v1389
        %1391 = vmatmul.bf16.gmra.mxu0 %v375
        %v1392 = vpop.f32.mrf.mxu0
        %v1393 = vadd.f32 %v1334, %v1392
        %v1394 = vpop.f32.mrf.mxu0
        %v1395 = vadd.f32 %v1336, %v1394
        %1396 = vmatmul.bf16.gmra.mxu0 %v376
        %v1397 = vpop.f32.mrf.mxu0
        %v1398 = vadd.f32 %v1339, %v1397
        %v1399 = vpop.f32.mrf.mxu0
        %v1400 = vadd.f32 %v1341, %v1399
        %1401 = vmatmul.bf16.gmra.mxu0 %v377
        %v1402 = vpop.f32.mrf.mxu0
        %v1403 = vadd.f32 %v1344, %v1402
        %v1404 = vpop.f32.mrf.mxu0
        %v1405 = vadd.f32 %v1346, %v1404
        %1406 = vmatmul.bf16.gmra.mxu0 %v378
        %v1407 = vpop.f32.mrf.mxu0
        %v1408 = vadd.f32 %v1349, %v1407
        %v1409 = vpop.f32.mrf.mxu0
        %v1410 = vadd.f32 %v1351, %v1409
        %1411 = vmatmul.bf16.gmra.mxu0 %v379
        %v1412 = vpop.f32.mrf.mxu0
        %v1413 = vadd.f32 %v1354, %v1412
        %v1414 = vpop.f32.mrf.mxu0
        %v1415 = vadd.f32 %v1356, %v1414
        %1416 = vmatmul.bf16.gmra.mxu0 %v380
        %v1417 = vpop.f32.mrf.mxu0
        %v1418 = vadd.f32 %v1359, %v1417
        %v1419 = vpop.f32.mrf.mxu0
        %v1420 = vadd.f32 %v1361, %v1419
        %1421 = vmatmul.bf16.gmra.mxu0 %v381
        %v1422 = vpop.f32.mrf.mxu0
        %v1423 = vadd.f32 %v1364, %v1422
        %v1424 = vpop.f32.mrf.mxu0
        %v1425 = vadd.f32 %v1366, %v1424
        %1426 = vmatmul.bf16.gmra.mxu0 %v382
        %v1427 = vpop.f32.mrf.mxu0
        %v1428 = vadd.f32 %v1369, %v1427
        %v1429 = vpop.f32.mrf.mxu0
        %v1430 = vadd.f32 %v1371, %v1429
        %1431 = vdwg.mxu0
        %1432 = vmatpush.bf16.msra.mxu0 %v1040
        %1433 = vmatpush.bf16.msra.mxu0 %v1039
        %1434 = vmatpush.bf16.msra.mxu0 %v1038
        %1435 = vmatpush.bf16.msra.mxu0 %v1037
        %1436 = vmatpush.bf16.msra.mxu0 %v1036
        %1437 = vmatpush.bf16.msra.mxu0 %v1035
        %1438 = vmatpush.bf16.msra.mxu0 %v1034
        %1439 = vmatpush.bf16.msra.mxu0 %v1033
        %1440 = vmatmul.bf16.gmra.mxu0 %v535
        %v1441 = vpop.f32.mrf.mxu0
        %v1442 = vadd.f32 %v1383, %v1441
        %v1443 = vpop.f32.mrf.mxu0
        %v1444 = vadd.f32 %v1385, %v1443
        %1445 = vmatmul.bf16.gmra.mxu0 %v536
        %v1446 = vpop.f32.mrf.mxu0
        %v1447 = vadd.f32 %v1388, %v1446
        %v1448 = vpop.f32.mrf.mxu0
        %v1449 = vadd.f32 %v1390, %v1448
        %1450 = vmatmul.bf16.gmra.mxu0 %v537
        %v1451 = vpop.f32.mrf.mxu0
        %v1452 = vadd.f32 %v1393, %v1451
        %v1453 = vpop.f32.mrf.mxu0
        %v1454 = vadd.f32 %v1395, %v1453
        %1455 = vmatmul.bf16.gmra.mxu0 %v538
        %v1456 = vpop.f32.mrf.mxu0
        %v1457 = vadd.f32 %v1398, %v1456
        %v1458 = vpop.f32.mrf.mxu0
        %v1459 = vadd.f32 %v1400, %v1458
        %1460 = vmatmul.bf16.gmra.mxu0 %v539
        %v1461 = vpop.f32.mrf.mxu0
        %v1462 = vadd.f32 %v1403, %v1461
        %v1463 = vpop.f32.mrf.mxu0
        %v1464 = vadd.f32 %v1405, %v1463
        %1465 = vmatmul.bf16.gmra.mxu0 %v540
        %v1466 = vpop.f32.mrf.mxu0
        %v1467 = vadd.f32 %v1408, %v1466
        %v1468 = vpop.f32.mrf.mxu0
        %v1469 = vadd.f32 %v1410, %v1468
        %1470 = vmatmul.bf16.gmra.mxu0 %v541
        %v1471 = vpop.f32.mrf.mxu0
        %v1472 = vadd.f32 %v1413, %v1471
        %v1473 = vpop.f32.mrf.mxu0
        %v1474 = vadd.f32 %v1415, %v1473
        %1475 = vmatmul.bf16.gmra.mxu0 %v542
        %v1476 = vpop.f32.mrf.mxu0
        %v1477 = vadd.f32 %v1418, %v1476
        %v1478 = vpop.f32.mrf.mxu0
        %v1479 = vadd.f32 %v1420, %v1478
        %1480 = vmatmul.bf16.gmra.mxu0 %v543
        %v1481 = vpop.f32.mrf.mxu0
        %v1482 = vadd.f32 %v1423, %v1481
        %v1483 = vpop.f32.mrf.mxu0
        %v1484 = vadd.f32 %v1425, %v1483
        %1485 = vmatmul.bf16.gmra.mxu0 %v544
        %v1486 = vpop.f32.mrf.mxu0
        %v1487 = vadd.f32 %v1428, %v1486
        %v1488 = vpop.f32.mrf.mxu0
        %v1489 = vadd.f32 %v1430, %v1488
        %1490 = vdwg.mxu0
        %1491 = vmatpush.bf16.msra.mxu0 %v1048
        %1492 = vmatpush.bf16.msra.mxu0 %v1047
        %1493 = vmatpush.bf16.msra.mxu0 %v1046
        %1494 = vmatpush.bf16.msra.mxu0 %v1045
        %1495 = vmatpush.bf16.msra.mxu0 %v1044
        %1496 = vmatpush.bf16.msra.mxu0 %v1043
        %1497 = vmatpush.bf16.msra.mxu0 %v1042
        %1498 = vmatpush.bf16.msra.mxu0 %v1041
        %1499 = vmatmul.bf16.gmra.mxu0 %v485
        %v1500 = vpop.f32.mrf.mxu0
        %v1501 = vadd.f32 %v1442, %v1500
        %v1502 = vpop.f32.mrf.mxu0
        %v1503 = vadd.f32 %v1444, %v1502
        %1504 = vmatmul.bf16.gmra.mxu0 %v486
        %v1505 = vpop.f32.mrf.mxu0
        %v1506 = vadd.f32 %v1447, %v1505
        %v1507 = vpop.f32.mrf.mxu0
        %v1508 = vadd.f32 %v1449, %v1507
        %1509 = vmatmul.bf16.gmra.mxu0 %v487
        %v1510 = vpop.f32.mrf.mxu0
        %v1511 = vadd.f32 %v1452, %v1510
        %v1512 = vpop.f32.mrf.mxu0
        %v1513 = vadd.f32 %v1454, %v1512
        %1514 = vmatmul.bf16.gmra.mxu0 %v488
        %v1515 = vpop.f32.mrf.mxu0
        %v1516 = vadd.f32 %v1457, %v1515
        %v1517 = vpop.f32.mrf.mxu0
        %v1518 = vadd.f32 %v1459, %v1517
        %1519 = vmatmul.bf16.gmra.mxu0 %v489
        %v1520 = vpop.f32.mrf.mxu0
        %v1521 = vadd.f32 %v1462, %v1520
        %v1522 = vpop.f32.mrf.mxu0
        %v1523 = vadd.f32 %v1464, %v1522
        %1524 = vmatmul.bf16.gmra.mxu0 %v490
        %v1525 = vpop.f32.mrf.mxu0
        %v1526 = vadd.f32 %v1467, %v1525
        %v1527 = vpop.f32.mrf.mxu0
        %v1528 = vadd.f32 %v1469, %v1527
        %1529 = vmatmul.bf16.gmra.mxu0 %v491
        %v1530 = vpop.f32.mrf.mxu0
        %v1531 = vadd.f32 %v1472, %v1530
        %v1532 = vpop.f32.mrf.mxu0
        %v1533 = vadd.f32 %v1474, %v1532
        %1534 = vmatmul.bf16.gmra.mxu0 %v492
        %v1535 = vpop.f32.mrf.mxu0
        %v1536 = vadd.f32 %v1477, %v1535
        %v1537 = vpop.f32.mrf.mxu0
        %v1538 = vadd.f32 %v1479, %v1537
        %1539 = vmatmul.bf16.gmra.mxu0 %v493
        %v1540 = vpop.f32.mrf.mxu0
        %v1541 = vadd.f32 %v1482, %v1540
        %v1542 = vpop.f32.mrf.mxu0
        %v1543 = vadd.f32 %v1484, %v1542
        %1544 = vmatmul.bf16.gmra.mxu0 %v494
        %v1545 = vpop.f32.mrf.mxu0
        %v1546 = vadd.f32 %v1487, %v1545
        %v1547 = vpop.f32.mrf.mxu0
        %v1548 = vadd.f32 %v1489, %v1547
        %1549 = vdwg.mxu0
        %1550 = vmatpush.bf16.msra.mxu0 %v1056
        %1551 = vmatpush.bf16.msra.mxu0 %v1055
        %1552 = vmatpush.bf16.msra.mxu0 %v1054
        %1553 = vmatpush.bf16.msra.mxu0 %v1053
        %1554 = vmatpush.bf16.msra.mxu0 %v1052
        %1555 = vmatpush.bf16.msra.mxu0 %v1051
        %1556 = vmatpush.bf16.msra.mxu0 %v1050
        %1557 = vmatpush.bf16.msra.mxu0 %v1049
        %1558 = vmatmul.bf16.gmra.mxu0 %v374
        %v1559 = vpop.f32.mrf.mxu0
        %v1560 = vadd.f32 %v1501, %v1559
        %v1561 = vpop.f32.mrf.mxu0
        %v1562 = vadd.f32 %v1503, %v1561
        %1563 = vmatmul.bf16.gmra.mxu0 %v375
        %v1564 = vpop.f32.mrf.mxu0
        %v1565 = vadd.f32 %v1506, %v1564
        %v1566 = vpop.f32.mrf.mxu0
        %v1567 = vadd.f32 %v1508, %v1566
        %1568 = vmatmul.bf16.gmra.mxu0 %v376
        %v1569 = vpop.f32.mrf.mxu0
        %v1570 = vadd.f32 %v1511, %v1569
        %v1571 = vpop.f32.mrf.mxu0
        %v1572 = vadd.f32 %v1513, %v1571
        %1573 = vmatmul.bf16.gmra.mxu0 %v377
        %v1574 = vpop.f32.mrf.mxu0
        %v1575 = vadd.f32 %v1516, %v1574
        %v1576 = vpop.f32.mrf.mxu0
        %v1577 = vadd.f32 %v1518, %v1576
        %1578 = vmatmul.bf16.gmra.mxu0 %v378
        %v1579 = vpop.f32.mrf.mxu0
        %v1580 = vadd.f32 %v1521, %v1579
        %v1581 = vpop.f32.mrf.mxu0
        %v1582 = vadd.f32 %v1523, %v1581
        %1583 = vmatmul.bf16.gmra.mxu0 %v379
        %v1584 = vpop.f32.mrf.mxu0
        %v1585 = vadd.f32 %v1526, %v1584
        %v1586 = vpop.f32.mrf.mxu0
        %v1587 = vadd.f32 %v1528, %v1586
        %1588 = vmatmul.bf16.gmra.mxu0 %v380
        %v1589 = vpop.f32.mrf.mxu0
        %v1590 = vadd.f32 %v1531, %v1589
        %v1591 = vpop.f32.mrf.mxu0
        %v1592 = vadd.f32 %v1533, %v1591
        %1593 = vmatmul.bf16.gmra.mxu0 %v381
        %v1594 = vpop.f32.mrf.mxu0
        %v1595 = vadd.f32 %v1536, %v1594
        %v1596 = vpop.f32.mrf.mxu0
        %v1597 = vadd.f32 %v1538, %v1596
        %1598 = vmatmul.bf16.gmra.mxu0 %v382
        %v1599 = vpop.f32.mrf.mxu0
        %v1600 = vadd.f32 %v1541, %v1599
        %v1601 = vpop.f32.mrf.mxu0
        %v1602 = vadd.f32 %v1543, %v1601
        %1603 = vmatmul.bf16.gmra.mxu0 %v383
        %v1604 = vpop.f32.mrf.mxu0
        %v1605 = vadd.f32 %v1546, %v1604
        %v1606 = vpop.f32.mrf.mxu0
        %v1607 = vadd.f32 %v1548, %v1606
        %1608 = vdwg.mxu0
        %1609 = vmatpush.bf16.msra.mxu0 %v1064
        %1610 = vmatpush.bf16.msra.mxu0 %v1063
        %1611 = vmatpush.bf16.msra.mxu0 %v1062
        %1612 = vmatpush.bf16.msra.mxu0 %v1061
        %1613 = vmatpush.bf16.msra.mxu0 %v1060
        %1614 = vmatpush.bf16.msra.mxu0 %v1059
        %1615 = vmatpush.bf16.msra.mxu0 %v1058
        %1616 = vmatpush.bf16.msra.mxu0 %v1057
        %1617 = vmatmul.bf16.gmra.mxu0 %v536
        %v1618 = vpop.f32.mrf.mxu0
        %v1619 = vadd.f32 %v1560, %v1618
        %v1620 = vpop.f32.mrf.mxu0
        %v1621 = vadd.f32 %v1562, %v1620
        %1622 = vmatmul.bf16.gmra.mxu0 %v537
        %v1623 = vpop.f32.mrf.mxu0
        %v1624 = vadd.f32 %v1565, %v1623
        %v1625 = vpop.f32.mrf.mxu0
        %v1626 = vadd.f32 %v1567, %v1625
        %1627 = vmatmul.bf16.gmra.mxu0 %v538
        %v1628 = vpop.f32.mrf.mxu0
        %v1629 = vadd.f32 %v1570, %v1628
        %v1630 = vpop.f32.mrf.mxu0
        %v1631 = vadd.f32 %v1572, %v1630
        %1632 = vmatmul.bf16.gmra.mxu0 %v539
        %v1633 = vpop.f32.mrf.mxu0
        %v1634 = vadd.f32 %v1575, %v1633
        %v1635 = vpop.f32.mrf.mxu0
        %v1636 = vadd.f32 %v1577, %v1635
        %1637 = vmatmul.bf16.gmra.mxu0 %v540
        %v1638 = vpop.f32.mrf.mxu0
        %v1639 = vadd.f32 %v1580, %v1638
        %v1640 = vpop.f32.mrf.mxu0
        %v1641 = vadd.f32 %v1582, %v1640
        %1642 = vmatmul.bf16.gmra.mxu0 %v541
        %v1643 = vpop.f32.mrf.mxu0
        %v1644 = vadd.f32 %v1585, %v1643
        %v1645 = vpop.f32.mrf.mxu0
        %v1646 = vadd.f32 %v1587, %v1645
        %1647 = vmatmul.bf16.gmra.mxu0 %v542
        %v1648 = vpop.f32.mrf.mxu0
        %v1649 = vadd.f32 %v1590, %v1648
        %v1650 = vpop.f32.mrf.mxu0
        %v1651 = vadd.f32 %v1592, %v1650
        %1652 = vmatmul.bf16.gmra.mxu0 %v543
        %v1653 = vpop.f32.mrf.mxu0
        %v1654 = vadd.f32 %v1595, %v1653
        %v1655 = vpop.f32.mrf.mxu0
        %v1656 = vadd.f32 %v1597, %v1655
        %1657 = vmatmul.bf16.gmra.mxu0 %v544
        %v1658 = vpop.f32.mrf.mxu0
        %v1659 = vadd.f32 %v1600, %v1658
        %v1660 = vpop.f32.mrf.mxu0
        %v1661 = vadd.f32 %v1602, %v1660
        %1662 = vmatmul.bf16.gmra.mxu0 %v545
        %v1663 = vpop.f32.mrf.mxu0
        %v1664 = vadd.f32 %v1605, %v1663
        %v1665 = vpop.f32.mrf.mxu0
        %v1666 = vadd.f32 %v1607, %v1665
        %1667 = vdwg.mxu0
        %v1668 = vmax.f32 %v1619, 0.0
        %v1669 = vmax.f32 %v1621, 0.0
        %v1670 = vmax.f32 %v1624, 0.0
        %v1671 = vmax.f32 %v1626, 0.0
        %v1672 = vmax.f32 %v1629, 0.0
        %v1673 = vmax.f32 %v1631, 0.0
        %v1674 = vmax.f32 %v1634, 0.0
        %v1675 = vmax.f32 %v1636, 0.0
        %v1676 = vmax.f32 %v1639, 0.0
        %v1677 = vmax.f32 %v1641, 0.0
        %v1678 = vmax.f32 %v1644, 0.0
        %v1679 = vmax.f32 %v1646, 0.0
        %v1680 = vmax.f32 %v1649, 0.0
        %v1681 = vmax.f32 %v1651, 0.0
        %v1682 = vmax.f32 %v1654, 0.0
        %v1683 = vmax.f32 %v1656, 0.0
        %v1684 = vmax.f32 %v1659, 0.0
        %v1685 = vmax.f32 %v1661, 0.0
        %v1686 = vmax.f32 %v1664, 0.0
        %v1687 = vmax.f32 %v1666, 0.0
        %v1688 = vpack.c.bf16 %v1668, %v1668
        %v1689 = vpack.c.bf16 %v1669, %v1669
        %v1690 = vpack.c.bf16 %v1670, %v1670
        %v1691 = vpack.c.bf16 %v1671, %v1671
        %v1692 = vpack.c.bf16 %v1672, %v1672
        %v1693 = vpack.c.bf16 %v1673, %v1673
        %v1694 = vpack.c.bf16 %v1674, %v1674
        %v1695 = vpack.c.bf16 %v1675, %v1675
        %v1696 = vpack.c.bf16 %v1676, %v1676
        %v1697 = vpack.c.bf16 %v1677, %v1677
        %v1698 = vpack.c.bf16 %v1678, %v1678
        %v1699 = vpack.c.bf16 %v1679, %v1679
        %v1700 = vpack.c.bf16 %v1680, %v1680
        %v1701 = vpack.c.bf16 %v1681, %v1681
        %v1702 = vpack.c.bf16 %v1682, %v1682
        %v1703 = vpack.c.bf16 %v1683, %v1683
        %v1704 = vpack.c.bf16 %v1684, %v1684
        %v1705 = vpack.c.bf16 %v1685, %v1685
        %v1706 = vpack.c.bf16 %v1686, %v1686
        %v1707 = vpack.c.bf16 %v1687, %v1687
        %1708 = vst [vmem:[#allocation2] sm:$0xf] %v1688
        %1709 = vst [vmem:[#allocation2 + $0x4] sm:$0xf] %v1689
        %1710 = vst [vmem:[#allocation2 + $0x8] sm:$0xf] %v1690
        %1711 = vst [vmem:[#allocation2 + $0xc] sm:$0xf] %v1691
        %1712 = vst [vmem:[#allocation2 + $0x10] sm:$0xf] %v1692
        %1713 = vst [vmem:[#allocation2 + $0x14] sm:$0xf] %v1693
        %1714 = vst [vmem:[#allocation2 + $0x18] sm:$0xf] %v1694
        %1715 = vst [vmem:[#allocation2 + $0x1c] sm:$0xf] %v1695
        %1716 = vst [vmem:[#allocation2 + $0x20] sm:$0xf] %v1696
        %1717 = vst [vmem:[#allocation2 + $0x24] sm:$0xf] %v1697
        %1718 = vst [vmem:[#allocation2 + $0x28] sm:$0xf] %v1698
        %1719 = vst [vmem:[#allocation2 + $0x2c] sm:$0xf] %v1699
        %1720 = vst [vmem:[#allocation2 + $0x30] sm:$0xf] %v1700
        %1721 = vst [vmem:[#allocation2 + $0x34] sm:$0xf] %v1701
        %1722 = vst [vmem:[#allocation2 + $0x38] sm:$0xf] %v1702
        %1723 = vst [vmem:[#allocation2 + $0x3c] sm:$0xf] %v1703
        %1724 = vst [vmem:[#allocation2 + $0x40] sm:$0xf] %v1704
        %1725 = vst [vmem:[#allocation2 + $0x44] sm:$0xf] %v1705
        %1726 = vst [vmem:[#allocation2 + $0x48] sm:$0xf] %v1706
        %1727 = vst [vmem:[#allocation2 + $0x4c] sm:$0xf] %v1707
        %p1728 = scmp.eq.s32.totalorder %s28, 0
        // Predicated region
        $region53: #{tpu_custom_call.1} parent=39 // pred_check
          %p1729 = pneg %p1728
        $region54: #{tpu_custom_call.1} parent=39 // pred_check_branch
          %1731 = sbr.rel (%p1729) target = $region56
        $region55: #{tpu_custom_call.1} parent=39 // pred_region
          %1732 = vst [vmem:[#allocation2] sm:$0xf] 0
          %1733 = vst [vmem:[#allocation2 + $0x4] sm:$0xf] 0
        $region56: #{tpu_custom_call.1} parent=39 // pred_fallthru
          _
        %p1734 = scmp.eq.s32.totalorder %s28, 1
        // Predicated region
        $region57: #{tpu_custom_call.1} parent=39 // pred_check
          %p1735 = pneg %p1734
        $region58: #{tpu_custom_call.1} parent=39 // pred_check_branch
          %1737 = sbr.rel (%p1735) target = $region60
        $region59: #{tpu_custom_call.1} parent=39 // pred_region
          %s1738 = scalar_lea.vmem [#allocation2], 72
          %1739 = vst [vmem:[%s1738] sm:$0xf] 0
          %1740 = vst [vmem:[%s1738 + $0x4] sm:$0xf] 0
        $region60: #{tpu_custom_call.1} parent=39 // pred_fallthru
          _
        %v1741 = vld [vmem:[#allocation2] sm:$0xf]
        %v1742 = vld [vmem:[#allocation2 + $0x4] sm:$0xf]
        %v1743 = vld [vmem:[#allocation2 + $0x8] sm:$0xf]
        %v1744 = vld [vmem:[#allocation2 + $0xc] sm:$0xf]
        %v1745 = vld [vmem:[#allocation2 + $0x10] sm:$0xf]
        %v1746 = vld [vmem:[#allocation2 + $0x14] sm:$0xf]
        %v1747 = vld [vmem:[#allocation2 + $0x18] sm:$0xf]
        %v1748 = vld [vmem:[#allocation2 + $0x1c] sm:$0xf]
        %v1749 = vld [vmem:[#allocation2 + $0x20] sm:$0xf]
        %v1750 = vld [vmem:[#allocation2 + $0x24] sm:$0xf]
        %v1751 = vld [vmem:[#allocation2 + $0x28] sm:$0xf]
        %v1752 = vld [vmem:[#allocation2 + $0x2c] sm:$0xf]
        %v1753 = vld [vmem:[#allocation2 + $0x30] sm:$0xf]
        %v1754 = vld [vmem:[#allocation2 + $0x34] sm:$0xf]
        %v1755 = vld [vmem:[#allocation2 + $0x38] sm:$0xf]
        %v1756 = vld [vmem:[#allocation2 + $0x3c] sm:$0xf]
        %v1757 = vld [vmem:[#allocation2 + $0x40] sm:$0xf]
        %v1758 = vld [vmem:[#allocation2 + $0x44] sm:$0xf]
        %v1759 = vld [vmem:[#allocation2 + $0x48] sm:$0xf]
        %v1760 = vld [vmem:[#allocation2 + $0x4c] sm:$0xf]
        %v1781 = vunpack.c.l.b16 %v1741
        %v1782 = vunpack.c.l.b16 %v1742
        %v1783 = vunpack.c.l.b16 %v1743
        %v1784 = vunpack.c.l.b16 %v1744
        %v1785 = vunpack.c.l.b16 %v1745
        %v1786 = vunpack.c.l.b16 %v1746
        %v1787 = vunpack.c.l.b16 %v1747
        %v1788 = vunpack.c.l.b16 %v1748
        %v1789 = vunpack.c.l.b16 %v1749
        %v1790 = vunpack.c.l.b16 %v1750
        %v1791 = vunpack.c.l.b16 %v1751
        %v1792 = vunpack.c.l.b16 %v1752
        %v1793 = vunpack.c.l.b16 %v1753
        %v1794 = vunpack.c.l.b16 %v1754
        %v1795 = vunpack.c.l.b16 %v1755
        %v1796 = vunpack.c.l.b16 %v1756
        %v1797 = vunpack.c.l.b16 %v1757
        %v1798 = vunpack.c.l.b16 %v1758
        %v1799 = vunpack.c.l.b16 %v1759
        %v1800 = vunpack.c.l.b16 %v1760
        %v1801 = vpack.c.b16 %v1782, %v1781
        %v1802 = vpack.c.b16 %v1784, %v1783
        %v1803 = vpack.c.b16 %v1786, %v1785
        %v1804 = vpack.c.b16 %v1788, %v1787
        %v1805 = vpack.c.b16 %v1790, %v1789
        %v1806 = vpack.c.b16 %v1792, %v1791
        %v1807 = vpack.c.b16 %v1794, %v1793
        %v1808 = vpack.c.b16 %v1796, %v1795
        %v1809 = vpack.c.b16 %v1798, %v1797
        %v1810 = vpack.c.b16 %v1800, %v1799
        %v1812 = vshrl.u32 %v1801, 16
        %v1814 = vrot.slane %v1812, 7
        %v1815 = vshll.u32 %v1801, 16
        %v1817 = vor.u32 %v1814, %v1815
        %v1819 = vshrl.u32 %v1802, 16
        %v1821 = vrot.slane %v1819, 7
        %v1822 = vshll.u32 %v1802, 16
        %v1824 = vor.u32 %v1821, %v1822
        %v1826 = vshrl.u32 %v1803, 16
        %v1828 = vrot.slane %v1826, 7
        %v1829 = vshll.u32 %v1803, 16
        %v1831 = vor.u32 %v1828, %v1829
        %v1833 = vshrl.u32 %v1804, 16
        %v1835 = vrot.slane %v1833, 7
        %v1836 = vshll.u32 %v1804, 16
        %v1838 = vor.u32 %v1835, %v1836
        %v1840 = vshrl.u32 %v1805, 16
        %v1842 = vrot.slane %v1840, 7
        %v1843 = vshll.u32 %v1805, 16
        %v1845 = vor.u32 %v1842, %v1843
        %v1847 = vshrl.u32 %v1806, 16
        %v1849 = vrot.slane %v1847, 7
        %v1850 = vshll.u32 %v1806, 16
        %v1852 = vor.u32 %v1849, %v1850
        %v1854 = vshrl.u32 %v1807, 16
        %v1856 = vrot.slane %v1854, 7
        %v1857 = vshll.u32 %v1807, 16
        %v1859 = vor.u32 %v1856, %v1857
        %v1861 = vshrl.u32 %v1808, 16
        %v1863 = vrot.slane %v1861, 7
        %v1864 = vshll.u32 %v1808, 16
        %v1866 = vor.u32 %v1863, %v1864
        %v1868 = vshrl.u32 %v1809, 16
        %v1870 = vrot.slane %v1868, 7
        %v1871 = vshll.u32 %v1809, 16
        %v1873 = vor.u32 %v1870, %v1871
        %v1875 = vshrl.u32 %v1810, 16
        %v1877 = vrot.slane %v1875, 7
        %v1878 = vshll.u32 %v1810, 16
        %v1880 = vor.u32 %v1877, %v1878
        %v1891 = vsel %vm482, 0, %v1817
        %v1892 = vsel %vm482, 0, %v1824
        %v1893 = vsel %vm482, 0, %v1831
        %v1894 = vsel %vm482, 0, %v1838
        %v1895 = vsel %vm482, 0, %v1845
        %v1896 = vsel %vm482, 0, %v1852
        %v1897 = vsel %vm482, 0, %v1859
        %v1898 = vsel %vm482, 0, %v1866
        %v1899 = vsel %vm482, 0, %v1873
        %v1900 = vsel %vm482, 0, %v1880
        %v1901 = vrot.slane %v1815, 1
        %v1902 = vor.u32 %v1812, %v1901
        %v1903 = vrot.slane %v1822, 1
        %v1904 = vor.u32 %v1819, %v1903
        %v1905 = vrot.slane %v1829, 1
        %v1906 = vor.u32 %v1826, %v1905
        %v1907 = vrot.slane %v1836, 1
        %v1908 = vor.u32 %v1833, %v1907
        %v1909 = vrot.slane %v1843, 1
        %v1910 = vor.u32 %v1840, %v1909
        %v1911 = vrot.slane %v1850, 1
        %v1912 = vor.u32 %v1847, %v1911
        %v1913 = vrot.slane %v1857, 1
        %v1914 = vor.u32 %v1854, %v1913
        %v1915 = vrot.slane %v1864, 1
        %v1916 = vor.u32 %v1861, %v1915
        %v1917 = vrot.slane %v1871, 1
        %v1918 = vor.u32 %v1868, %v1917
        %v1919 = vrot.slane %v1878, 1
        %v1920 = vor.u32 %v1875, %v1919
        %v1931 = vsel %vm533, %v1902, 0
        %v1932 = vsel %vm533, %v1904, 0
        %v1933 = vsel %vm533, %v1906, 0
        %v1934 = vsel %vm533, %v1908, 0
        %v1935 = vsel %vm533, %v1910, 0
        %v1936 = vsel %vm533, %v1912, 0
        %v1937 = vsel %vm533, %v1914, 0
        %v1938 = vsel %vm533, %v1916, 0
        %v1939 = vsel %vm533, %v1918, 0
        %v1940 = vsel %vm533, %v1920, 0
        %v1951 = vld [vmem:[#allocation8] sm:$0xf]
        %v1952 = vld [vmem:[#allocation8 + $0x4] sm:$0xf]
        %v1953 = vld [vmem:[#allocation8 + $0x8] sm:$0xf]
        %v1954 = vld [vmem:[#allocation8 + $0xc] sm:$0xf]
        %v1955 = vld [vmem:[#allocation8 + $0x10] sm:$0xf]
        %v1956 = vld [vmem:[#allocation8 + $0x14] sm:$0xf]
        %v1957 = vld [vmem:[#allocation8 + $0x18] sm:$0xf]
        %v1958 = vld [vmem:[#allocation8 + $0x1c] sm:$0xf]
        %v1959 = vld [vmem:[#allocation8 + $0x20] sm:$0xf]
        %v1960 = vld [vmem:[#allocation8 + $0x24] sm:$0xf]
        %v1961 = vld [vmem:[#allocation8 + $0x28] sm:$0xf]
        %v1962 = vld [vmem:[#allocation8 + $0x2c] sm:$0xf]
        %v1963 = vld [vmem:[#allocation8 + $0x30] sm:$0xf]
        %v1964 = vld [vmem:[#allocation8 + $0x34] sm:$0xf]
        %v1965 = vld [vmem:[#allocation8 + $0x38] sm:$0xf]
        %v1966 = vld [vmem:[#allocation8 + $0x3c] sm:$0xf]
        %v1967 = vld [vmem:[#allocation8 + $0x40] sm:$0xf]
        %v1968 = vld [vmem:[#allocation8 + $0x44] sm:$0xf]
        %v1969 = vld [vmem:[#allocation8 + $0x48] sm:$0xf]
        %v1970 = vld [vmem:[#allocation8 + $0x4c] sm:$0xf]
        %v1971 = vld [vmem:[#allocation8 + $0x50] sm:$0xf]
        %v1972 = vld [vmem:[#allocation8 + $0x54] sm:$0xf]
        %v1973 = vld [vmem:[#allocation8 + $0x58] sm:$0xf]
        %v1974 = vld [vmem:[#allocation8 + $0x5c] sm:$0xf]
        %v1975 = vld [vmem:[#allocation8 + $0x60] sm:$0xf]
        %v1976 = vld [vmem:[#allocation8 + $0x64] sm:$0xf]
        %v1977 = vld [vmem:[#allocation8 + $0x68] sm:$0xf]
        %v1978 = vld [vmem:[#allocation8 + $0x6c] sm:$0xf]
        %v1979 = vld [vmem:[#allocation8 + $0x70] sm:$0xf]
        %v1980 = vld [vmem:[#allocation8 + $0x74] sm:$0xf]
        %v1981 = vld [vmem:[#allocation8 + $0x78] sm:$0xf]
        %v1982 = vld [vmem:[#allocation8 + $0x7c] sm:$0xf]
        %v1983 = vld [vmem:[#allocation8 + $0x80] sm:$0xf]
        %v1984 = vld [vmem:[#allocation8 + $0x84] sm:$0xf]
        %v1985 = vld [vmem:[#allocation8 + $0x88] sm:$0xf]
        %v1986 = vld [vmem:[#allocation8 + $0x8c] sm:$0xf]
        %v1987 = vld [vmem:[#allocation8 + $0x90] sm:$0xf]
        %v1988 = vld [vmem:[#allocation8 + $0x94] sm:$0xf]
        %v1989 = vld [vmem:[#allocation8 + $0x98] sm:$0xf]
        %v1990 = vld [vmem:[#allocation8 + $0x9c] sm:$0xf]
        %v1991 = vld [vmem:[#allocation8 + $0xa0] sm:$0xf]
        %v1992 = vld [vmem:[#allocation8 + $0xa4] sm:$0xf]
        %v1993 = vld [vmem:[#allocation8 + $0xa8] sm:$0xf]
        %v1994 = vld [vmem:[#allocation8 + $0xac] sm:$0xf]
        %v1995 = vld [vmem:[#allocation8 + $0xb0] sm:$0xf]
        %v1996 = vld [vmem:[#allocation8 + $0xb4] sm:$0xf]
        %v1997 = vld [vmem:[#allocation8 + $0xb8] sm:$0xf]
        %v1998 = vld [vmem:[#allocation8 + $0xbc] sm:$0xf]
        %v1999 = vld [vmem:[#allocation8 + $0xc0] sm:$0xf]
        %v2000 = vld [vmem:[#allocation8 + $0xc4] sm:$0xf]
        %v2001 = vld [vmem:[#allocation8 + $0xc8] sm:$0xf]
        %v2002 = vld [vmem:[#allocation8 + $0xcc] sm:$0xf]
        %v2003 = vld [vmem:[#allocation8 + $0xd0] sm:$0xf]
        %v2004 = vld [vmem:[#allocation8 + $0xd4] sm:$0xf]
        %v2005 = vld [vmem:[#allocation8 + $0xd8] sm:$0xf]
        %v2006 = vld [vmem:[#allocation8 + $0xdc] sm:$0xf]
        %v2007 = vld [vmem:[#allocation8 + $0xe0] sm:$0xf]
        %v2008 = vld [vmem:[#allocation8 + $0xe4] sm:$0xf]
        %v2009 = vld [vmem:[#allocation8 + $0xe8] sm:$0xf]
        %v2010 = vld [vmem:[#allocation8 + $0xec] sm:$0xf]
        %v2011 = vld [vmem:[#allocation8 + $0xf0] sm:$0xf]
        %v2012 = vld [vmem:[#allocation8 + $0xf4] sm:$0xf]
        %v2013 = vld [vmem:[#allocation8 + $0xf8] sm:$0xf]
        %v2014 = vld [vmem:[#allocation8 + $0xfc] sm:$0xf]
        %v2015 = vld [vmem:[#allocation8 + $0x100] sm:$0xf]
        %v2016 = vld [vmem:[#allocation8 + $0x104] sm:$0xf]
        %v2017 = vld [vmem:[#allocation8 + $0x108] sm:$0xf]
        %v2018 = vld [vmem:[#allocation8 + $0x10c] sm:$0xf]
        %v2019 = vld [vmem:[#allocation8 + $0x110] sm:$0xf]
        %v2020 = vld [vmem:[#allocation8 + $0x114] sm:$0xf]
        %v2021 = vld [vmem:[#allocation8 + $0x118] sm:$0xf]
        %v2022 = vld [vmem:[#allocation8 + $0x11c] sm:$0xf]
        %v2023 = vld [vmem:[#allocation8 + $0x120] sm:$0xf]
        %v2024 = vld [vmem:[#allocation8 + $0x124] sm:$0xf]
        %v2025 = vld [vmem:[#allocation8 + $0x128] sm:$0xf]
        %v2026 = vld [vmem:[#allocation8 + $0x12c] sm:$0xf]
        %v2027 = vld [vmem:[#allocation8 + $0x130] sm:$0xf]
        %v2028 = vld [vmem:[#allocation8 + $0x134] sm:$0xf]
        %v2029 = vld [vmem:[#allocation8 + $0x138] sm:$0xf]
        %v2030 = vld [vmem:[#allocation8 + $0x13c] sm:$0xf]
        %v2031 = vld [vmem:[#allocation8 + $0x140] sm:$0xf]
        %v2032 = vld [vmem:[#allocation8 + $0x144] sm:$0xf]
        %v2033 = vld [vmem:[#allocation8 + $0x148] sm:$0xf]
        %v2034 = vld [vmem:[#allocation8 + $0x14c] sm:$0xf]
        %v2035 = vld [vmem:[#allocation8 + $0x150] sm:$0xf]
        %v2036 = vld [vmem:[#allocation8 + $0x154] sm:$0xf]
        %v2037 = vld [vmem:[#allocation8 + $0x158] sm:$0xf]
        %v2038 = vld [vmem:[#allocation8 + $0x15c] sm:$0xf]
        %v2039 = vld [vmem:[#allocation8 + $0x160] sm:$0xf]
        %v2040 = vld [vmem:[#allocation8 + $0x164] sm:$0xf]
        %v2041 = vld [vmem:[#allocation8 + $0x168] sm:$0xf]
        %v2042 = vld [vmem:[#allocation8 + $0x16c] sm:$0xf]
        %v2043 = vld [vmem:[#allocation8 + $0x170] sm:$0xf]
        %v2044 = vld [vmem:[#allocation8 + $0x174] sm:$0xf]
        %v2045 = vld [vmem:[#allocation8 + $0x178] sm:$0xf]
        %v2046 = vld [vmem:[#allocation8 + $0x17c] sm:$0xf]
        %v2047 = vld [vmem:[#allocation8 + $0x180] sm:$0xf]
        %v2048 = vld [vmem:[#allocation8 + $0x184] sm:$0xf]
        %v2049 = vld [vmem:[#allocation8 + $0x188] sm:$0xf]
        %v2050 = vld [vmem:[#allocation8 + $0x18c] sm:$0xf]
        %v2051 = vld [vmem:[#allocation8 + $0x190] sm:$0xf]
        %v2052 = vld [vmem:[#allocation8 + $0x194] sm:$0xf]
        %v2053 = vld [vmem:[#allocation8 + $0x198] sm:$0xf]
        %v2054 = vld [vmem:[#allocation8 + $0x19c] sm:$0xf]
        %v2055 = vld [vmem:[#allocation8 + $0x1a0] sm:$0xf]
        %v2056 = vld [vmem:[#allocation8 + $0x1a4] sm:$0xf]
        %v2057 = vld [vmem:[#allocation8 + $0x1a8] sm:$0xf]
        %v2058 = vld [vmem:[#allocation8 + $0x1ac] sm:$0xf]
        %v2059 = vld [vmem:[#allocation8 + $0x1b0] sm:$0xf]
        %v2060 = vld [vmem:[#allocation8 + $0x1b4] sm:$0xf]
        %v2061 = vld [vmem:[#allocation8 + $0x1b8] sm:$0xf]
        %v2062 = vld [vmem:[#allocation8 + $0x1bc] sm:$0xf]
        %v2063 = vld [vmem:[#allocation8 + $0x1c0] sm:$0xf]
        %v2064 = vld [vmem:[#allocation8 + $0x1c4] sm:$0xf]
        %v2065 = vld [vmem:[#allocation8 + $0x1c8] sm:$0xf]
        %v2066 = vld [vmem:[#allocation8 + $0x1cc] sm:$0xf]
        %v2067 = vld [vmem:[#allocation8 + $0x1d0] sm:$0xf]
        %v2068 = vld [vmem:[#allocation8 + $0x1d4] sm:$0xf]
        %v2069 = vld [vmem:[#allocation8 + $0x1d8] sm:$0xf]
        %v2070 = vld [vmem:[#allocation8 + $0x1dc] sm:$0xf]
        %v2071 = vld [vmem:[#allocation8 + $0x1e0] sm:$0xf]
        %v2072 = vld [vmem:[#allocation8 + $0x1e4] sm:$0xf]
        %v2073 = vld [vmem:[#allocation8 + $0x1e8] sm:$0xf]
        %v2074 = vld [vmem:[#allocation8 + $0x1ec] sm:$0xf]
        %v2075 = vld [vmem:[#allocation8 + $0x1f0] sm:$0xf]
        %v2076 = vld [vmem:[#allocation8 + $0x1f4] sm:$0xf]
        %v2077 = vld [vmem:[#allocation8 + $0x1f8] sm:$0xf]
        %v2078 = vld [vmem:[#allocation8 + $0x1fc] sm:$0xf]
        %v2079 = vld [vmem:[#allocation8 + $0x200] sm:$0xf]
        %v2080 = vld [vmem:[#allocation8 + $0x204] sm:$0xf]
        %v2081 = vld [vmem:[#allocation8 + $0x208] sm:$0xf]
        %v2082 = vld [vmem:[#allocation8 + $0x20c] sm:$0xf]
        %v2083 = vld [vmem:[#allocation8 + $0x210] sm:$0xf]
        %v2084 = vld [vmem:[#allocation8 + $0x214] sm:$0xf]
        %v2085 = vld [vmem:[#allocation8 + $0x218] sm:$0xf]
        %v2086 = vld [vmem:[#allocation8 + $0x21c] sm:$0xf]
        %v2087 = vld [vmem:[#allocation8 + $0x220] sm:$0xf]
        %v2088 = vld [vmem:[#allocation8 + $0x224] sm:$0xf]
        %v2089 = vld [vmem:[#allocation8 + $0x228] sm:$0xf]
        %v2090 = vld [vmem:[#allocation8 + $0x22c] sm:$0xf]
        %v2091 = vld [vmem:[#allocation8 + $0x230] sm:$0xf]
        %v2092 = vld [vmem:[#allocation8 + $0x234] sm:$0xf]
        %v2093 = vld [vmem:[#allocation8 + $0x238] sm:$0xf]
        %v2094 = vld [vmem:[#allocation8 + $0x23c] sm:$0xf]
        %v2095 = vunpack.c.l.bf16 %v304
        %v2096 = vunpack.c.l.bf16 %v305
        %v2097 = vunpack.c.l.bf16 %v306
        %v2098 = vunpack.c.l.bf16 %v307
        %v2099 = vunpack.c.l.bf16 %v308
        %v2100 = vunpack.c.l.bf16 %v309
        %v2101 = vunpack.c.l.bf16 %v310
        %v2102 = vunpack.c.l.bf16 %v311
        %v2103 = vunpack.c.l.bf16 %v312
        %v2104 = vunpack.c.l.bf16 %v313
        %v2105 = vunpack.c.l.bf16 %v314
        %v2106 = vunpack.c.l.bf16 %v315
        %v2107 = vunpack.c.l.bf16 %v316
        %v2108 = vunpack.c.l.bf16 %v317
        %v2109 = vunpack.c.l.bf16 %v318
        %v2110 = vunpack.c.l.bf16 %v319
        %v2112 = vperm.slane %v296, 0
        %v2258 = vunpack.c.l.b16 %v1951
        %v2259 = vunpack.c.l.b16 %v1952
        %v2260 = vunpack.c.l.b16 %v1953
        %v2261 = vunpack.c.l.b16 %v1954
        %v2262 = vunpack.c.l.b16 %v1955
        %v2263 = vunpack.c.l.b16 %v1956
        %v2264 = vunpack.c.l.b16 %v1957
        %v2265 = vunpack.c.l.b16 %v1958
        %v2266 = vunpack.c.l.b16 %v1959
        %v2267 = vunpack.c.l.b16 %v1960
        %v2268 = vunpack.c.l.b16 %v1961
        %v2269 = vunpack.c.l.b16 %v1962
        %v2270 = vunpack.c.l.b16 %v1963
        %v2271 = vunpack.c.l.b16 %v1964
        %v2272 = vunpack.c.l.b16 %v1965
        %v2273 = vunpack.c.l.b16 %v1966
        %v2274 = vunpack.c.l.b16 %v1967
        %v2275 = vunpack.c.l.b16 %v1968
        %v2276 = vunpack.c.l.b16 %v1969
        %v2277 = vunpack.c.l.b16 %v1970
        %v2278 = vunpack.c.l.b16 %v1971
        %v2279 = vunpack.c.l.b16 %v1972
        %v2280 = vunpack.c.l.b16 %v1973
        %v2281 = vunpack.c.l.b16 %v1974
        %v2282 = vunpack.c.l.b16 %v1975
        %v2283 = vunpack.c.l.b16 %v1976
        %v2284 = vunpack.c.l.b16 %v1977
        %v2285 = vunpack.c.l.b16 %v1978
        %v2286 = vunpack.c.l.b16 %v1979
        %v2287 = vunpack.c.l.b16 %v1980
        %v2288 = vunpack.c.l.b16 %v1981
        %v2289 = vunpack.c.l.b16 %v1982
        %v2290 = vunpack.c.l.b16 %v1983
        %v2291 = vunpack.c.l.b16 %v1984
        %v2292 = vunpack.c.l.b16 %v1985
        %v2293 = vunpack.c.l.b16 %v1986
        %v2294 = vunpack.c.l.b16 %v1987
        %v2295 = vunpack.c.l.b16 %v1988
        %v2296 = vunpack.c.l.b16 %v1989
        %v2297 = vunpack.c.l.b16 %v1990
        %v2298 = vunpack.c.l.b16 %v1991
        %v2299 = vunpack.c.l.b16 %v1992
        %v2300 = vunpack.c.l.b16 %v1993
        %v2301 = vunpack.c.l.b16 %v1994
        %v2302 = vunpack.c.l.b16 %v1995
        %v2303 = vunpack.c.l.b16 %v1996
        %v2304 = vunpack.c.l.b16 %v1997
        %v2305 = vunpack.c.l.b16 %v1998
        %v2306 = vunpack.c.l.b16 %v1999
        %v2307 = vunpack.c.l.b16 %v2000
        %v2308 = vunpack.c.l.b16 %v2001
        %v2309 = vunpack.c.l.b16 %v2002
        %v2310 = vunpack.c.l.b16 %v2003
        %v2311 = vunpack.c.l.b16 %v2004
        %v2312 = vunpack.c.l.b16 %v2005
        %v2313 = vunpack.c.l.b16 %v2006
        %v2314 = vunpack.c.l.b16 %v2007
        %v2315 = vunpack.c.l.b16 %v2008
        %v2316 = vunpack.c.l.b16 %v2009
        %v2317 = vunpack.c.l.b16 %v2010
        %v2318 = vunpack.c.l.b16 %v2011
        %v2319 = vunpack.c.l.b16 %v2012
        %v2320 = vunpack.c.l.b16 %v2013
        %v2321 = vunpack.c.l.b16 %v2014
        %v2322 = vunpack.c.l.b16 %v2015
        %v2323 = vunpack.c.l.b16 %v2016
        %v2324 = vunpack.c.l.b16 %v2017
        %v2325 = vunpack.c.l.b16 %v2018
        %v2326 = vunpack.c.l.b16 %v2019
        %v2327 = vunpack.c.l.b16 %v2020
        %v2328 = vunpack.c.l.b16 %v2021
        %v2329 = vunpack.c.l.b16 %v2022
        %v2330 = vunpack.c.l.b16 %v2023
        %v2331 = vunpack.c.l.b16 %v2024
        %v2332 = vunpack.c.l.b16 %v2025
        %v2333 = vunpack.c.l.b16 %v2026
        %v2334 = vunpack.c.l.b16 %v2027
        %v2335 = vunpack.c.l.b16 %v2028
        %v2336 = vunpack.c.l.b16 %v2029
        %v2337 = vunpack.c.l.b16 %v2030
        %v2338 = vunpack.c.l.b16 %v2031
        %v2339 = vunpack.c.l.b16 %v2032
        %v2340 = vunpack.c.l.b16 %v2033
        %v2341 = vunpack.c.l.b16 %v2034
        %v2342 = vunpack.c.l.b16 %v2035
        %v2343 = vunpack.c.l.b16 %v2036
        %v2344 = vunpack.c.l.b16 %v2037
        %v2345 = vunpack.c.l.b16 %v2038
        %v2346 = vunpack.c.l.b16 %v2039
        %v2347 = vunpack.c.l.b16 %v2040
        %v2348 = vunpack.c.l.b16 %v2041
        %v2349 = vunpack.c.l.b16 %v2042
        %v2350 = vunpack.c.l.b16 %v2043
        %v2351 = vunpack.c.l.b16 %v2044
        %v2352 = vunpack.c.l.b16 %v2045
        %v2353 = vunpack.c.l.b16 %v2046
        %v2354 = vunpack.c.l.b16 %v2047
        %v2355 = vunpack.c.l.b16 %v2048
        %v2356 = vunpack.c.l.b16 %v2049
        %v2357 = vunpack.c.l.b16 %v2050
        %v2358 = vunpack.c.l.b16 %v2051
        %v2359 = vunpack.c.l.b16 %v2052
        %v2360 = vunpack.c.l.b16 %v2053
        %v2361 = vunpack.c.l.b16 %v2054
        %v2362 = vunpack.c.l.b16 %v2055
        %v2363 = vunpack.c.l.b16 %v2056
        %v2364 = vunpack.c.l.b16 %v2057
        %v2365 = vunpack.c.l.b16 %v2058
        %v2366 = vunpack.c.l.b16 %v2059
        %v2367 = vunpack.c.l.b16 %v2060
        %v2368 = vunpack.c.l.b16 %v2061
        %v2369 = vunpack.c.l.b16 %v2062
        %v2370 = vunpack.c.l.b16 %v2063
        %v2371 = vunpack.c.l.b16 %v2064
        %v2372 = vunpack.c.l.b16 %v2065
        %v2373 = vunpack.c.l.b16 %v2066
        %v2374 = vunpack.c.l.b16 %v2067
        %v2375 = vunpack.c.l.b16 %v2068
        %v2376 = vunpack.c.l.b16 %v2069
        %v2377 = vunpack.c.l.b16 %v2070
        %v2378 = vunpack.c.l.b16 %v2071
        %v2379 = vunpack.c.l.b16 %v2072
        %v2380 = vunpack.c.l.b16 %v2073
        %v2381 = vunpack.c.l.b16 %v2074
        %v2382 = vunpack.c.l.b16 %v2075
        %v2383 = vunpack.c.l.b16 %v2076
        %v2384 = vunpack.c.l.b16 %v2077
        %v2385 = vunpack.c.l.b16 %v2078
        %v2386 = vunpack.c.l.b16 %v2079
        %v2387 = vunpack.c.l.b16 %v2080
        %v2388 = vunpack.c.l.b16 %v2081
        %v2389 = vunpack.c.l.b16 %v2082
        %v2390 = vunpack.c.l.b16 %v2083
        %v2391 = vunpack.c.l.b16 %v2084
        %v2392 = vunpack.c.l.b16 %v2085
        %v2393 = vunpack.c.l.b16 %v2086
        %v2394 = vunpack.c.l.b16 %v2087
        %v2395 = vunpack.c.l.b16 %v2088
        %v2396 = vunpack.c.l.b16 %v2089
        %v2397 = vunpack.c.l.b16 %v2090
        %v2398 = vunpack.c.l.b16 %v2091
        %v2399 = vunpack.c.l.b16 %v2092
        %v2400 = vunpack.c.l.b16 %v2093
        %v2401 = vunpack.c.l.b16 %v2094
        %v2402 = vpack.c.b16 %v2259, %v2258
        %v2403 = vpack.c.b16 %v2261, %v2260
        %v2404 = vpack.c.b16 %v2263, %v2262
        %v2405 = vpack.c.b16 %v2265, %v2264
        %v2406 = vpack.c.b16 %v2267, %v2266
        %v2407 = vpack.c.b16 %v2269, %v2268
        %v2408 = vpack.c.b16 %v2271, %v2270
        %v2409 = vpack.c.b16 %v2273, %v2272
        %v2410 = vpack.c.b16 %v2275, %v2274
        %v2411 = vpack.c.b16 %v2277, %v2276
        %v2412 = vpack.c.b16 %v2279, %v2278
        %v2413 = vpack.c.b16 %v2281, %v2280
        %v2414 = vpack.c.b16 %v2283, %v2282
        %v2415 = vpack.c.b16 %v2285, %v2284
        %v2416 = vpack.c.b16 %v2287, %v2286
        %v2417 = vpack.c.b16 %v2289, %v2288
        %v2418 = vpack.c.b16 %v2291, %v2290
        %v2419 = vpack.c.b16 %v2293, %v2292
        %v2420 = vpack.c.b16 %v2295, %v2294
        %v2421 = vpack.c.b16 %v2297, %v2296
        %v2422 = vpack.c.b16 %v2299, %v2298
        %v2423 = vpack.c.b16 %v2301, %v2300
        %v2424 = vpack.c.b16 %v2303, %v2302
        %v2425 = vpack.c.b16 %v2305, %v2304
        %v2426 = vpack.c.b16 %v2307, %v2306
        %v2427 = vpack.c.b16 %v2309, %v2308
        %v2428 = vpack.c.b16 %v2311, %v2310
        %v2429 = vpack.c.b16 %v2313, %v2312
        %v2430 = vpack.c.b16 %v2315, %v2314
        %v2431 = vpack.c.b16 %v2317, %v2316
        %v2432 = vpack.c.b16 %v2319, %v2318
        %v2433 = vpack.c.b16 %v2321, %v2320
        %v2434 = vpack.c.b16 %v2323, %v2322
        %v2435 = vpack.c.b16 %v2325, %v2324
        %v2436 = vpack.c.b16 %v2327, %v2326
        %v2437 = vpack.c.b16 %v2329, %v2328
        %v2438 = vpack.c.b16 %v2331, %v2330
        %v2439 = vpack.c.b16 %v2333, %v2332
        %v2440 = vpack.c.b16 %v2335, %v2334
        %v2441 = vpack.c.b16 %v2337, %v2336
        %v2442 = vpack.c.b16 %v2339, %v2338
        %v2443 = vpack.c.b16 %v2341, %v2340
        %v2444 = vpack.c.b16 %v2343, %v2342
        %v2445 = vpack.c.b16 %v2345, %v2344
        %v2446 = vpack.c.b16 %v2347, %v2346
        %v2447 = vpack.c.b16 %v2349, %v2348
        %v2448 = vpack.c.b16 %v2351, %v2350
        %v2449 = vpack.c.b16 %v2353, %v2352
        %v2450 = vpack.c.b16 %v2355, %v2354
        %v2451 = vpack.c.b16 %v2357, %v2356
        %v2452 = vpack.c.b16 %v2359, %v2358
        %v2453 = vpack.c.b16 %v2361, %v2360
        %v2454 = vpack.c.b16 %v2363, %v2362
        %v2455 = vpack.c.b16 %v2365, %v2364
        %v2456 = vpack.c.b16 %v2367, %v2366
        %v2457 = vpack.c.b16 %v2369, %v2368
        %v2458 = vpack.c.b16 %v2371, %v2370
        %v2459 = vpack.c.b16 %v2373, %v2372
        %v2460 = vpack.c.b16 %v2375, %v2374
        %v2461 = vpack.c.b16 %v2377, %v2376
        %v2462 = vpack.c.b16 %v2379, %v2378
        %v2463 = vpack.c.b16 %v2381, %v2380
        %v2464 = vpack.c.b16 %v2383, %v2382
        %v2465 = vpack.c.b16 %v2385, %v2384
        %v2466 = vpack.c.b16 %v2387, %v2386
        %v2467 = vpack.c.b16 %v2389, %v2388
        %v2468 = vpack.c.b16 %v2391, %v2390
        %v2469 = vpack.c.b16 %v2393, %v2392
        %v2470 = vpack.c.b16 %v2395, %v2394
        %v2471 = vpack.c.b16 %v2397, %v2396
        %v2472 = vpack.c.b16 %v2399, %v2398
        %v2473 = vpack.c.b16 %v2401, %v2400
        %2546 = vmatpush.bf16.msra.mxu0 %v2409
        %2547 = vmatpush.bf16.msra.mxu0 %v2408
        %2548 = vmatpush.bf16.msra.mxu0 %v2407
        %2549 = vmatpush.bf16.msra.mxu0 %v2406
        %2550 = vmatpush.bf16.msra.mxu0 %v2405
        %2551 = vmatpush.bf16.msra.mxu0 %v2404
        %2552 = vmatpush.bf16.msra.mxu0 %v2403
        %2553 = vmatpush.bf16.msra.mxu0 %v2402
        %2554 = vmatmul.bf16.gmra.mxu0 %v1891
        %v2555 = vpop.f32.mrf.mxu0
        %v2556 = vadd.f32 %v2112, %v2555
        %v2557 = vpop.f32.mrf.mxu0
        %v2558 = vadd.f32 %v2112, %v2557
        %2559 = vmatmul.bf16.gmra.mxu0 %v1892
        %v2560 = vpop.f32.mrf.mxu0
        %v2561 = vadd.f32 %v2112, %v2560
        %v2562 = vpop.f32.mrf.mxu0
        %v2563 = vadd.f32 %v2112, %v2562
        %2564 = vmatmul.bf16.gmra.mxu0 %v1893
        %v2565 = vpop.f32.mrf.mxu0
        %v2566 = vadd.f32 %v2112, %v2565
        %v2567 = vpop.f32.mrf.mxu0
        %v2568 = vadd.f32 %v2112, %v2567
        %2569 = vmatmul.bf16.gmra.mxu0 %v1894
        %v2570 = vpop.f32.mrf.mxu0
        %v2571 = vadd.f32 %v2112, %v2570
        %v2572 = vpop.f32.mrf.mxu0
        %v2573 = vadd.f32 %v2112, %v2572
        %2574 = vmatmul.bf16.gmra.mxu0 %v1895
        %v2575 = vpop.f32.mrf.mxu0
        %v2576 = vadd.f32 %v2112, %v2575
        %v2577 = vpop.f32.mrf.mxu0
        %v2578 = vadd.f32 %v2112, %v2577
        %2579 = vmatmul.bf16.gmra.mxu0 %v1896
        %v2580 = vpop.f32.mrf.mxu0
        %v2581 = vadd.f32 %v2112, %v2580
        %v2582 = vpop.f32.mrf.mxu0
        %v2583 = vadd.f32 %v2112, %v2582
        %2584 = vmatmul.bf16.gmra.mxu0 %v1897
        %v2585 = vpop.f32.mrf.mxu0
        %v2586 = vadd.f32 %v2112, %v2585
        %v2587 = vpop.f32.mrf.mxu0
        %v2588 = vadd.f32 %v2112, %v2587
        %2589 = vmatmul.bf16.gmra.mxu0 %v1898
        %v2590 = vpop.f32.mrf.mxu0
        %v2591 = vadd.f32 %v2112, %v2590
        %v2592 = vpop.f32.mrf.mxu0
        %v2593 = vadd.f32 %v2112, %v2592
        %2594 = vdwg.mxu0
        %2595 = vmatpush.bf16.msra.mxu0 %v2417
        %2596 = vmatpush.bf16.msra.mxu0 %v2416
        %2597 = vmatpush.bf16.msra.mxu0 %v2415
        %2598 = vmatpush.bf16.msra.mxu0 %v2414
        %2599 = vmatpush.bf16.msra.mxu0 %v2413
        %2600 = vmatpush.bf16.msra.mxu0 %v2412
        %2601 = vmatpush.bf16.msra.mxu0 %v2411
        %2602 = vmatpush.bf16.msra.mxu0 %v2410
        %2603 = vmatmul.bf16.gmra.mxu0 %v1801
        %v2604 = vpop.f32.mrf.mxu0
        %v2605 = vadd.f32 %v2556, %v2604
        %v2606 = vpop.f32.mrf.mxu0
        %v2607 = vadd.f32 %v2558, %v2606
        %2608 = vmatmul.bf16.gmra.mxu0 %v1802
        %v2609 = vpop.f32.mrf.mxu0
        %v2610 = vadd.f32 %v2561, %v2609
        %v2611 = vpop.f32.mrf.mxu0
        %v2612 = vadd.f32 %v2563, %v2611
        %2613 = vmatmul.bf16.gmra.mxu0 %v1803
        %v2614 = vpop.f32.mrf.mxu0
        %v2615 = vadd.f32 %v2566, %v2614
        %v2616 = vpop.f32.mrf.mxu0
        %v2617 = vadd.f32 %v2568, %v2616
        %2618 = vmatmul.bf16.gmra.mxu0 %v1804
        %v2619 = vpop.f32.mrf.mxu0
        %v2620 = vadd.f32 %v2571, %v2619
        %v2621 = vpop.f32.mrf.mxu0
        %v2622 = vadd.f32 %v2573, %v2621
        %2623 = vmatmul.bf16.gmra.mxu0 %v1805
        %v2624 = vpop.f32.mrf.mxu0
        %v2625 = vadd.f32 %v2576, %v2624
        %v2626 = vpop.f32.mrf.mxu0
        %v2627 = vadd.f32 %v2578, %v2626
        %2628 = vmatmul.bf16.gmra.mxu0 %v1806
        %v2629 = vpop.f32.mrf.mxu0
        %v2630 = vadd.f32 %v2581, %v2629
        %v2631 = vpop.f32.mrf.mxu0
        %v2632 = vadd.f32 %v2583, %v2631
        %2633 = vmatmul.bf16.gmra.mxu0 %v1807
        %v2634 = vpop.f32.mrf.mxu0
        %v2635 = vadd.f32 %v2586, %v2634
        %v2636 = vpop.f32.mrf.mxu0
        %v2637 = vadd.f32 %v2588, %v2636
        %2638 = vmatmul.bf16.gmra.mxu0 %v1808
        %v2639 = vpop.f32.mrf.mxu0
        %v2640 = vadd.f32 %v2591, %v2639
        %v2641 = vpop.f32.mrf.mxu0
        %v2642 = vadd.f32 %v2593, %v2641
        %2643 = vdwg.mxu0
        %2644 = vmatpush.bf16.msra.mxu0 %v2425
        %2645 = vmatpush.bf16.msra.mxu0 %v2424
        %2646 = vmatpush.bf16.msra.mxu0 %v2423
        %2647 = vmatpush.bf16.msra.mxu0 %v2422
        %2648 = vmatpush.bf16.msra.mxu0 %v2421
        %2649 = vmatpush.bf16.msra.mxu0 %v2420
        %2650 = vmatpush.bf16.msra.mxu0 %v2419
        %2651 = vmatpush.bf16.msra.mxu0 %v2418
        %2652 = vmatmul.bf16.gmra.mxu0 %v1931
        %v2653 = vpop.f32.mrf.mxu0
        %v2654 = vadd.f32 %v2605, %v2653
        %v2655 = vpop.f32.mrf.mxu0
        %v2656 = vadd.f32 %v2607, %v2655
        %2657 = vmatmul.bf16.gmra.mxu0 %v1932
        %v2658 = vpop.f32.mrf.mxu0
        %v2659 = vadd.f32 %v2610, %v2658
        %v2660 = vpop.f32.mrf.mxu0
        %v2661 = vadd.f32 %v2612, %v2660
        %2662 = vmatmul.bf16.gmra.mxu0 %v1933
        %v2663 = vpop.f32.mrf.mxu0
        %v2664 = vadd.f32 %v2615, %v2663
        %v2665 = vpop.f32.mrf.mxu0
        %v2666 = vadd.f32 %v2617, %v2665
        %2667 = vmatmul.bf16.gmra.mxu0 %v1934
        %v2668 = vpop.f32.mrf.mxu0
        %v2669 = vadd.f32 %v2620, %v2668
        %v2670 = vpop.f32.mrf.mxu0
        %v2671 = vadd.f32 %v2622, %v2670
        %2672 = vmatmul.bf16.gmra.mxu0 %v1935
        %v2673 = vpop.f32.mrf.mxu0
        %v2674 = vadd.f32 %v2625, %v2673
        %v2675 = vpop.f32.mrf.mxu0
        %v2676 = vadd.f32 %v2627, %v2675
        %2677 = vmatmul.bf16.gmra.mxu0 %v1936
        %v2678 = vpop.f32.mrf.mxu0
        %v2679 = vadd.f32 %v2630, %v2678
        %v2680 = vpop.f32.mrf.mxu0
        %v2681 = vadd.f32 %v2632, %v2680
        %2682 = vmatmul.bf16.gmra.mxu0 %v1937
        %v2683 = vpop.f32.mrf.mxu0
        %v2684 = vadd.f32 %v2635, %v2683
        %v2685 = vpop.f32.mrf.mxu0
        %v2686 = vadd.f32 %v2637, %v2685
        %2687 = vmatmul.bf16.gmra.mxu0 %v1938
        %v2688 = vpop.f32.mrf.mxu0
        %v2689 = vadd.f32 %v2640, %v2688
        %v2690 = vpop.f32.mrf.mxu0
        %v2691 = vadd.f32 %v2642, %v2690
        %2692 = vdwg.mxu0
        %2693 = vmatpush.bf16.msra.mxu0 %v2433
        %2694 = vmatpush.bf16.msra.mxu0 %v2432
        %2695 = vmatpush.bf16.msra.mxu0 %v2431
        %2696 = vmatpush.bf16.msra.mxu0 %v2430
        %2697 = vmatpush.bf16.msra.mxu0 %v2429
        %2698 = vmatpush.bf16.msra.mxu0 %v2428
        %2699 = vmatpush.bf16.msra.mxu0 %v2427
        %2700 = vmatpush.bf16.msra.mxu0 %v2426
        %2701 = vmatmul.bf16.gmra.mxu0 %v1892
        %v2702 = vpop.f32.mrf.mxu0
        %v2703 = vadd.f32 %v2654, %v2702
        %v2704 = vpop.f32.mrf.mxu0
        %v2705 = vadd.f32 %v2656, %v2704
        %2706 = vmatmul.bf16.gmra.mxu0 %v1893
        %v2707 = vpop.f32.mrf.mxu0
        %v2708 = vadd.f32 %v2659, %v2707
        %v2709 = vpop.f32.mrf.mxu0
        %v2710 = vadd.f32 %v2661, %v2709
        %2711 = vmatmul.bf16.gmra.mxu0 %v1894
        %v2712 = vpop.f32.mrf.mxu0
        %v2713 = vadd.f32 %v2664, %v2712
        %v2714 = vpop.f32.mrf.mxu0
        %v2715 = vadd.f32 %v2666, %v2714
        %2716 = vmatmul.bf16.gmra.mxu0 %v1895
        %v2717 = vpop.f32.mrf.mxu0
        %v2718 = vadd.f32 %v2669, %v2717
        %v2719 = vpop.f32.mrf.mxu0
        %v2720 = vadd.f32 %v2671, %v2719
        %2721 = vmatmul.bf16.gmra.mxu0 %v1896
        %v2722 = vpop.f32.mrf.mxu0
        %v2723 = vadd.f32 %v2674, %v2722
        %v2724 = vpop.f32.mrf.mxu0
        %v2725 = vadd.f32 %v2676, %v2724
        %2726 = vmatmul.bf16.gmra.mxu0 %v1897
        %v2727 = vpop.f32.mrf.mxu0
        %v2728 = vadd.f32 %v2679, %v2727
        %v2729 = vpop.f32.mrf.mxu0
        %v2730 = vadd.f32 %v2681, %v2729
        %2731 = vmatmul.bf16.gmra.mxu0 %v1898
        %v2732 = vpop.f32.mrf.mxu0
        %v2733 = vadd.f32 %v2684, %v2732
        %v2734 = vpop.f32.mrf.mxu0
        %v2735 = vadd.f32 %v2686, %v2734
        %2736 = vmatmul.bf16.gmra.mxu0 %v1899
        %v2737 = vpop.f32.mrf.mxu0
        %v2738 = vadd.f32 %v2689, %v2737
        %v2739 = vpop.f32.mrf.mxu0
        %v2740 = vadd.f32 %v2691, %v2739
        %2741 = vdwg.mxu0
        %2742 = vmatpush.bf16.msra.mxu0 %v2441
        %2743 = vmatpush.bf16.msra.mxu0 %v2440
        %2744 = vmatpush.bf16.msra.mxu0 %v2439
        %2745 = vmatpush.bf16.msra.mxu0 %v2438
        %2746 = vmatpush.bf16.msra.mxu0 %v2437
        %2747 = vmatpush.bf16.msra.mxu0 %v2436
        %2748 = vmatpush.bf16.msra.mxu0 %v2435
        %2749 = vmatpush.bf16.msra.mxu0 %v2434
        %2750 = vmatmul.bf16.gmra.mxu0 %v1802
        %v2751 = vpop.f32.mrf.mxu0
        %v2752 = vadd.f32 %v2703, %v2751
        %v2753 = vpop.f32.mrf.mxu0
        %v2754 = vadd.f32 %v2705, %v2753
        %2755 = vmatmul.bf16.gmra.mxu0 %v1803
        %v2756 = vpop.f32.mrf.mxu0
        %v2757 = vadd.f32 %v2708, %v2756
        %v2758 = vpop.f32.mrf.mxu0
        %v2759 = vadd.f32 %v2710, %v2758
        %2760 = vmatmul.bf16.gmra.mxu0 %v1804
        %v2761 = vpop.f32.mrf.mxu0
        %v2762 = vadd.f32 %v2713, %v2761
        %v2763 = vpop.f32.mrf.mxu0
        %v2764 = vadd.f32 %v2715, %v2763
        %2765 = vmatmul.bf16.gmra.mxu0 %v1805
        %v2766 = vpop.f32.mrf.mxu0
        %v2767 = vadd.f32 %v2718, %v2766
        %v2768 = vpop.f32.mrf.mxu0
        %v2769 = vadd.f32 %v2720, %v2768
        %2770 = vmatmul.bf16.gmra.mxu0 %v1806
        %v2771 = vpop.f32.mrf.mxu0
        %v2772 = vadd.f32 %v2723, %v2771
        %v2773 = vpop.f32.mrf.mxu0
        %v2774 = vadd.f32 %v2725, %v2773
        %2775 = vmatmul.bf16.gmra.mxu0 %v1807
        %v2776 = vpop.f32.mrf.mxu0
        %v2777 = vadd.f32 %v2728, %v2776
        %v2778 = vpop.f32.mrf.mxu0
        %v2779 = vadd.f32 %v2730, %v2778
        %2780 = vmatmul.bf16.gmra.mxu0 %v1808
        %v2781 = vpop.f32.mrf.mxu0
        %v2782 = vadd.f32 %v2733, %v2781
        %v2783 = vpop.f32.mrf.mxu0
        %v2784 = vadd.f32 %v2735, %v2783
        %2785 = vmatmul.bf16.gmra.mxu0 %v1809
        %v2786 = vpop.f32.mrf.mxu0
        %v2787 = vadd.f32 %v2738, %v2786
        %v2788 = vpop.f32.mrf.mxu0
        %v2789 = vadd.f32 %v2740, %v2788
        %2790 = vdwg.mxu0
        %2791 = vmatpush.bf16.msra.mxu0 %v2449
        %2792 = vmatpush.bf16.msra.mxu0 %v2448
        %2793 = vmatpush.bf16.msra.mxu0 %v2447
        %2794 = vmatpush.bf16.msra.mxu0 %v2446
        %2795 = vmatpush.bf16.msra.mxu0 %v2445
        %2796 = vmatpush.bf16.msra.mxu0 %v2444
        %2797 = vmatpush.bf16.msra.mxu0 %v2443
        %2798 = vmatpush.bf16.msra.mxu0 %v2442
        %2799 = vmatmul.bf16.gmra.mxu0 %v1932
        %v2800 = vpop.f32.mrf.mxu0
        %v2801 = vadd.f32 %v2752, %v2800
        %v2802 = vpop.f32.mrf.mxu0
        %v2803 = vadd.f32 %v2754, %v2802
        %2804 = vmatmul.bf16.gmra.mxu0 %v1933
        %v2805 = vpop.f32.mrf.mxu0
        %v2806 = vadd.f32 %v2757, %v2805
        %v2807 = vpop.f32.mrf.mxu0
        %v2808 = vadd.f32 %v2759, %v2807
        %2809 = vmatmul.bf16.gmra.mxu0 %v1934
        %v2810 = vpop.f32.mrf.mxu0
        %v2811 = vadd.f32 %v2762, %v2810
        %v2812 = vpop.f32.mrf.mxu0
        %v2813 = vadd.f32 %v2764, %v2812
        %2814 = vmatmul.bf16.gmra.mxu0 %v1935
        %v2815 = vpop.f32.mrf.mxu0
        %v2816 = vadd.f32 %v2767, %v2815
        %v2817 = vpop.f32.mrf.mxu0
        %v2818 = vadd.f32 %v2769, %v2817
        %2819 = vmatmul.bf16.gmra.mxu0 %v1936
        %v2820 = vpop.f32.mrf.mxu0
        %v2821 = vadd.f32 %v2772, %v2820
        %v2822 = vpop.f32.mrf.mxu0
        %v2823 = vadd.f32 %v2774, %v2822
        %2824 = vmatmul.bf16.gmra.mxu0 %v1937
        %v2825 = vpop.f32.mrf.mxu0
        %v2826 = vadd.f32 %v2777, %v2825
        %v2827 = vpop.f32.mrf.mxu0
        %v2828 = vadd.f32 %v2779, %v2827
        %2829 = vmatmul.bf16.gmra.mxu0 %v1938
        %v2830 = vpop.f32.mrf.mxu0
        %v2831 = vadd.f32 %v2782, %v2830
        %v2832 = vpop.f32.mrf.mxu0
        %v2833 = vadd.f32 %v2784, %v2832
        %2834 = vmatmul.bf16.gmra.mxu0 %v1939
        %v2835 = vpop.f32.mrf.mxu0
        %v2836 = vadd.f32 %v2787, %v2835
        %v2837 = vpop.f32.mrf.mxu0
        %v2838 = vadd.f32 %v2789, %v2837
        %2839 = vdwg.mxu0
        %2840 = vmatpush.bf16.msra.mxu0 %v2457
        %2841 = vmatpush.bf16.msra.mxu0 %v2456
        %2842 = vmatpush.bf16.msra.mxu0 %v2455
        %2843 = vmatpush.bf16.msra.mxu0 %v2454
        %2844 = vmatpush.bf16.msra.mxu0 %v2453
        %2845 = vmatpush.bf16.msra.mxu0 %v2452
        %2846 = vmatpush.bf16.msra.mxu0 %v2451
        %2847 = vmatpush.bf16.msra.mxu0 %v2450
        %2848 = vmatmul.bf16.gmra.mxu0 %v1893
        %v2849 = vpop.f32.mrf.mxu0
        %v2850 = vadd.f32 %v2801, %v2849
        %v2851 = vpop.f32.mrf.mxu0
        %v2852 = vadd.f32 %v2803, %v2851
        %2853 = vmatmul.bf16.gmra.mxu0 %v1894
        %v2854 = vpop.f32.mrf.mxu0
        %v2855 = vadd.f32 %v2806, %v2854
        %v2856 = vpop.f32.mrf.mxu0
        %v2857 = vadd.f32 %v2808, %v2856
        %2858 = vmatmul.bf16.gmra.mxu0 %v1895
        %v2859 = vpop.f32.mrf.mxu0
        %v2860 = vadd.f32 %v2811, %v2859
        %v2861 = vpop.f32.mrf.mxu0
        %v2862 = vadd.f32 %v2813, %v2861
        %2863 = vmatmul.bf16.gmra.mxu0 %v1896
        %v2864 = vpop.f32.mrf.mxu0
        %v2865 = vadd.f32 %v2816, %v2864
        %v2866 = vpop.f32.mrf.mxu0
        %v2867 = vadd.f32 %v2818, %v2866
        %2868 = vmatmul.bf16.gmra.mxu0 %v1897
        %v2869 = vpop.f32.mrf.mxu0
        %v2870 = vadd.f32 %v2821, %v2869
        %v2871 = vpop.f32.mrf.mxu0
        %v2872 = vadd.f32 %v2823, %v2871
        %2873 = vmatmul.bf16.gmra.mxu0 %v1898
        %v2874 = vpop.f32.mrf.mxu0
        %v2875 = vadd.f32 %v2826, %v2874
        %v2876 = vpop.f32.mrf.mxu0
        %v2877 = vadd.f32 %v2828, %v2876
        %2878 = vmatmul.bf16.gmra.mxu0 %v1899
        %v2879 = vpop.f32.mrf.mxu0
        %v2880 = vadd.f32 %v2831, %v2879
        %v2881 = vpop.f32.mrf.mxu0
        %v2882 = vadd.f32 %v2833, %v2881
        %2883 = vmatmul.bf16.gmra.mxu0 %v1900
        %v2884 = vpop.f32.mrf.mxu0
        %v2885 = vadd.f32 %v2836, %v2884
        %v2886 = vpop.f32.mrf.mxu0
        %v2887 = vadd.f32 %v2838, %v2886
        %2888 = vdwg.mxu0
        %2889 = vmatpush.bf16.msra.mxu0 %v2465
        %2890 = vmatpush.bf16.msra.mxu0 %v2464
        %2891 = vmatpush.bf16.msra.mxu0 %v2463
        %2892 = vmatpush.bf16.msra.mxu0 %v2462
        %2893 = vmatpush.bf16.msra.mxu0 %v2461
        %2894 = vmatpush.bf16.msra.mxu0 %v2460
        %2895 = vmatpush.bf16.msra.mxu0 %v2459
        %2896 = vmatpush.bf16.msra.mxu0 %v2458
        %2897 = vmatmul.bf16.gmra.mxu0 %v1803
        %v2898 = vpop.f32.mrf.mxu0
        %v2899 = vadd.f32 %v2850, %v2898
        %v2900 = vpop.f32.mrf.mxu0
        %v2901 = vadd.f32 %v2852, %v2900
        %2902 = vmatmul.bf16.gmra.mxu0 %v1804
        %v2903 = vpop.f32.mrf.mxu0
        %v2904 = vadd.f32 %v2855, %v2903
        %v2905 = vpop.f32.mrf.mxu0
        %v2906 = vadd.f32 %v2857, %v2905
        %2907 = vmatmul.bf16.gmra.mxu0 %v1805
        %v2908 = vpop.f32.mrf.mxu0
        %v2909 = vadd.f32 %v2860, %v2908
        %v2910 = vpop.f32.mrf.mxu0
        %v2911 = vadd.f32 %v2862, %v2910
        %2912 = vmatmul.bf16.gmra.mxu0 %v1806
        %v2913 = vpop.f32.mrf.mxu0
        %v2914 = vadd.f32 %v2865, %v2913
        %v2915 = vpop.f32.mrf.mxu0
        %v2916 = vadd.f32 %v2867, %v2915
        %2917 = vmatmul.bf16.gmra.mxu0 %v1807
        %v2918 = vpop.f32.mrf.mxu0
        %v2919 = vadd.f32 %v2870, %v2918
        %v2920 = vpop.f32.mrf.mxu0
        %v2921 = vadd.f32 %v2872, %v2920
        %2922 = vmatmul.bf16.gmra.mxu0 %v1808
        %v2923 = vpop.f32.mrf.mxu0
        %v2924 = vadd.f32 %v2875, %v2923
        %v2925 = vpop.f32.mrf.mxu0
        %v2926 = vadd.f32 %v2877, %v2925
        %2927 = vmatmul.bf16.gmra.mxu0 %v1809
        %v2928 = vpop.f32.mrf.mxu0
        %v2929 = vadd.f32 %v2880, %v2928
        %v2930 = vpop.f32.mrf.mxu0
        %v2931 = vadd.f32 %v2882, %v2930
        %2932 = vmatmul.bf16.gmra.mxu0 %v1810
        %v2933 = vpop.f32.mrf.mxu0
        %v2934 = vadd.f32 %v2885, %v2933
        %v2935 = vpop.f32.mrf.mxu0
        %v2936 = vadd.f32 %v2887, %v2935
        %2937 = vdwg.mxu0
        %2938 = vmatpush.bf16.msra.mxu0 %v2473
        %2939 = vmatpush.bf16.msra.mxu0 %v2472
        %2940 = vmatpush.bf16.msra.mxu0 %v2471
        %2941 = vmatpush.bf16.msra.mxu0 %v2470
        %2942 = vmatpush.bf16.msra.mxu0 %v2469
        %2943 = vmatpush.bf16.msra.mxu0 %v2468
        %2944 = vmatpush.bf16.msra.mxu0 %v2467
        %2945 = vmatpush.bf16.msra.mxu0 %v2466
        %2946 = vmatmul.bf16.gmra.mxu0 %v1933
        %v2947 = vpop.f32.mrf.mxu0
        %v2948 = vadd.f32 %v2899, %v2947
        %v2949 = vpop.f32.mrf.mxu0
        %v2950 = vadd.f32 %v2901, %v2949
        %2951 = vmatmul.bf16.gmra.mxu0 %v1934
        %v2952 = vpop.f32.mrf.mxu0
        %v2953 = vadd.f32 %v2904, %v2952
        %v2954 = vpop.f32.mrf.mxu0
        %v2955 = vadd.f32 %v2906, %v2954
        %2956 = vmatmul.bf16.gmra.mxu0 %v1935
        %v2957 = vpop.f32.mrf.mxu0
        %v2958 = vadd.f32 %v2909, %v2957
        %v2959 = vpop.f32.mrf.mxu0
        %v2960 = vadd.f32 %v2911, %v2959
        %2961 = vmatmul.bf16.gmra.mxu0 %v1936
        %v2962 = vpop.f32.mrf.mxu0
        %v2963 = vadd.f32 %v2914, %v2962
        %v2964 = vpop.f32.mrf.mxu0
        %v2965 = vadd.f32 %v2916, %v2964
        %2966 = vmatmul.bf16.gmra.mxu0 %v1937
        %v2967 = vpop.f32.mrf.mxu0
        %v2968 = vadd.f32 %v2919, %v2967
        %v2969 = vpop.f32.mrf.mxu0
        %v2970 = vadd.f32 %v2921, %v2969
        %2971 = vmatmul.bf16.gmra.mxu0 %v1938
        %v2972 = vpop.f32.mrf.mxu0
        %v2973 = vadd.f32 %v2924, %v2972
        %v2974 = vpop.f32.mrf.mxu0
        %v2975 = vadd.f32 %v2926, %v2974
        %2976 = vmatmul.bf16.gmra.mxu0 %v1939
        %v2977 = vpop.f32.mrf.mxu0
        %v2978 = vadd.f32 %v2929, %v2977
        %v2979 = vpop.f32.mrf.mxu0
        %v2980 = vadd.f32 %v2931, %v2979
        %2981 = vmatmul.bf16.gmra.mxu0 %v1940
        %v2982 = vpop.f32.mrf.mxu0
        %v2983 = vadd.f32 %v2934, %v2982
        %v2984 = vpop.f32.mrf.mxu0
        %v2985 = vadd.f32 %v2936, %v2984
        %2986 = vdwg.mxu0
        %v2987 = vadd.f32 %v2948, %v2095
        %v2988 = vadd.f32 %v2950, %v2096
        %v2989 = vadd.f32 %v2953, %v2097
        %v2990 = vadd.f32 %v2955, %v2098
        %v2991 = vadd.f32 %v2958, %v2099
        %v2992 = vadd.f32 %v2960, %v2100
        %v2993 = vadd.f32 %v2963, %v2101
        %v2994 = vadd.f32 %v2965, %v2102
        %v2995 = vadd.f32 %v2968, %v2103
        %v2996 = vadd.f32 %v2970, %v2104
        %v2997 = vadd.f32 %v2973, %v2105
        %v2998 = vadd.f32 %v2975, %v2106
        %v2999 = vadd.f32 %v2978, %v2107
        %v3000 = vadd.f32 %v2980, %v2108
        %v3001 = vadd.f32 %v2983, %v2109
        %v3002 = vadd.f32 %v2985, %v2110
        %v3003 = vmax.f32 %v2987, 0.0
        %v3004 = vmax.f32 %v2988, 0.0
        %v3005 = vmax.f32 %v2989, 0.0
        %v3006 = vmax.f32 %v2990, 0.0
        %v3007 = vmax.f32 %v2991, 0.0
        %v3008 = vmax.f32 %v2992, 0.0
        %v3009 = vmax.f32 %v2993, 0.0
        %v3010 = vmax.f32 %v2994, 0.0
        %v3011 = vmax.f32 %v2995, 0.0
        %v3012 = vmax.f32 %v2996, 0.0
        %v3013 = vmax.f32 %v2997, 0.0
        %v3014 = vmax.f32 %v2998, 0.0
        %v3015 = vmax.f32 %v2999, 0.0
        %v3016 = vmax.f32 %v3000, 0.0
        %v3017 = vmax.f32 %v3001, 0.0
        %v3018 = vmax.f32 %v3002, 0.0
        %v3019 = vpack.c.bf16 %v3003, %v3003
        %v3020 = vpack.c.bf16 %v3004, %v3004
        %v3021 = vpack.c.bf16 %v3005, %v3005
        %v3022 = vpack.c.bf16 %v3006, %v3006
        %v3023 = vpack.c.bf16 %v3007, %v3007
        %v3024 = vpack.c.bf16 %v3008, %v3008
        %v3025 = vpack.c.bf16 %v3009, %v3009
        %v3026 = vpack.c.bf16 %v3010, %v3010
        %v3027 = vpack.c.bf16 %v3011, %v3011
        %v3028 = vpack.c.bf16 %v3012, %v3012
        %v3029 = vpack.c.bf16 %v3013, %v3013
        %v3030 = vpack.c.bf16 %v3014, %v3014
        %v3031 = vpack.c.bf16 %v3015, %v3015
        %v3032 = vpack.c.bf16 %v3016, %v3016
        %v3033 = vpack.c.bf16 %v3017, %v3017
        %v3034 = vpack.c.bf16 %v3018, %v3018
        %3035 = vst [vmem:[%s291] sm:$0xf] %v3019
        %3036 = vst [vmem:[%s291 + $0x4] sm:$0xf] %v3020
        %3037 = vst [vmem:[%s291 + $0x8] sm:$0xf] %v3021
        %3038 = vst [vmem:[%s291 + $0xc] sm:$0xf] %v3022
        %3039 = vst [vmem:[%s291 + $0x10] sm:$0xf] %v3023
        %3040 = vst [vmem:[%s291 + $0x14] sm:$0xf] %v3024
        %3041 = vst [vmem:[%s291 + $0x18] sm:$0xf] %v3025
        %3042 = vst [vmem:[%s291 + $0x1c] sm:$0xf] %v3026
        %3043 = vst [vmem:[%s291 + $0x20] sm:$0xf] %v3027
        %3044 = vst [vmem:[%s291 + $0x24] sm:$0xf] %v3028
        %3045 = vst [vmem:[%s291 + $0x28] sm:$0xf] %v3029
        %3046 = vst [vmem:[%s291 + $0x2c] sm:$0xf] %v3030
        %3047 = vst [vmem:[%s291 + $0x30] sm:$0xf] %v3031
        %3048 = vst [vmem:[%s291 + $0x34] sm:$0xf] %v3032
        %3049 = vst [vmem:[%s291 + $0x38] sm:$0xf] %v3033
        %3050 = vst [vmem:[%s291 + $0x3c] sm:$0xf] %v3034
        %s3051 = sand.u32 %s155, 1
        %s3052 = scalar_lea.sflag [#allocation5], %s3051
        %s3053 = sand.u32 %s155, 1
        %s3054 = smul.addr %s3053, 64
        %s3055 = scalar_lea.vmem [#allocation9], %s3054
        // Predicated region
        $region61: #{tpu_custom_call.1} parent=39 // pred_check
          %p3056 = pneg %p165
        $region62: #{tpu_custom_call.1} parent=39 // pred_check_branch
          %3058 = sbr.rel (%p3056) target = $region64
        $region63: #{tpu_custom_call.1} parent=39 // pred_region
          %s3059 = smul.u32 8, %s28
          %3061 = vsyncadd %s3052, 0
          %s3062 = smul.addr %s3059, 2
          %s3063 = smul.addr %s27, 32
          %s3064 = sadd.s32 %s3062, %s3063
          %s3065 = smul.addr %s3064, 4
          %s3066 = scalar_lea.hbm %s5, %s3065
          %s3067 = sshll.u32 %s3055, 4
          %s3068 = int_to_ptr.vmem [resolvable:$true] %s3067
          %s3069 = sshll.u32 %s3066, 4
          %s3070 = int_to_ptr.hbm [resolvable:$true] %s3069
          %3075 = dma.vmem_to_hbm [thread:$0]  %s3068, 1024, %s3070, %s3052, 64, 64, 4
        $region64: #{tpu_custom_call.1} parent=39 // pred_fallthru
          _
      $region40: #{tpu_custom_call.1} parent=5 // pred_fallthru
        _
      %p3076 = scmp.le.s32.totalorder 2, %s18
      // Predicated region
      $region65: #{tpu_custom_call.1} parent=5 // pred_check
        %p3077 = pneg %p3076
      $region66: #{tpu_custom_call.1} parent=5 // pred_check_branch
        %3079 = sbr.rel (%p3077) target = $region68
      $region67: #{tpu_custom_call.1} parent=5 // pred_region
        %s3080 = ssub.s32 %s18, 2
        // Predicated region
        $region69: #{tpu_custom_call.1} parent=67 // pred_check
          %p3081 = pneg %p171
        $region70: #{tpu_custom_call.1} parent=67 // pred_check_branch
          %3083 = sbr.rel (%p3081) target = $region72
        $region71: #{tpu_custom_call.1} parent=67 // pred_region
          %s3084 = sand.u32 %s156, 1
          %s3085 = scalar_lea.sflag [#allocation5], %s3084
          %s3086 = sand.u32 %s156, 1
          %s3087 = smul.addr %s3086, 64
          %s3088 = scalar_lea.vmem [#allocation9], %s3087
          %3090 = dma.done %s3085, 1024
        $region72: #{tpu_custom_call.1} parent=67 // pred_fallthru
          _
      $region68: #{tpu_custom_call.1} parent=5 // pred_fallthru
        _
    $region6: #{tpu_custom_call.1} parent=1 // loop_footer
      %s22 = sadd.s32 1, %s18
    $region7: #{tpu_custom_call.1} parent=1 // loop_footer_branch
      %17 = sbr.rel target = $region3
    $region8: #{tpu_custom_call.1} parent=1 // loop_exit
      _
    %3091 = vsyncpa [#allocation4], 1
    %s3092 = scalar_lea.sflag [#allocation4], 1
    %3093 = vsyncpa %s3092, 1
    %3094 = vsyncpa [#allocation7], 1
    %3095 = vsyncpa [#allocation5], 1
    %s3096 = scalar_lea.sflag [#allocation5], 1
    %3097 = vsyncpa %s3096, 1

</llo_original>
